<compile_context>
chip_gen: v7x
topology: tpu7x:2x2x1
jax: 0.10.0
libtpu: 0.0.40
codegen_flags: <defaults>
</compile_context>

<pallas_src>
import functools
import numpy as np
import jax
import jax.numpy as jnp
from jax.experimental import pallas as pl
from jax.experimental.pallas import tpu as pltpu

SAMPLE_RATE = 16000
N_FFT = 1024
HOP = 256
N_SEG = N_FFT // HOP              # 4 hop rows per frame
N_MELS = 64
N_FREQS = N_FFT // 2 + 1          # 513 onesided bins
N_BINS = N_FREQS - 2              # 511: DC & Nyquist dropped (zero mel weight)
N_OUT = 512                       # 511 bins padded to a 128-lane multiple
MAX_TILE_R = 256                  # frame rows per grid step (multiple of HALO)
HALO = 16                         # hop-row halo from the next tile (>= N_SEG-1)


# ----------------------- deterministic "parameters" ------------------------

def _hz_to_mel(f):
    return 2595.0 * np.log10(1.0 + f / 700.0)        # HTK (torchaudio default)


def _mel_to_hz(m):
    return 700.0 * (10.0 ** (m / 2595.0) - 1.0)


@functools.lru_cache(maxsize=None)
def _mel_filterbank():
    """torchaudio.functional.melscale_fbanks(norm=None, mel_scale='htk'),
    with the (exactly zero) DC / Nyquist rows dropped and padded to 512 rows."""
    all_freqs = np.linspace(0.0, SAMPLE_RATE / 2.0, N_FREQS)
    m_pts = np.linspace(_hz_to_mel(0.0), _hz_to_mel(SAMPLE_RATE / 2.0), N_MELS + 2)
    f_pts = _mel_to_hz(m_pts)
    f_diff = f_pts[1:] - f_pts[:-1]
    slopes = f_pts[None, :] - all_freqs[:, None]          # (513, 66)
    down = (-slopes[:, :-2]) / f_diff[:-1]
    up = slopes[:, 2:] / f_diff[1:]
    fb = np.maximum(0.0, np.minimum(down, up)).astype(np.float32)   # (513, 64)
    # Verify the rows we drop are (numerically) zero before dropping them.
    assert float(np.abs(fb[0]).max()) < 1e-6, "DC mel row not zero"
    assert float(np.abs(fb[-1]).max()) < 1e-6, "Nyquist mel row not zero"
    fb_pad = np.zeros((N_OUT, N_MELS), np.float32)
    fb_pad[:N_BINS, :] = fb[1:1 + N_BINS, :]
    return fb_pad


@functools.lru_cache(maxsize=None)
def _fused_windowed_dft():
    """Periodic hann window folded into one onesided [cos | sin] DFT matrix for
    bins 1..511 only (DC / Nyquist dropped).  Shape (1024, 1024): columns
    [0, 511) windowed cos, [512, 512+511) windowed sin, rest zero padding so
    both halves start on a 128-lane boundary."""
    n = np.arange(N_FFT)
    k = np.arange(1, 1 + N_BINS)
    ang = 2.0 * np.pi * np.outer(n, k) / N_FFT
    win = 0.5 * (1.0 - np.cos(2.0 * np.pi * n / N_FFT))   # hann_window(periodic=True)
    wcs = np.zeros((N_FFT, 2 * N_OUT), np.float32)
    wcs[:, :N_BINS] = win[:, None] * np.cos(ang)
    wcs[:, N_OUT:N_OUT + N_BINS] = win[:, None] * np.sin(ang)
    return wcs


# ------------------------------ Pallas kernel -------------------------------

def _mel_l1_kernel(num_frames, tile_r,
                   c_cur_ref, c_halo_ref, w_cur_ref, w_halo_ref,
                   wcs_ref, mel_ref, out_ref):
    """One (batch b, frame-tile t) grid cell: partial sum of |logmel_c - logmel_w|."""
    t = pl.program_id(1)

    def frames_of(cur_ref, halo_ref):
        # f32 staging keeps the odd-sublane-offset shifted slices on a safe
        # layout path; the casts are VPU filler under the MXU-bound matmul.
        cur = cur_ref[...].astype(jnp.float32)                 # (tile_r, HOP)
        halo = halo_ref[...].astype(jnp.float32)               # (HALO, HOP)
        slab = jnp.concatenate([cur, halo], axis=0)            # (tile_r+HALO, HOP)
        # Frame j = hop rows j..j+3 laid out along lanes (N_FFT = 4*HOP).
        return jnp.concatenate(
            [slab[s:s + tile_r, :] for s in range(N_SEG)], axis=1
        ).astype(jnp.bfloat16)                                 # (tile_r, N_FFT)

    # Fused clean + watermarked windowed DFT: one bf16 MXU matmul, f32 acc.
    frames = jnp.concatenate(
        [frames_of(c_cur_ref, c_halo_ref), frames_of(w_cur_ref, w_halo_ref)],
        axis=0)                                                # (2*tile_r, N_FFT)
    ri = jnp.dot(frames, wcs_ref[...],
                 preferred_element_type=jnp.float32)           # (2*tile_r, 2*N_OUT)
    real = ri[:, :N_OUT]
    imag = ri[:, N_OUT:]
    power = (real * real + imag * imag).astype(jnp.bfloat16)   # |STFT|^2

    # Mel projection: bf16 inputs, f32 accumulation (single-pass MXU).
    mel = jnp.dot(power, mel_ref[...],
                  preferred_element_type=jnp.float32)          # (2*tile_r, N_MELS)
    logmel = jnp.log(mel + 1e-5)                               # EUP

    diff = jnp.abs(logmel[:tile_r, :] - logmel[tile_r:, :])    # (tile_r, N_MELS)

    # Mask frame rows beyond the real frame count (tail / padding frames).
    frame_idx = t * tile_r + jax.lax.broadcasted_iota(jnp.int32, (tile_r, N_MELS), 0)
    diff = jnp.where(frame_idx < num_frames, diff, 0.0)

    # Lane-dense partial-sum tile: one distinct (8,128) block per grid cell so
    # both grid axes can stay "parallel"; wrapper reads element [0, 0].
    out_ref[...] = jnp.broadcast_to(jnp.sum(diff), out_ref.shape)


# --------------------------------- wrapper ----------------------------------

def multi_scale_mel_loss(clean, watermarked):
    B, T = clean.shape
    pad = N_FFT // 2
    num_frames = 1 + T // HOP                                  # torch.stft, center=True

    tile_r = min(MAX_TILE_R, ((num_frames + HALO - 1) // HALO) * HALO)
    num_tiles = (num_frames + tile_r - 1) // tile_r
    # v7x megacore occupancy: keep at least 2 parallel grid cells when possible.
    while B * num_tiles < 2 and tile_r > HALO:
        tile_r = max(HALO, ((tile_r // 2 + HALO - 1) // HALO) * HALO)
        num_tiles = (num_frames + tile_r - 1) // tile_r

    n_hr_real = num_frames + (N_SEG - 1)                       # hop rows referenced
    n_hr_pad = num_tiles * tile_r + HALO                       # halo view stays in bounds

    def hop_rows(x):
        # Reflect-pad then reshape contiguously into HOP-sample rows: no gather,
        # no 4x framed-tensor in HBM; frames are assembled inside the kernel.
        xp = jnp.pad(x.astype(jnp.float32), ((0, 0), (pad, pad)), mode="reflect")
        hr = xp[:, : n_hr_real * HOP].reshape(B, n_hr_real, HOP)
        hr = jnp.pad(hr, ((0, 0), (0, n_hr_pad - n_hr_real), (0, 0)))
        return hr.astype(jnp.bfloat16)

    hr_c = hop_rows(clean)
    hr_w = hop_rows(watermarked)
    wcs = jnp.asarray(_fused_windowed_dft(), dtype=jnp.bfloat16)    # (1024, 1024)
    melfb = jnp.asarray(_mel_filterbank(), dtype=jnp.bfloat16)      # (512, 64)

    cur_spec = pl.BlockSpec((None, tile_r, HOP), lambda b, t: (b, t, 0))
    # Halo-sized view of the same hop-row array: only HALO rows of the next tile
    # are DMA'd (tile_r is a multiple of HALO so the block index is exact).
    halo_spec = pl.BlockSpec((None, HALO, HOP),
                             lambda b, t: (b, (t + 1) * (tile_r // HALO), 0))
    wcs_spec = pl.BlockSpec((N_FFT, 2 * N_OUT), lambda b, t: (0, 0))    # resident
    mel_spec = pl.BlockSpec((N_OUT, N_MELS), lambda b, t: (0, 0))       # resident

    out = pl.pallas_call(
        functools.partial(_mel_l1_kernel, num_frames, tile_r),
        out_shape=jax.ShapeDtypeStruct((B * 8, num_tiles * 128), jnp.float32),
        grid=(B, num_tiles),
        in_specs=[cur_spec, halo_spec, cur_spec, halo_spec, wcs_spec, mel_spec],
        out_specs=pl.BlockSpec((8, 128), lambda b, t: (b, t)),
        compiler_params=pltpu.CompilerParams(
            dimension_semantics=("parallel", "parallel"),
            vmem_limit_bytes=32 * 1024 * 1024),
    )(hr_c, hr_c, hr_w, hr_w, wcs, melfb)

    partials = out.reshape(B, 8, num_tiles, 128)[:, 0, :, 0]   # (B, num_tiles)
    return jnp.sum(partials) / (B * num_frames * N_MELS)       # F.l1_loss mean


# ----------------------------------- main ------------------------------------

if __name__ == "__main__":
    key = jax.random.PRNGKey(0)
    k1, k2 = jax.random.split(key)
    B, T = 2, 2048                            # small waveforms: (batch, samples)
    clean = 0.1 * jax.random.normal(k1, (B, T), dtype=jnp.float32)
    watermarked = clean + 0.01 * jax.random.normal(k2, (B, T), dtype=jnp.float32)

    loss = jax.jit(multi_scale_mel_loss)(clean, watermarked)
    jax.block_until_ready(loss)
    print("KERNEL_OK")
</pallas_src>

<mosaic_0001>
module attributes {stable_mosaic.version = 11 : i64} {
  func.func @_mel_l1_kernel(%arg0: i32, %arg1: i32, %arg2: memref<1x16x256xbf16, #tpu.memory_space<vmem>>, %arg3: memref<1x16x256xbf16, #tpu.memory_space<vmem>>, %arg4: memref<1x16x256xbf16, #tpu.memory_space<vmem>>, %arg5: memref<1x16x256xbf16, #tpu.memory_space<vmem>>, %arg6: memref<1024x1024xbf16, #tpu.memory_space<vmem>>, %arg7: memref<512x64xbf16, #tpu.memory_space<vmem>>, %arg8: memref<8x128xf32, #tpu.memory_space<vmem>>) attributes {dimension_semantics = [#tpu.dimension_semantics<parallel>, #tpu.dimension_semantics<parallel>], iteration_bounds = array<i64: 2, 1>, scalar_prefetch = 0 : i64, scratch_operands = 0 : i64, tpu.core_type = #tpu.core_type<tc>, window_params = [{transform_indices = @transform_0, window_bounds = array<i64: 1, 16, 256>}, {transform_indices = @transform_1, window_bounds = array<i64: 1, 16, 256>}, {transform_indices = @transform_2, window_bounds = array<i64: 1, 16, 256>}, {transform_indices = @transform_3, window_bounds = array<i64: 1, 16, 256>}, {pipeline_mode = #tpu.pipeline_mode<synchronous>, transform_indices = @transform_4, window_bounds = array<i64: 1024, 1024>}, {pipeline_mode = #tpu.pipeline_mode<synchronous>, transform_indices = @transform_5, window_bounds = array<i64: 512, 64>}, {transform_indices = @transform_6, window_bounds = array<i64: 8, 128>}]} {
    %c0 = arith.constant 0 : index
    %c0_0 = arith.constant 0 : index
    %c0_1 = arith.constant 0 : index
    %0 = vector.load %arg2[%c0, %c0_0, %c0_1] : memref<1x16x256xbf16, #tpu.memory_space<vmem>>, vector<1x16x256xbf16>
    %1 = vector.shape_cast %0 : vector<1x16x256xbf16> to vector<16x256xbf16>
    %2 = arith.extf %1 : vector<16x256xbf16> to vector<16x256xf32>
    %c0_2 = arith.constant 0 : index
    %c0_3 = arith.constant 0 : index
    %c0_4 = arith.constant 0 : index
    %3 = vector.load %arg3[%c0_2, %c0_3, %c0_4] : memref<1x16x256xbf16, #tpu.memory_space<vmem>>, vector<1x16x256xbf16>
    %4 = vector.shape_cast %3 : vector<1x16x256xbf16> to vector<16x256xbf16>
    %5 = arith.extf %4 : vector<16x256xbf16> to vector<16x256xf32>
    %6 = tpu.concatenate %2, %5 in 0 : vector<16x256xf32>, vector<16x256xf32> -> vector<32x256xf32>
    %7 = vector.extract_strided_slice %6 {offsets = [0, 0], sizes = [16, 256], strides = [1, 1]} : vector<32x256xf32> to vector<16x256xf32>
    %8 = vector.extract_strided_slice %6 {offsets = [1, 0], sizes = [16, 256], strides = [1, 1]} : vector<32x256xf32> to vector<16x256xf32>
    %9 = vector.extract_strided_slice %6 {offsets = [2, 0], sizes = [16, 256], strides = [1, 1]} : vector<32x256xf32> to vector<16x256xf32>
    %10 = vector.extract_strided_slice %6 {offsets = [3, 0], sizes = [16, 256], strides = [1, 1]} : vector<32x256xf32> to vector<16x256xf32>
    %11 = tpu.concatenate %7, %8, %9, %10 in 1 : vector<16x256xf32>, vector<16x256xf32>, vector<16x256xf32>, vector<16x256xf32> -> vector<16x1024xf32>
    %12 = arith.truncf %11 : vector<16x1024xf32> to vector<16x1024xbf16>
    %c0_5 = arith.constant 0 : index
    %c0_6 = arith.constant 0 : index
    %c0_7 = arith.constant 0 : index
    %13 = vector.load %arg4[%c0_5, %c0_6, %c0_7] : memref<1x16x256xbf16, #tpu.memory_space<vmem>>, vector<1x16x256xbf16>
    %14 = vector.shape_cast %13 : vector<1x16x256xbf16> to vector<16x256xbf16>
    %15 = arith.extf %14 : vector<16x256xbf16> to vector<16x256xf32>
    %c0_8 = arith.constant 0 : index
    %c0_9 = arith.constant 0 : index
    %c0_10 = arith.constant 0 : index
    %16 = vector.load %arg5[%c0_8, %c0_9, %c0_10] : memref<1x16x256xbf16, #tpu.memory_space<vmem>>, vector<1x16x256xbf16>
    %17 = vector.shape_cast %16 : vector<1x16x256xbf16> to vector<16x256xbf16>
    %18 = arith.extf %17 : vector<16x256xbf16> to vector<16x256xf32>
    %19 = tpu.concatenate %15, %18 in 0 : vector<16x256xf32>, vector<16x256xf32> -> vector<32x256xf32>
    %20 = vector.extract_strided_slice %19 {offsets = [0, 0], sizes = [16, 256], strides = [1, 1]} : vector<32x256xf32> to vector<16x256xf32>
    %21 = vector.extract_strided_slice %19 {offsets = [1, 0], sizes = [16, 256], strides = [1, 1]} : vector<32x256xf32> to vector<16x256xf32>
    %22 = vector.extract_strided_slice %19 {offsets = [2, 0], sizes = [16, 256], strides = [1, 1]} : vector<32x256xf32> to vector<16x256xf32>
    %23 = vector.extract_strided_slice %19 {offsets = [3, 0], sizes = [16, 256], strides = [1, 1]} : vector<32x256xf32> to vector<16x256xf32>
    %24 = tpu.concatenate %20, %21, %22, %23 in 1 : vector<16x256xf32>, vector<16x256xf32>, vector<16x256xf32>, vector<16x256xf32> -> vector<16x1024xf32>
    %25 = arith.truncf %24 : vector<16x1024xf32> to vector<16x1024xbf16>
    %26 = tpu.concatenate %12, %25 in 0 : vector<16x1024xbf16>, vector<16x1024xbf16> -> vector<32x1024xbf16>
    %c0_11 = arith.constant 0 : index
    %c0_12 = arith.constant 0 : index
    %27 = vector.load %arg6[%c0_11, %c0_12] : memref<1024x1024xbf16, #tpu.memory_space<vmem>>, vector<1024x1024xbf16>
    %cst = arith.constant dense<0.000000e+00> : vector<32x1024xf32>
    %28 = tpu.matmul %26, %27, %cst {dimension_numbers = #tpu.dot_dimension_numbers<[1], [0], [0], [1], [0, 0, 1, 1], [], []>} : vector<32x1024xbf16>, vector<1024x1024xbf16>, vector<32x1024xf32> -> vector<32x1024xf32>
    %29 = vector.extract_strided_slice %28 {offsets = [0, 0], sizes = [32, 512], strides = [1, 1]} : vector<32x1024xf32> to vector<32x512xf32>
    %30 = vector.extract_strided_slice %28 {offsets = [0, 512], sizes = [32, 512], strides = [1, 1]} : vector<32x1024xf32> to vector<32x512xf32>
    %31 = arith.mulf %29, %29 : vector<32x512xf32>
    %32 = arith.mulf %30, %30 : vector<32x512xf32>
    %33 = arith.addf %31, %32 : vector<32x512xf32>
    %34 = arith.truncf %33 : vector<32x512xf32> to vector<32x512xbf16>
    %c0_13 = arith.constant 0 : index
    %c0_14 = arith.constant 0 : index
    %35 = vector.load %arg7[%c0_13, %c0_14] : memref<512x64xbf16, #tpu.memory_space<vmem>>, vector<512x64xbf16>
    %cst_15 = arith.constant dense<0.000000e+00> : vector<32x64xf32>
    %36 = tpu.matmul %34, %35, %cst_15 {dimension_numbers = #tpu.dot_dimension_numbers<[1], [0], [0], [1], [0, 0, 1, 1], [], []>} : vector<32x512xbf16>, vector<512x64xbf16>, vector<32x64xf32> -> vector<32x64xf32>
    %cst_16 = arith.constant 9.99999974E-6 : f32
    %37 = vector.broadcast %cst_16 : f32 to vector<32x64xf32>
    %38 = arith.addf %36, %37 : vector<32x64xf32>
    %39 = math.log %38 : vector<32x64xf32>
    %40 = vector.extract_strided_slice %39 {offsets = [0, 0], sizes = [16, 64], strides = [1, 1]} : vector<32x64xf32> to vector<16x64xf32>
    %41 = vector.extract_strided_slice %39 {offsets = [16, 0], sizes = [16, 64], strides = [1, 1]} : vector<32x64xf32> to vector<16x64xf32>
    %42 = arith.subf %40, %41 : vector<16x64xf32>
    %43 = math.absf %42 : vector<16x64xf32>
    %c16_i32 = arith.constant 16 : i32
    %44 = arith.muli %arg1, %c16_i32 : i32
    %45 = tpu.iota {dimensions = array<i32: 0>} : vector<16x64xi32>
    %46 = vector.broadcast %44 : i32 to vector<16x64xi32>
    %47 = arith.addi %46, %45 : vector<16x64xi32>
    %c9_i32 = arith.constant 9 : i32
    %48 = vector.broadcast %c9_i32 : i32 to vector<16x64xi32>
    %49 = arith.cmpi slt, %47, %48 : vector<16x64xi32>
    %cst_17 = arith.constant 0.000000e+00 : f32
    %50 = vector.broadcast %cst_17 : f32 to vector<16x64xf32>
    %51 = arith.select %49, %43, %50 : vector<16x64xi1>, vector<16x64xf32>
    %52 = vector.shape_cast %51 : vector<16x64xf32> to vector<1x16x64xf32>
    %cst_18 = arith.constant dense<0.000000e+00> : vector<1xf32>
    %53 = vector.multi_reduction <add>, %52, %cst_18 [1, 2] : vector<1x16x64xf32> to vector<1xf32>
    %54 = vector.shape_cast %53 : vector<1xf32> to vector<1x1x1xf32>
    %55 = vector.extract %54[0, 0, 0] : f32 from vector<1x1x1xf32>
    %56 = vector.broadcast %55 : f32 to vector<8x128xf32>
    %c0_19 = arith.constant 0 : index
    %c0_20 = arith.constant 0 : index
    %57 = vector.load %arg8[%c0_19, %c0_20] : memref<8x128xf32, #tpu.memory_space<vmem>>, vector<8x128xf32>
    tpu.vector_store %arg8[%c0_19, %c0_20], %56 {strides = array<i32>} : memref<8x128xf32, #tpu.memory_space<vmem>>, vector<8x128xf32>,
    return
  }
  func.func @transform_0(%arg0: i32, %arg1: i32) -> (i32, i32, i32) {
    %c0_i32 = arith.constant 0 : i32
    %c0_i32_0 = arith.constant 0 : i32
    return %arg0, %arg1, %c0_i32 : i32, i32, i32
  }
  func.func @transform_1(%arg0: i32, %arg1: i32) -> (i32, i32, i32) {
    %c1_i32 = arith.constant 1 : i32
    %0 = arith.addi %arg1, %c1_i32 : i32
    %c1_i32_0 = arith.constant 1 : i32
    %1 = arith.muli %0, %c1_i32_0 : i32
    %c0_i32 = arith.constant 0 : i32
    %c0_i32_1 = arith.constant 0 : i32
    return %arg0, %1, %c0_i32 : i32, i32, i32
  }
  func.func @transform_2(%arg0: i32, %arg1: i32) -> (i32, i32, i32) {
    %c0_i32 = arith.constant 0 : i32
    %c0_i32_0 = arith.constant 0 : i32
    return %arg0, %arg1, %c0_i32 : i32, i32, i32
  }
  func.func @transform_3(%arg0: i32, %arg1: i32) -> (i32, i32, i32) {
    %c1_i32 = arith.constant 1 : i32
    %0 = arith.addi %arg1, %c1_i32 : i32
    %c1_i32_0 = arith.constant 1 : i32
    %1 = arith.muli %0, %c1_i32_0 : i32
    %c0_i32 = arith.constant 0 : i32
    %c0_i32_1 = arith.constant 0 : i32
    return %arg0, %1, %c0_i32 : i32, i32, i32
  }
  func.func @transform_4(%arg0: i32, %arg1: i32) -> (i32, i32) {
    %c0_i32 = arith.constant 0 : i32
    %c0_i32_0 = arith.constant 0 : i32
    %c0_i32_1 = arith.constant 0 : i32
    return %c0_i32, %c0_i32_0 : i32, i32
  }
  func.func @transform_5(%arg0: i32, %arg1: i32) -> (i32, i32) {
    %c0_i32 = arith.constant 0 : i32
    %c0_i32_0 = arith.constant 0 : i32
    %c0_i32_1 = arith.constant 0 : i32
    return %c0_i32, %c0_i32_0 : i32, i32
  }
  func.func @transform_6(%arg0: i32, %arg1: i32) -> (i32, i32) {
    %c0_i32 = arith.constant 0 : i32
    return %arg0, %arg1 : i32, i32
  }
}

</mosaic_0001>

<llo_original>
// kernel: multi_scale_mel_loss.1
$region0: #{multi_scale_mel_loss.1}
  #allocation0 [shape = 'u32[]', space=smem, size = 0x4, offset = 0x4, fixed_abs, tag = 'smem constant byte address 0x4 - core index']
  #allocation1 [shape = 'u32[144,128]{1,0:T(1,128)}', space=vmem, size = 0x12000, scoped, tag = 'internal scratch']
  %s0 = inlined_call_operand.vmem [shape: bf16[2,32,256], index: 0, kind: input, shape index: {}, may-alias: {0,1}]
  %s1 = inlined_call_operand.vmem [shape: bf16[2,32,256], index: 1, kind: input, shape index: {}, may-alias: {0,1}]
  %s2 = inlined_call_operand.vmem [shape: bf16[2,32,256], index: 2, kind: input, shape index: {}, may-alias: {2,3}]
  %s3 = inlined_call_operand.vmem [shape: bf16[2,32,256], index: 3, kind: input, shape index: {}, may-alias: {2,3}]
  %s4 = inlined_call_operand.vmem [shape: bf16[1024,1024], index: 4, kind: input, shape index: {}]
  %s5 = inlined_call_operand.vmem [shape: bf16[512,64], index: 5, kind: input, shape index: {}]
  %s6 = inlined_call_operand.vmem [shape: f32[16,128], index: 6, kind: output, shape index: {}]
  %s7 = sld [smem:[#allocation0]]
  $region57: #{multi_scale_mel_loss.1} parent=0
    _
  %s9 = ssub.s32 1, %s7
  %s10 = scalar_select 0, %s9, %s7
  loop: start=0, step=1, limit=4
  $region2: #{multi_scale_mel_loss.1} parent=0 // loop_pre_header
    _
  $region3: #{multi_scale_mel_loss.1} parent=0 // loop_header
    %s12 = sphi 0, %s16
    %p13 = scmp.ge.s32.totalorder %s12, 4
    %s19 = sphi 0, %s31
    %s20 = sphi 0, %s27
    %s21 = sphi 0, %s19
    %s22 = sphi 0, %s20
    %s23 = sphi 0, %s21
    %s24 = sphi 0, %s22
    %s36 = sphi 0, %s38
    %s39 = sphi 0, %s36
    %s40 = sphi 0, %s39
    %s56 = sphi 0, %s40
    %s66 = sphi 0, %s68
    %s69 = sphi 0, %s66
    %s70 = sphi 0, %s69
    %s86 = sphi 0, %s70
    %s94 = sphi 0, %s96
    %s97 = sphi 0, %s94
    %s98 = sphi 0, %s97
    %s114 = sphi 0, %s98
    %s124 = sphi 0, %s126
    %s127 = sphi 0, %s124
    %s128 = sphi 0, %s127
    %s144 = sphi 0, %s128
    %s148 = sphi 0, %s148
    %s150 = sphi 0, %s148
    %s151 = sphi 0, %s150
    %s165 = sphi 0, %s151
    %s169 = sphi 0, %s169
    %s171 = sphi 0, %s169
    %s172 = sphi 0, %s171
    %s186 = sphi 0, %s172
    %s194 = sphi 0, %s196
    %s197 = sphi 0, %s194
    %s198 = sphi 0, %s197
    %s214 = sphi 0, %s198
  $region4: #{multi_scale_mel_loss.1} parent=0 // loop_header_branch
    %15 = sbr.rel (%p13) target = $region8
  $region5: #{multi_scale_mel_loss.1} parent=0 // loop_body
    %s17 = ssub.s32 %s12, 1
    %s18 = ssub.s32 %s12, 2
    %s25 = sadd.s32 1, %s20
    %p26 = scmp.ge.s32.totalorder %s25, 1
    %s27 = scalar_select %p26, 0, %s25
    %s28 = sadd.s32 1, %s19
    %s29 = scalar_select %p26, %s28, %s19
    %p30 = scmp.ge.s32.totalorder %s29, 2
    %s31 = scalar_select %p30, 0, %s29
    %s32 = ssub.s32 %s19, %s31
    %s33 = ssub.s32 %s20, %s27
    %s34 = sor.u32 %s32, %s33
    %p35 = scmp.eq.s32.totalorder %s34, 0
    %s37 = sadd.s32 %s36, 1
    %s38 = scalar_select %p35, %s36, %s37
    %p41 = pneg %p35
    %p42 = scmp.eq.s32.totalorder %s12, 1
    %p43 = por %p41, %p42
    %p44 = scmp.ne.s32.totalorder %s36, %s39
    %p45 = scmp.eq.s32.totalorder %s12, 0
    %p46 = por %p44, %p45
    %p47 = scmp.ne.s32.totalorder %s36, %s39
    %p48 = scmp.eq.s32.totalorder %s17, 1
    %p49 = por %p47, %p48
    %p50 = scmp.ne.s32.totalorder %s39, %s40
    %p51 = scmp.eq.s32.totalorder %s17, 0
    %p52 = por %p50, %p51
    %p53 = scmp.ne.s32.totalorder %s39, %s40
    %p54 = scmp.eq.s32.totalorder %s18, 1
    %p55 = por %p53, %p54
    %p57 = scmp.ne.s32.totalorder %s40, %s56
    %p58 = scmp.eq.s32.totalorder %s18, 0
    %p59 = por %p57, %p58
    %s60 = sadd.s32 %s20, 1
    %s61 = sadd.s32 %s27, 1
    %s62 = ssub.s32 %s19, %s31
    %s63 = ssub.s32 %s60, %s61
    %s64 = sor.u32 %s62, %s63
    %p65 = scmp.eq.s32.totalorder %s64, 0
    %s67 = sadd.s32 %s66, 1
    %s68 = scalar_select %p65, %s66, %s67
    %p71 = pneg %p65
    %p72 = scmp.eq.s32.totalorder %s12, 1
    %p73 = por %p71, %p72
    %p74 = scmp.ne.s32.totalorder %s66, %s69
    %p75 = scmp.eq.s32.totalorder %s12, 0
    %p76 = por %p74, %p75
    %p77 = scmp.ne.s32.totalorder %s66, %s69
    %p78 = scmp.eq.s32.totalorder %s17, 1
    %p79 = por %p77, %p78
    %p80 = scmp.ne.s32.totalorder %s69, %s70
    %p81 = scmp.eq.s32.totalorder %s17, 0
    %p82 = por %p80, %p81
    %p83 = scmp.ne.s32.totalorder %s69, %s70
    %p84 = scmp.eq.s32.totalorder %s18, 1
    %p85 = por %p83, %p84
    %p87 = scmp.ne.s32.totalorder %s70, %s86
    %p88 = scmp.eq.s32.totalorder %s18, 0
    %p89 = por %p87, %p88
    %s90 = ssub.s32 %s19, %s31
    %s91 = ssub.s32 %s20, %s27
    %s92 = sor.u32 %s90, %s91
    %p93 = scmp.eq.s32.totalorder %s92, 0
    %s95 = sadd.s32 %s94, 1
    %s96 = scalar_select %p93, %s94, %s95
    %p99 = pneg %p93
    %p100 = scmp.eq.s32.totalorder %s12, 1
    %p101 = por %p99, %p100
    %p102 = scmp.ne.s32.totalorder %s94, %s97
    %p103 = scmp.eq.s32.totalorder %s12, 0
    %p104 = por %p102, %p103
    %p105 = scmp.ne.s32.totalorder %s94, %s97
    %p106 = scmp.eq.s32.totalorder %s17, 1
    %p107 = por %p105, %p106
    %p108 = scmp.ne.s32.totalorder %s97, %s98
    %p109 = scmp.eq.s32.totalorder %s17, 0
    %p110 = por %p108, %p109
    %p111 = scmp.ne.s32.totalorder %s97, %s98
    %p112 = scmp.eq.s32.totalorder %s18, 1
    %p113 = por %p111, %p112
    %p115 = scmp.ne.s32.totalorder %s98, %s114
    %p116 = scmp.eq.s32.totalorder %s18, 0
    %p117 = por %p115, %p116
    %s118 = sadd.s32 %s20, 1
    %s119 = sadd.s32 %s27, 1
    %s120 = ssub.s32 %s19, %s31
    %s121 = ssub.s32 %s118, %s119
    %s122 = sor.u32 %s120, %s121
    %p123 = scmp.eq.s32.totalorder %s122, 0
    %s125 = sadd.s32 %s124, 1
    %s126 = scalar_select %p123, %s124, %s125
    %p129 = pneg %p123
    %p130 = scmp.eq.s32.totalorder %s12, 1
    %p131 = por %p129, %p130
    %p132 = scmp.ne.s32.totalorder %s124, %s127
    %p133 = scmp.eq.s32.totalorder %s12, 0
    %p134 = por %p132, %p133
    %p135 = scmp.ne.s32.totalorder %s124, %s127
    %p136 = scmp.eq.s32.totalorder %s17, 1
    %p137 = por %p135, %p136
    %p138 = scmp.ne.s32.totalorder %s127, %s128
    %p139 = scmp.eq.s32.totalorder %s17, 0
    %p140 = por %p138, %p139
    %p141 = scmp.ne.s32.totalorder %s127, %s128
    %p142 = scmp.eq.s32.totalorder %s18, 1
    %p143 = por %p141, %p142
    %p145 = scmp.ne.s32.totalorder %s128, %s144
    %p146 = scmp.eq.s32.totalorder %s18, 0
    %p147 = por %p145, %p146
    %s149 = sadd.s32 %s148, 1
    %p152 = scmp.eq.s32.totalorder %s12, 1
    %p153 = scmp.ne.s32.totalorder %s148, %s150
    %p154 = scmp.eq.s32.totalorder %s12, 0
    %p155 = por %p153, %p154
    %p156 = scmp.ne.s32.totalorder %s148, %s150
    %p157 = scmp.eq.s32.totalorder %s17, 1
    %p158 = por %p156, %p157
    %p159 = scmp.ne.s32.totalorder %s150, %s151
    %p160 = scmp.eq.s32.totalorder %s17, 0
    %p161 = por %p159, %p160
    %p162 = scmp.ne.s32.totalorder %s150, %s151
    %p163 = scmp.eq.s32.totalorder %s18, 1
    %p164 = por %p162, %p163
    %p166 = scmp.ne.s32.totalorder %s151, %s165
    %p167 = scmp.eq.s32.totalorder %s18, 0
    %p168 = por %p166, %p167
    %s170 = sadd.s32 %s169, 1
    %p173 = scmp.eq.s32.totalorder %s12, 1
    %p174 = scmp.ne.s32.totalorder %s169, %s171
    %p175 = scmp.eq.s32.totalorder %s12, 0
    %p176 = por %p174, %p175
    %p177 = scmp.ne.s32.totalorder %s169, %s171
    %p178 = scmp.eq.s32.totalorder %s17, 1
    %p179 = por %p177, %p178
    %p180 = scmp.ne.s32.totalorder %s171, %s172
    %p181 = scmp.eq.s32.totalorder %s17, 0
    %p182 = por %p180, %p181
    %p183 = scmp.ne.s32.totalorder %s171, %s172
    %p184 = scmp.eq.s32.totalorder %s18, 1
    %p185 = por %p183, %p184
    %p187 = scmp.ne.s32.totalorder %s172, %s186
    %p188 = scmp.eq.s32.totalorder %s18, 0
    %p189 = por %p187, %p188
    %s190 = ssub.s32 %s19, %s31
    %s191 = ssub.s32 %s20, %s27
    %s192 = sor.u32 %s190, %s191
    %p193 = scmp.eq.s32.totalorder %s192, 0
    %s195 = sadd.s32 %s194, 1
    %s196 = scalar_select %p193, %s194, %s195
    %p199 = pneg %p193
    %p200 = scmp.eq.s32.totalorder %s12, 1
    %p201 = por %p199, %p200
    %p202 = scmp.ne.s32.totalorder %s194, %s197
    %p203 = scmp.eq.s32.totalorder %s12, 0
    %p204 = por %p202, %p203
    %p205 = scmp.ne.s32.totalorder %s194, %s197
    %p206 = scmp.eq.s32.totalorder %s17, 1
    %p207 = por %p205, %p206
    %p208 = scmp.ne.s32.totalorder %s197, %s198
    %p209 = scmp.eq.s32.totalorder %s17, 0
    %p210 = por %p208, %p209
    %p211 = scmp.ne.s32.totalorder %s197, %s198
    %p212 = scmp.eq.s32.totalorder %s18, 1
    %p213 = por %p211, %p212
    %p215 = scmp.ne.s32.totalorder %s198, %s214
    %p216 = scmp.eq.s32.totalorder %s18, 0
    %p217 = por %p215, %p216
    %p218 = scmp.le.s32.totalorder 1, %s12
    %p219 = scmp.lt.s32.totalorder %s12, 3
    %p220 = pnand %p218, %p219
    %p221 = pneg %p220
    // Predicated region
    $region9: #{multi_scale_mel_loss.1} parent=5 // pred_check
      _
    $region10: #{multi_scale_mel_loss.1} parent=5 // pred_check_branch
      %223 = sbr.rel (%p220) target = $region12
    $region11: #{multi_scale_mel_loss.1} parent=5 // pred_region
      %s224 = ssub.s32 %s12, 1
      // Predicated region
      $region13: #{multi_scale_mel_loss.1} parent=11 // pred_check
        %p225 = pneg %p161
      $region14: #{multi_scale_mel_loss.1} parent=11 // pred_check_branch
        %227 = sbr.rel (%p225) target = $region16
      $region15: #{multi_scale_mel_loss.1} parent=11 // pred_region
        _
      $region16: #{multi_scale_mel_loss.1} parent=11 // pred_fallthru
        _
      // Predicated region
      $region17: #{multi_scale_mel_loss.1} parent=11 // pred_check
        %p228 = pneg %p182
      $region18: #{multi_scale_mel_loss.1} parent=11 // pred_check_branch
        %230 = sbr.rel (%p228) target = $region20
      $region19: #{multi_scale_mel_loss.1} parent=11 // pred_region
        _
      $region20: #{multi_scale_mel_loss.1} parent=11 // pred_fallthru
        _
    $region12: #{multi_scale_mel_loss.1} parent=5 // pred_fallthru
      _
    %p231 = scmp.lt.s32.totalorder %s12, 2
    // Predicated region
    $region21: #{multi_scale_mel_loss.1} parent=5 // pred_check
      %p232 = pneg %p231
    $region22: #{multi_scale_mel_loss.1} parent=5 // pred_check_branch
      %234 = sbr.rel (%p232) target = $region24
    $region23: #{multi_scale_mel_loss.1} parent=5 // pred_region
      // Predicated region
      $region25: #{multi_scale_mel_loss.1} parent=23 // pred_check
        %p235 = pneg %p46
      $region26: #{multi_scale_mel_loss.1} parent=23 // pred_check_branch
        %237 = sbr.rel (%p235) target = $region28
      $region27: #{multi_scale_mel_loss.1} parent=23 // pred_region
        %s238 = smul.u32 2, %s20
        %p239 = scmp.lt.s32.totalorder %s19, 1
        %s240 = scalar_select %p239, %s19, 1
        %p241 = scmp.lt.s32.totalorder %s238, 3
        %s242 = scalar_select %p241, %s238, 3
        %s243 = smul.addr %s242, 2
        %s244 = smul.addr %s240, 8
        %s245 = sadd.s32 %s243, %s244
        %s246 = smul.addr %s245, 4
        %s247 = scalar_lea.vmem %s0, %s246
        %s248 = smul.u32 2, %s20
      $region28: #{multi_scale_mel_loss.1} parent=23 // pred_fallthru
        _
      // Predicated region
      $region29: #{multi_scale_mel_loss.1} parent=23 // pred_check
        %p249 = pneg %p76
      $region30: #{multi_scale_mel_loss.1} parent=23 // pred_check_branch
        %251 = sbr.rel (%p249) target = $region32
      $region31: #{multi_scale_mel_loss.1} parent=23 // pred_region
        %s252 = sadd.s32 %s20, 1
        %s253 = smul.u32 2, %s252
        %p254 = scmp.lt.s32.totalorder %s19, 1
        %s255 = scalar_select %p254, %s19, 1
        %p256 = scmp.lt.s32.totalorder %s253, 3
        %s257 = scalar_select %p256, %s253, 3
        %s258 = smul.addr %s257, 2
        %s259 = smul.addr %s255, 8
        %s260 = sadd.s32 %s258, %s259
        %s261 = smul.addr %s260, 4
        %s262 = scalar_lea.vmem %s1, %s261
        %s263 = sadd.s32 %s20, 1
        %s264 = smul.u32 2, %s263
      $region32: #{multi_scale_mel_loss.1} parent=23 // pred_fallthru
        _
      // Predicated region
      $region33: #{multi_scale_mel_loss.1} parent=23 // pred_check
        %p265 = pneg %p104
      $region34: #{multi_scale_mel_loss.1} parent=23 // pred_check_branch
        %267 = sbr.rel (%p265) target = $region36
      $region35: #{multi_scale_mel_loss.1} parent=23 // pred_region
        %s268 = smul.u32 2, %s20
        %p269 = scmp.lt.s32.totalorder %s19, 1
        %s270 = scalar_select %p269, %s19, 1
        %p271 = scmp.lt.s32.totalorder %s268, 3
        %s272 = scalar_select %p271, %s268, 3
        %s273 = smul.addr %s272, 2
        %s274 = smul.addr %s270, 8
        %s275 = sadd.s32 %s273, %s274
        %s276 = smul.addr %s275, 4
        %s277 = scalar_lea.vmem %s2, %s276
        %s278 = smul.u32 2, %s20
      $region36: #{multi_scale_mel_loss.1} parent=23 // pred_fallthru
        _
      // Predicated region
      $region37: #{multi_scale_mel_loss.1} parent=23 // pred_check
        %p279 = pneg %p134
      $region38: #{multi_scale_mel_loss.1} parent=23 // pred_check_branch
        %281 = sbr.rel (%p279) target = $region40
      $region39: #{multi_scale_mel_loss.1} parent=23 // pred_region
        %s282 = sadd.s32 %s20, 1
        %s283 = smul.u32 2, %s282
        %p284 = scmp.lt.s32.totalorder %s19, 1
        %s285 = scalar_select %p284, %s19, 1
        %p286 = scmp.lt.s32.totalorder %s283, 3
        %s287 = scalar_select %p286, %s283, 3
        %s288 = smul.addr %s287, 2
        %s289 = smul.addr %s285, 8
        %s290 = sadd.s32 %s288, %s289
        %s291 = smul.addr %s290, 4
        %s292 = scalar_lea.vmem %s3, %s291
        %s293 = sadd.s32 %s20, 1
        %s294 = smul.u32 2, %s293
      $region40: #{multi_scale_mel_loss.1} parent=23 // pred_fallthru
        _
    $region24: #{multi_scale_mel_loss.1} parent=5 // pred_fallthru
      _
    %p295 = scmp.le.s32.totalorder 1, %s12
    %p296 = scmp.lt.s32.totalorder %s12, 3
    %p297 = pnand %p295, %p296
    %p298 = pneg %p297
    // Predicated region
    $region41: #{multi_scale_mel_loss.1} parent=5 // pred_check
      _
    $region42: #{multi_scale_mel_loss.1} parent=5 // pred_check_branch
      %300 = sbr.rel (%p297) target = $region44
    $region43: #{multi_scale_mel_loss.1} parent=5 // pred_region
      %s301 = ssub.s32 %s12, 1
      %s302 = smul.u32 2, %s22
      %p303 = scmp.lt.s32.totalorder %s21, 1
      %s304 = scalar_select %p303, %s21, 1
      %p305 = scmp.lt.s32.totalorder %s302, 3
      %s306 = scalar_select %p305, %s302, 3
      %s307 = smul.addr %s306, 2
      %s308 = smul.addr %s304, 8
      %s309 = sadd.s32 %s307, %s308
      %s310 = smul.addr %s309, 4
      %s311 = scalar_lea.vmem %s0, %s310
      %p312 = pneg %p52
      %p313 = pneg %p49
      %s314 = sadd.s32 %s22, 1
      %s315 = smul.u32 2, %s314
      %p316 = scmp.lt.s32.totalorder %s21, 1
      %s317 = scalar_select %p316, %s21, 1
      %p318 = scmp.lt.s32.totalorder %s315, 3
      %s319 = scalar_select %p318, %s315, 3
      %s320 = smul.addr %s319, 2
      %s321 = smul.addr %s317, 8
      %s322 = sadd.s32 %s320, %s321
      %s323 = smul.addr %s322, 4
      %s324 = scalar_lea.vmem %s1, %s323
      %p325 = pneg %p82
      %p326 = pneg %p79
      %s327 = smul.u32 2, %s22
      %p328 = scmp.lt.s32.totalorder %s21, 1
      %s329 = scalar_select %p328, %s21, 1
      %p330 = scmp.lt.s32.totalorder %s327, 3
      %s331 = scalar_select %p330, %s327, 3
      %s332 = smul.addr %s331, 2
      %s333 = smul.addr %s329, 8
      %s334 = sadd.s32 %s332, %s333
      %s335 = smul.addr %s334, 4
      %s336 = scalar_lea.vmem %s2, %s335
      %p337 = pneg %p110
      %p338 = pneg %p107
      %s339 = sadd.s32 %s22, 1
      %s340 = smul.u32 2, %s339
      %p341 = scmp.lt.s32.totalorder %s21, 1
      %s342 = scalar_select %p341, %s21, 1
      %p343 = scmp.lt.s32.totalorder %s340, 3
      %s344 = scalar_select %p343, %s340, 3
      %s345 = smul.addr %s344, 2
      %s346 = smul.addr %s342, 8
      %s347 = sadd.s32 %s345, %s346
      %s348 = smul.addr %s347, 4
      %s349 = scalar_lea.vmem %s3, %s348
      %p350 = pneg %p140
      %p351 = pneg %p137
      %p352 = pneg %p161
      %p353 = pneg %p158
      %p354 = pneg %p182
      %p355 = pneg %p179
      %p356 = pneg %p210
      %p357 = pneg %p207
      %p358 = scmp.lt.s32.totalorder %s21, 1
      %s359 = scalar_select %p358, %s21, 1
      %p360 = scmp.lt.s32.totalorder %s22, 0
      %s361 = scalar_select %p360, %s22, 0
      %s362 = sadd.s32 %s361, %s359
      %s363 = smul.addr %s362, 8
      %s364 = scalar_lea.vmem %s6, %s363
      %s365 = smul.u32 2, %s22
      %p366 = scmp.lt.s32.totalorder %s21, 1
      %s367 = scalar_select %p366, %s21, 1
      %p368 = scmp.lt.s32.totalorder %s365, 3
      %s369 = scalar_select %p368, %s365, 3
      %s370 = smul.addr %s369, 2
      %s371 = smul.addr %s367, 8
      %s372 = sadd.s32 %s370, %s371
      %s373 = smul.addr %s372, 4
      %s374 = scalar_lea.vmem %s0, %s373
      %s375 = smul.u32 2, %s22
      %s376 = sadd.s32 %s22, 1
      %s377 = smul.u32 2, %s376
      %p378 = scmp.lt.s32.totalorder %s21, 1
      %s379 = scalar_select %p378, %s21, 1
      %p380 = scmp.lt.s32.totalorder %s377, 3
      %s381 = scalar_select %p380, %s377, 3
      %s382 = smul.addr %s381, 2
      %s383 = smul.addr %s379, 8
      %s384 = sadd.s32 %s382, %s383
      %s385 = smul.addr %s384, 4
      %s386 = scalar_lea.vmem %s1, %s385
      %s387 = sadd.s32 %s22, 1
      %s388 = smul.u32 2, %s387
      %s389 = smul.u32 2, %s22
      %p390 = scmp.lt.s32.totalorder %s21, 1
      %s391 = scalar_select %p390, %s21, 1
      %p392 = scmp.lt.s32.totalorder %s389, 3
      %s393 = scalar_select %p392, %s389, 3
      %s394 = smul.addr %s393, 2
      %s395 = smul.addr %s391, 8
      %s396 = sadd.s32 %s394, %s395
      %s397 = smul.addr %s396, 4
      %s398 = scalar_lea.vmem %s2, %s397
      %s399 = smul.u32 2, %s22
      %s400 = sadd.s32 %s22, 1
      %s401 = smul.u32 2, %s400
      %p402 = scmp.lt.s32.totalorder %s21, 1
      %s403 = scalar_select %p402, %s21, 1
      %p404 = scmp.lt.s32.totalorder %s401, 3
      %s405 = scalar_select %p404, %s401, 3
      %s406 = smul.addr %s405, 2
      %s407 = smul.addr %s403, 8
      %s408 = sadd.s32 %s406, %s407
      %s409 = smul.addr %s408, 4
      %s410 = scalar_lea.vmem %s3, %s409
      %s411 = sadd.s32 %s22, 1
      %s412 = smul.u32 2, %s411
      %p413 = scmp.lt.s32.totalorder %s21, 1
      %s414 = scalar_select %p413, %s21, 1
      %p415 = scmp.lt.s32.totalorder %s22, 0
      %s416 = scalar_select %p415, %s22, 0
      %s417 = sadd.s32 %s416, %s414
      %s418 = smul.addr %s417, 8
      %s419 = scalar_lea.vmem %s6, %s418
      %v421 = vld [vmem:[%s374] sm:$0xff]
      %v422 = vld [vmem:[%s374 + $0x8] sm:$0xff]
      %v423 = vunpack.c.l.bf16 %v421
      %v424 = vunpack.c.h.bf16 %v421
      %v425 = vunpack.c.l.bf16 %v422
      %v426 = vunpack.c.h.bf16 %v422
      %v427 = vld [vmem:[%s386] sm:$0xff]
      %v428 = vunpack.c.l.bf16 %v427
      %v429 = vunpack.c.h.bf16 %v427
      %vm436 = vcmask 1046528
      %v437 = vrot.slane %v423, 1
      %v438 = vrot.slane %v425, 1
      %v439 = vsel %vm436, %v437, %v438
      %v440 = vrot.slane %v424, 1
      %v441 = vrot.slane %v426, 1
      %v442 = vsel %vm436, %v440, %v441
      %v443 = vrot.slane %v428, 1
      %v444 = vsel %vm436, %v438, %v443
      %v445 = vrot.slane %v429, 1
      %v446 = vsel %vm436, %v441, %v445
      %vm451 = vcmask 1045504
      %v452 = vrot.slane %v423, 2
      %v453 = vrot.slane %v425, 2
      %v454 = vsel %vm451, %v452, %v453
      %v455 = vrot.slane %v424, 2
      %v456 = vrot.slane %v426, 2
      %v457 = vsel %vm451, %v455, %v456
      %v458 = vrot.slane %v428, 2
      %v459 = vsel %vm451, %v453, %v458
      %v460 = vrot.slane %v429, 2
      %v461 = vsel %vm451, %v456, %v460
      %vm466 = vcmask 1044480
      %v467 = vrot.slane %v423, 3
      %v468 = vrot.slane %v425, 3
      %v469 = vsel %vm466, %v467, %v468
      %v470 = vrot.slane %v424, 3
      %v471 = vrot.slane %v426, 3
      %v472 = vsel %vm466, %v470, %v471
      %v473 = vrot.slane %v428, 3
      %v474 = vsel %vm466, %v468, %v473
      %v475 = vrot.slane %v429, 3
      %v476 = vsel %vm466, %v471, %v475
      %v481 = vpack.c.bf16 %v425, %v423
      %v482 = vpack.c.bf16 %v426, %v424
      %v483 = vpack.c.bf16 %v444, %v439
      %v484 = vpack.c.bf16 %v446, %v442
      %v485 = vpack.c.bf16 %v459, %v454
      %v486 = vpack.c.bf16 %v461, %v457
      %v487 = vpack.c.bf16 %v474, %v469
      %v488 = vpack.c.bf16 %v476, %v472
      %v489 = vld [vmem:[%s398] sm:$0xff]
      %v490 = vld [vmem:[%s398 + $0x8] sm:$0xff]
      %v491 = vunpack.c.l.bf16 %v489
      %v492 = vunpack.c.h.bf16 %v489
      %v493 = vunpack.c.l.bf16 %v490
      %v494 = vunpack.c.h.bf16 %v490
      %v495 = vld [vmem:[%s410] sm:$0xff]
      %v496 = vunpack.c.l.bf16 %v495
      %v497 = vunpack.c.h.bf16 %v495
      %v504 = vrot.slane %v491, 1
      %v505 = vrot.slane %v493, 1
      %v506 = vsel %vm436, %v504, %v505
      %v507 = vrot.slane %v492, 1
      %v508 = vrot.slane %v494, 1
      %v509 = vsel %vm436, %v507, %v508
      %v510 = vrot.slane %v496, 1
      %v511 = vsel %vm436, %v505, %v510
      %v512 = vrot.slane %v497, 1
      %v513 = vsel %vm436, %v508, %v512
      %v518 = vrot.slane %v491, 2
      %v519 = vrot.slane %v493, 2
      %v520 = vsel %vm451, %v518, %v519
      %v521 = vrot.slane %v492, 2
      %v522 = vrot.slane %v494, 2
      %v523 = vsel %vm451, %v521, %v522
      %v524 = vrot.slane %v496, 2
      %v525 = vsel %vm451, %v519, %v524
      %v526 = vrot.slane %v497, 2
      %v527 = vsel %vm451, %v522, %v526
      %v532 = vrot.slane %v491, 3
      %v533 = vrot.slane %v493, 3
      %v534 = vsel %vm466, %v532, %v533
      %v535 = vrot.slane %v492, 3
      %v536 = vrot.slane %v494, 3
      %v537 = vsel %vm466, %v535, %v536
      %v538 = vrot.slane %v496, 3
      %v539 = vsel %vm466, %v533, %v538
      %v540 = vrot.slane %v497, 3
      %v541 = vsel %vm466, %v536, %v540
      %v546 = vpack.c.bf16 %v493, %v491
      %v547 = vpack.c.bf16 %v494, %v492
      %v548 = vpack.c.bf16 %v511, %v506
      %v549 = vpack.c.bf16 %v513, %v509
      %v550 = vpack.c.bf16 %v525, %v520
      %v551 = vpack.c.bf16 %v527, %v523
      %v552 = vpack.c.bf16 %v539, %v534
      %v553 = vpack.c.bf16 %v541, %v537
      %v554 = vld [vmem:[%s4] sm:$0xff]
      %v555 = vld [vmem:[%s4 + $0x8] sm:$0xff]
      %v556 = vld [vmem:[%s4 + $0x10] sm:$0xff]
      %v557 = vld [vmem:[%s4 + $0x18] sm:$0xff]
      %v558 = vld [vmem:[%s4 + $0x20] sm:$0xff]
      %v559 = vld [vmem:[%s4 + $0x28] sm:$0xff]
      %v560 = vld [vmem:[%s4 + $0x30] sm:$0xff]
      %v561 = vld [vmem:[%s4 + $0x38] sm:$0xff]
      %v562 = vld [vmem:[%s4 + $0x40] sm:$0xff]
      %v563 = vld [vmem:[%s4 + $0x48] sm:$0xff]
      %v564 = vld [vmem:[%s4 + $0x50] sm:$0xff]
      %v565 = vld [vmem:[%s4 + $0x58] sm:$0xff]
      %v566 = vld [vmem:[%s4 + $0x60] sm:$0xff]
      %v567 = vld [vmem:[%s4 + $0x68] sm:$0xff]
      %v568 = vld [vmem:[%s4 + $0x70] sm:$0xff]
      %v569 = vld [vmem:[%s4 + $0x78] sm:$0xff]
      %v570 = vld [vmem:[%s4 + $0x80] sm:$0xff]
      %v571 = vld [vmem:[%s4 + $0x88] sm:$0xff]
      %v572 = vld [vmem:[%s4 + $0x90] sm:$0xff]
      %v573 = vld [vmem:[%s4 + $0x98] sm:$0xff]
      %v574 = vld [vmem:[%s4 + $0xa0] sm:$0xff]
      %v575 = vld [vmem:[%s4 + $0xa8] sm:$0xff]
      %v576 = vld [vmem:[%s4 + $0xb0] sm:$0xff]
      %v577 = vld [vmem:[%s4 + $0xb8] sm:$0xff]
      %v578 = vld [vmem:[%s4 + $0xc0] sm:$0xff]
      %v579 = vld [vmem:[%s4 + $0xc8] sm:$0xff]
      %v580 = vld [vmem:[%s4 + $0xd0] sm:$0xff]
      %v581 = vld [vmem:[%s4 + $0xd8] sm:$0xff]
      %v582 = vld [vmem:[%s4 + $0xe0] sm:$0xff]
      %v583 = vld [vmem:[%s4 + $0xe8] sm:$0xff]
      %v584 = vld [vmem:[%s4 + $0xf0] sm:$0xff]
      %v585 = vld [vmem:[%s4 + $0xf8] sm:$0xff]
      %v586 = vld [vmem:[%s4 + $0x100] sm:$0xff]
      %v587 = vld [vmem:[%s4 + $0x108] sm:$0xff]
      %v588 = vld [vmem:[%s4 + $0x110] sm:$0xff]
      %v589 = vld [vmem:[%s4 + $0x118] sm:$0xff]
      %v590 = vld [vmem:[%s4 + $0x120] sm:$0xff]
      %v591 = vld [vmem:[%s4 + $0x128] sm:$0xff]
      %v592 = vld [vmem:[%s4 + $0x130] sm:$0xff]
      %v593 = vld [vmem:[%s4 + $0x138] sm:$0xff]
      %v594 = vld [vmem:[%s4 + $0x140] sm:$0xff]
      %v595 = vld [vmem:[%s4 + $0x148] sm:$0xff]
      %v596 = vld [vmem:[%s4 + $0x150] sm:$0xff]
      %v597 = vld [vmem:[%s4 + $0x158] sm:$0xff]
      %v598 = vld [vmem:[%s4 + $0x160] sm:$0xff]
      %v599 = vld [vmem:[%s4 + $0x168] sm:$0xff]
      %v600 = vld [vmem:[%s4 + $0x170] sm:$0xff]
      %v601 = vld [vmem:[%s4 + $0x178] sm:$0xff]
      %v602 = vld [vmem:[%s4 + $0x180] sm:$0xff]
      %v603 = vld [vmem:[%s4 + $0x188] sm:$0xff]
      %v604 = vld [vmem:[%s4 + $0x190] sm:$0xff]
      %v605 = vld [vmem:[%s4 + $0x198] sm:$0xff]
      %v606 = vld [vmem:[%s4 + $0x1a0] sm:$0xff]
      %v607 = vld [vmem:[%s4 + $0x1a8] sm:$0xff]
      %v608 = vld [vmem:[%s4 + $0x1b0] sm:$0xff]
      %v609 = vld [vmem:[%s4 + $0x1b8] sm:$0xff]
      %v610 = vld [vmem:[%s4 + $0x1c0] sm:$0xff]
      %v611 = vld [vmem:[%s4 + $0x1c8] sm:$0xff]
      %v612 = vld [vmem:[%s4 + $0x1d0] sm:$0xff]
      %v613 = vld [vmem:[%s4 + $0x1d8] sm:$0xff]
      %v614 = vld [vmem:[%s4 + $0x1e0] sm:$0xff]
      %v615 = vld [vmem:[%s4 + $0x1e8] sm:$0xff]
      %v616 = vld [vmem:[%s4 + $0x1f0] sm:$0xff]
      %v617 = vld [vmem:[%s4 + $0x1f8] sm:$0xff]
      %v618 = vld [vmem:[%s4 + $0x200] sm:$0xff]
      %v619 = vld [vmem:[%s4 + $0x208] sm:$0xff]
      %v620 = vld [vmem:[%s4 + $0x210] sm:$0xff]
      %v621 = vld [vmem:[%s4 + $0x218] sm:$0xff]
      %v622 = vld [vmem:[%s4 + $0x220] sm:$0xff]
      %v623 = vld [vmem:[%s4 + $0x228] sm:$0xff]
      %v624 = vld [vmem:[%s4 + $0x230] sm:$0xff]
      %v625 = vld [vmem:[%s4 + $0x238] sm:$0xff]
      %v626 = vld [vmem:[%s4 + $0x240] sm:$0xff]
      %v627 = vld [vmem:[%s4 + $0x248] sm:$0xff]
      %v628 = vld [vmem:[%s4 + $0x250] sm:$0xff]
      %v629 = vld [vmem:[%s4 + $0x258] sm:$0xff]
      %v630 = vld [vmem:[%s4 + $0x260] sm:$0xff]
      %v631 = vld [vmem:[%s4 + $0x268] sm:$0xff]
      %v632 = vld [vmem:[%s4 + $0x270] sm:$0xff]
      %v633 = vld [vmem:[%s4 + $0x278] sm:$0xff]
      %v634 = vld [vmem:[%s4 + $0x280] sm:$0xff]
      %v635 = vld [vmem:[%s4 + $0x288] sm:$0xff]
      %v636 = vld [vmem:[%s4 + $0x290] sm:$0xff]
      %v637 = vld [vmem:[%s4 + $0x298] sm:$0xff]
      %v638 = vld [vmem:[%s4 + $0x2a0] sm:$0xff]
      %v639 = vld [vmem:[%s4 + $0x2a8] sm:$0xff]
      %v640 = vld [vmem:[%s4 + $0x2b0] sm:$0xff]
      %v641 = vld [vmem:[%s4 + $0x2b8] sm:$0xff]
      %v642 = vld [vmem:[%s4 + $0x2c0] sm:$0xff]
      %v643 = vld [vmem:[%s4 + $0x2c8] sm:$0xff]
      %v644 = vld [vmem:[%s4 + $0x2d0] sm:$0xff]
      %v645 = vld [vmem:[%s4 + $0x2d8] sm:$0xff]
      %v646 = vld [vmem:[%s4 + $0x2e0] sm:$0xff]
      %v647 = vld [vmem:[%s4 + $0x2e8] sm:$0xff]
      %v648 = vld [vmem:[%s4 + $0x2f0] sm:$0xff]
      %v649 = vld [vmem:[%s4 + $0x2f8] sm:$0xff]
      %v650 = vld [vmem:[%s4 + $0x300] sm:$0xff]
      %v651 = vld [vmem:[%s4 + $0x308] sm:$0xff]
      %v652 = vld [vmem:[%s4 + $0x310] sm:$0xff]
      %v653 = vld [vmem:[%s4 + $0x318] sm:$0xff]
      %v654 = vld [vmem:[%s4 + $0x320] sm:$0xff]
      %v655 = vld [vmem:[%s4 + $0x328] sm:$0xff]
      %v656 = vld [vmem:[%s4 + $0x330] sm:$0xff]
      %v657 = vld [vmem:[%s4 + $0x338] sm:$0xff]
      %v658 = vld [vmem:[%s4 + $0x340] sm:$0xff]
      %v659 = vld [vmem:[%s4 + $0x348] sm:$0xff]
      %v660 = vld [vmem:[%s4 + $0x350] sm:$0xff]
      %v661 = vld [vmem:[%s4 + $0x358] sm:$0xff]
      %v662 = vld [vmem:[%s4 + $0x360] sm:$0xff]
      %v663 = vld [vmem:[%s4 + $0x368] sm:$0xff]
      %v664 = vld [vmem:[%s4 + $0x370] sm:$0xff]
      %v665 = vld [vmem:[%s4 + $0x378] sm:$0xff]
      %v666 = vld [vmem:[%s4 + $0x380] sm:$0xff]
      %v667 = vld [vmem:[%s4 + $0x388] sm:$0xff]
      %v668 = vld [vmem:[%s4 + $0x390] sm:$0xff]
      %v669 = vld [vmem:[%s4 + $0x398] sm:$0xff]
      %v670 = vld [vmem:[%s4 + $0x3a0] sm:$0xff]
      %v671 = vld [vmem:[%s4 + $0x3a8] sm:$0xff]
      %v672 = vld [vmem:[%s4 + $0x3b0] sm:$0xff]
      %v673 = vld [vmem:[%s4 + $0x3b8] sm:$0xff]
      %v674 = vld [vmem:[%s4 + $0x3c0] sm:$0xff]
      %v675 = vld [vmem:[%s4 + $0x3c8] sm:$0xff]
      %v676 = vld [vmem:[%s4 + $0x3d0] sm:$0xff]
      %v677 = vld [vmem:[%s4 + $0x3d8] sm:$0xff]
      %v678 = vld [vmem:[%s4 + $0x3e0] sm:$0xff]
      %v679 = vld [vmem:[%s4 + $0x3e8] sm:$0xff]
      %v680 = vld [vmem:[%s4 + $0x3f0] sm:$0xff]
      %v681 = vld [vmem:[%s4 + $0x3f8] sm:$0xff]
      %v682 = vld [vmem:[%s4 + $0x400] sm:$0xff]
      %v683 = vld [vmem:[%s4 + $0x408] sm:$0xff]
      %v684 = vld [vmem:[%s4 + $0x410] sm:$0xff]
      %v685 = vld [vmem:[%s4 + $0x418] sm:$0xff]
      %v686 = vld [vmem:[%s4 + $0x420] sm:$0xff]
      %v687 = vld [vmem:[%s4 + $0x428] sm:$0xff]
      %v688 = vld [vmem:[%s4 + $0x430] sm:$0xff]
      %v689 = vld [vmem:[%s4 + $0x438] sm:$0xff]
      %v690 = vld [vmem:[%s4 + $0x440] sm:$0xff]
      %v691 = vld [vmem:[%s4 + $0x448] sm:$0xff]
      %v692 = vld [vmem:[%s4 + $0x450] sm:$0xff]
      %v693 = vld [vmem:[%s4 + $0x458] sm:$0xff]
      %v694 = vld [vmem:[%s4 + $0x460] sm:$0xff]
      %v695 = vld [vmem:[%s4 + $0x468] sm:$0xff]
      %v696 = vld [vmem:[%s4 + $0x470] sm:$0xff]
      %v697 = vld [vmem:[%s4 + $0x478] sm:$0xff]
      %v698 = vld [vmem:[%s4 + $0x480] sm:$0xff]
      %v699 = vld [vmem:[%s4 + $0x488] sm:$0xff]
      %v700 = vld [vmem:[%s4 + $0x490] sm:$0xff]
      %v701 = vld [vmem:[%s4 + $0x498] sm:$0xff]
      %v702 = vld [vmem:[%s4 + $0x4a0] sm:$0xff]
      %v703 = vld [vmem:[%s4 + $0x4a8] sm:$0xff]
      %v704 = vld [vmem:[%s4 + $0x4b0] sm:$0xff]
      %v705 = vld [vmem:[%s4 + $0x4b8] sm:$0xff]
      %v706 = vld [vmem:[%s4 + $0x4c0] sm:$0xff]
      %v707 = vld [vmem:[%s4 + $0x4c8] sm:$0xff]
      %v708 = vld [vmem:[%s4 + $0x4d0] sm:$0xff]
      %v709 = vld [vmem:[%s4 + $0x4d8] sm:$0xff]
      %v710 = vld [vmem:[%s4 + $0x4e0] sm:$0xff]
      %v711 = vld [vmem:[%s4 + $0x4e8] sm:$0xff]
      %v712 = vld [vmem:[%s4 + $0x4f0] sm:$0xff]
      %v713 = vld [vmem:[%s4 + $0x4f8] sm:$0xff]
      %v714 = vld [vmem:[%s4 + $0x500] sm:$0xff]
      %v715 = vld [vmem:[%s4 + $0x508] sm:$0xff]
      %v716 = vld [vmem:[%s4 + $0x510] sm:$0xff]
      %v717 = vld [vmem:[%s4 + $0x518] sm:$0xff]
      %v718 = vld [vmem:[%s4 + $0x520] sm:$0xff]
      %v719 = vld [vmem:[%s4 + $0x528] sm:$0xff]
      %v720 = vld [vmem:[%s4 + $0x530] sm:$0xff]
      %v721 = vld [vmem:[%s4 + $0x538] sm:$0xff]
      %v722 = vld [vmem:[%s4 + $0x540] sm:$0xff]
      %v723 = vld [vmem:[%s4 + $0x548] sm:$0xff]
      %v724 = vld [vmem:[%s4 + $0x550] sm:$0xff]
      %v725 = vld [vmem:[%s4 + $0x558] sm:$0xff]
      %v726 = vld [vmem:[%s4 + $0x560] sm:$0xff]
      %v727 = vld [vmem:[%s4 + $0x568] sm:$0xff]
      %v728 = vld [vmem:[%s4 + $0x570] sm:$0xff]
      %v729 = vld [vmem:[%s4 + $0x578] sm:$0xff]
      %v730 = vld [vmem:[%s4 + $0x580] sm:$0xff]
      %v731 = vld [vmem:[%s4 + $0x588] sm:$0xff]
      %v732 = vld [vmem:[%s4 + $0x590] sm:$0xff]
      %v733 = vld [vmem:[%s4 + $0x598] sm:$0xff]
      %v734 = vld [vmem:[%s4 + $0x5a0] sm:$0xff]
      %v735 = vld [vmem:[%s4 + $0x5a8] sm:$0xff]
      %v736 = vld [vmem:[%s4 + $0x5b0] sm:$0xff]
      %v737 = vld [vmem:[%s4 + $0x5b8] sm:$0xff]
      %v738 = vld [vmem:[%s4 + $0x5c0] sm:$0xff]
      %v739 = vld [vmem:[%s4 + $0x5c8] sm:$0xff]
      %v740 = vld [vmem:[%s4 + $0x5d0] sm:$0xff]
      %v741 = vld [vmem:[%s4 + $0x5d8] sm:$0xff]
      %v742 = vld [vmem:[%s4 + $0x5e0] sm:$0xff]
      %v743 = vld [vmem:[%s4 + $0x5e8] sm:$0xff]
      %v744 = vld [vmem:[%s4 + $0x5f0] sm:$0xff]
      %v745 = vld [vmem:[%s4 + $0x5f8] sm:$0xff]
      %v746 = vld [vmem:[%s4 + $0x600] sm:$0xff]
      %v747 = vld [vmem:[%s4 + $0x608] sm:$0xff]
      %v748 = vld [vmem:[%s4 + $0x610] sm:$0xff]
      %v749 = vld [vmem:[%s4 + $0x618] sm:$0xff]
      %v750 = vld [vmem:[%s4 + $0x620] sm:$0xff]
      %v751 = vld [vmem:[%s4 + $0x628] sm:$0xff]
      %v752 = vld [vmem:[%s4 + $0x630] sm:$0xff]
      %v753 = vld [vmem:[%s4 + $0x638] sm:$0xff]
      %v754 = vld [vmem:[%s4 + $0x640] sm:$0xff]
      %v755 = vld [vmem:[%s4 + $0x648] sm:$0xff]
      %v756 = vld [vmem:[%s4 + $0x650] sm:$0xff]
      %v757 = vld [vmem:[%s4 + $0x658] sm:$0xff]
      %v758 = vld [vmem:[%s4 + $0x660] sm:$0xff]
      %v759 = vld [vmem:[%s4 + $0x668] sm:$0xff]
      %v760 = vld [vmem:[%s4 + $0x670] sm:$0xff]
      %v761 = vld [vmem:[%s4 + $0x678] sm:$0xff]
      %v762 = vld [vmem:[%s4 + $0x680] sm:$0xff]
      %v763 = vld [vmem:[%s4 + $0x688] sm:$0xff]
      %v764 = vld [vmem:[%s4 + $0x690] sm:$0xff]
      %v765 = vld [vmem:[%s4 + $0x698] sm:$0xff]
      %v766 = vld [vmem:[%s4 + $0x6a0] sm:$0xff]
      %v767 = vld [vmem:[%s4 + $0x6a8] sm:$0xff]
      %v768 = vld [vmem:[%s4 + $0x6b0] sm:$0xff]
      %v769 = vld [vmem:[%s4 + $0x6b8] sm:$0xff]
      %v770 = vld [vmem:[%s4 + $0x6c0] sm:$0xff]
      %v771 = vld [vmem:[%s4 + $0x6c8] sm:$0xff]
      %v772 = vld [vmem:[%s4 + $0x6d0] sm:$0xff]
      %v773 = vld [vmem:[%s4 + $0x6d8] sm:$0xff]
      %v774 = vld [vmem:[%s4 + $0x6e0] sm:$0xff]
      %v775 = vld [vmem:[%s4 + $0x6e8] sm:$0xff]
      %v776 = vld [vmem:[%s4 + $0x6f0] sm:$0xff]
      %v777 = vld [vmem:[%s4 + $0x6f8] sm:$0xff]
      %v778 = vld [vmem:[%s4 + $0x700] sm:$0xff]
      %v779 = vld [vmem:[%s4 + $0x708] sm:$0xff]
      %v780 = vld [vmem:[%s4 + $0x710] sm:$0xff]
      %v781 = vld [vmem:[%s4 + $0x718] sm:$0xff]
      %v782 = vld [vmem:[%s4 + $0x720] sm:$0xff]
      %v783 = vld [vmem:[%s4 + $0x728] sm:$0xff]
      %v784 = vld [vmem:[%s4 + $0x730] sm:$0xff]
      %v785 = vld [vmem:[%s4 + $0x738] sm:$0xff]
      %v786 = vld [vmem:[%s4 + $0x740] sm:$0xff]
      %v787 = vld [vmem:[%s4 + $0x748] sm:$0xff]
      %v788 = vld [vmem:[%s4 + $0x750] sm:$0xff]
      %v789 = vld [vmem:[%s4 + $0x758] sm:$0xff]
      %v790 = vld [vmem:[%s4 + $0x760] sm:$0xff]
      %v791 = vld [vmem:[%s4 + $0x768] sm:$0xff]
      %v792 = vld [vmem:[%s4 + $0x770] sm:$0xff]
      %v793 = vld [vmem:[%s4 + $0x778] sm:$0xff]
      %v794 = vld [vmem:[%s4 + $0x780] sm:$0xff]
      %v795 = vld [vmem:[%s4 + $0x788] sm:$0xff]
      %v796 = vld [vmem:[%s4 + $0x790] sm:$0xff]
      %v797 = vld [vmem:[%s4 + $0x798] sm:$0xff]
      %v798 = vld [vmem:[%s4 + $0x7a0] sm:$0xff]
      %v799 = vld [vmem:[%s4 + $0x7a8] sm:$0xff]
      %v800 = vld [vmem:[%s4 + $0x7b0] sm:$0xff]
      %v801 = vld [vmem:[%s4 + $0x7b8] sm:$0xff]
      %v802 = vld [vmem:[%s4 + $0x7c0] sm:$0xff]
      %v803 = vld [vmem:[%s4 + $0x7c8] sm:$0xff]
      %v804 = vld [vmem:[%s4 + $0x7d0] sm:$0xff]
      %v805 = vld [vmem:[%s4 + $0x7d8] sm:$0xff]
      %v806 = vld [vmem:[%s4 + $0x7e0] sm:$0xff]
      %v807 = vld [vmem:[%s4 + $0x7e8] sm:$0xff]
      %v808 = vld [vmem:[%s4 + $0x7f0] sm:$0xff]
      %v809 = vld [vmem:[%s4 + $0x7f8] sm:$0xff]
      %v810 = vld [vmem:[%s4 + $0x800] sm:$0xff]
      %v811 = vld [vmem:[%s4 + $0x808] sm:$0xff]
      %v812 = vld [vmem:[%s4 + $0x810] sm:$0xff]
      %v813 = vld [vmem:[%s4 + $0x818] sm:$0xff]
      %v814 = vld [vmem:[%s4 + $0x820] sm:$0xff]
      %v815 = vld [vmem:[%s4 + $0x828] sm:$0xff]
      %v816 = vld [vmem:[%s4 + $0x830] sm:$0xff]
      %v817 = vld [vmem:[%s4 + $0x838] sm:$0xff]
      %v818 = vld [vmem:[%s4 + $0x840] sm:$0xff]
      %v819 = vld [vmem:[%s4 + $0x848] sm:$0xff]
      %v820 = vld [vmem:[%s4 + $0x850] sm:$0xff]
      %v821 = vld [vmem:[%s4 + $0x858] sm:$0xff]
      %v822 = vld [vmem:[%s4 + $0x860] sm:$0xff]
      %v823 = vld [vmem:[%s4 + $0x868] sm:$0xff]
      %v824 = vld [vmem:[%s4 + $0x870] sm:$0xff]
      %v825 = vld [vmem:[%s4 + $0x878] sm:$0xff]
      %v826 = vld [vmem:[%s4 + $0x880] sm:$0xff]
      %v827 = vld [vmem:[%s4 + $0x888] sm:$0xff]
      %v828 = vld [vmem:[%s4 + $0x890] sm:$0xff]
      %v829 = vld [vmem:[%s4 + $0x898] sm:$0xff]
      %v830 = vld [vmem:[%s4 + $0x8a0] sm:$0xff]
      %v831 = vld [vmem:[%s4 + $0x8a8] sm:$0xff]
      %v832 = vld [vmem:[%s4 + $0x8b0] sm:$0xff]
      %v833 = vld [vmem:[%s4 + $0x8b8] sm:$0xff]
      %v834 = vld [vmem:[%s4 + $0x8c0] sm:$0xff]
      %v835 = vld [vmem:[%s4 + $0x8c8] sm:$0xff]
      %v836 = vld [vmem:[%s4 + $0x8d0] sm:$0xff]
      %v837 = vld [vmem:[%s4 + $0x8d8] sm:$0xff]
      %v838 = vld [vmem:[%s4 + $0x8e0] sm:$0xff]
      %v839 = vld [vmem:[%s4 + $0x8e8] sm:$0xff]
      %v840 = vld [vmem:[%s4 + $0x8f0] sm:$0xff]
      %v841 = vld [vmem:[%s4 + $0x8f8] sm:$0xff]
      %v842 = vld [vmem:[%s4 + $0x900] sm:$0xff]
      %v843 = vld [vmem:[%s4 + $0x908] sm:$0xff]
      %v844 = vld [vmem:[%s4 + $0x910] sm:$0xff]
      %v845 = vld [vmem:[%s4 + $0x918] sm:$0xff]
      %v846 = vld [vmem:[%s4 + $0x920] sm:$0xff]
      %v847 = vld [vmem:[%s4 + $0x928] sm:$0xff]
      %v848 = vld [vmem:[%s4 + $0x930] sm:$0xff]
      %v849 = vld [vmem:[%s4 + $0x938] sm:$0xff]
      %v850 = vld [vmem:[%s4 + $0x940] sm:$0xff]
      %v851 = vld [vmem:[%s4 + $0x948] sm:$0xff]
      %v852 = vld [vmem:[%s4 + $0x950] sm:$0xff]
      %v853 = vld [vmem:[%s4 + $0x958] sm:$0xff]
      %v854 = vld [vmem:[%s4 + $0x960] sm:$0xff]
      %v855 = vld [vmem:[%s4 + $0x968] sm:$0xff]
      %v856 = vld [vmem:[%s4 + $0x970] sm:$0xff]
      %v857 = vld [vmem:[%s4 + $0x978] sm:$0xff]
      %v858 = vld [vmem:[%s4 + $0x980] sm:$0xff]
      %v859 = vld [vmem:[%s4 + $0x988] sm:$0xff]
      %v860 = vld [vmem:[%s4 + $0x990] sm:$0xff]
      %v861 = vld [vmem:[%s4 + $0x998] sm:$0xff]
      %v862 = vld [vmem:[%s4 + $0x9a0] sm:$0xff]
      %v863 = vld [vmem:[%s4 + $0x9a8] sm:$0xff]
      %v864 = vld [vmem:[%s4 + $0x9b0] sm:$0xff]
      %v865 = vld [vmem:[%s4 + $0x9b8] sm:$0xff]
      %v866 = vld [vmem:[%s4 + $0x9c0] sm:$0xff]
      %v867 = vld [vmem:[%s4 + $0x9c8] sm:$0xff]
      %v868 = vld [vmem:[%s4 + $0x9d0] sm:$0xff]
      %v869 = vld [vmem:[%s4 + $0x9d8] sm:$0xff]
      %v870 = vld [vmem:[%s4 + $0x9e0] sm:$0xff]
      %v871 = vld [vmem:[%s4 + $0x9e8] sm:$0xff]
      %v872 = vld [vmem:[%s4 + $0x9f0] sm:$0xff]
      %v873 = vld [vmem:[%s4 + $0x9f8] sm:$0xff]
      %v874 = vld [vmem:[%s4 + $0xa00] sm:$0xff]
      %v875 = vld [vmem:[%s4 + $0xa08] sm:$0xff]
      %v876 = vld [vmem:[%s4 + $0xa10] sm:$0xff]
      %v877 = vld [vmem:[%s4 + $0xa18] sm:$0xff]
      %v878 = vld [vmem:[%s4 + $0xa20] sm:$0xff]
      %v879 = vld [vmem:[%s4 + $0xa28] sm:$0xff]
      %v880 = vld [vmem:[%s4 + $0xa30] sm:$0xff]
      %v881 = vld [vmem:[%s4 + $0xa38] sm:$0xff]
      %v882 = vld [vmem:[%s4 + $0xa40] sm:$0xff]
      %v883 = vld [vmem:[%s4 + $0xa48] sm:$0xff]
      %v884 = vld [vmem:[%s4 + $0xa50] sm:$0xff]
      %v885 = vld [vmem:[%s4 + $0xa58] sm:$0xff]
      %v886 = vld [vmem:[%s4 + $0xa60] sm:$0xff]
      %v887 = vld [vmem:[%s4 + $0xa68] sm:$0xff]
      %v888 = vld [vmem:[%s4 + $0xa70] sm:$0xff]
      %v889 = vld [vmem:[%s4 + $0xa78] sm:$0xff]
      %v890 = vld [vmem:[%s4 + $0xa80] sm:$0xff]
      %v891 = vld [vmem:[%s4 + $0xa88] sm:$0xff]
      %v892 = vld [vmem:[%s4 + $0xa90] sm:$0xff]
      %v893 = vld [vmem:[%s4 + $0xa98] sm:$0xff]
      %v894 = vld [vmem:[%s4 + $0xaa0] sm:$0xff]
      %v895 = vld [vmem:[%s4 + $0xaa8] sm:$0xff]
      %v896 = vld [vmem:[%s4 + $0xab0] sm:$0xff]
      %v897 = vld [vmem:[%s4 + $0xab8] sm:$0xff]
      %v898 = vld [vmem:[%s4 + $0xac0] sm:$0xff]
      %v899 = vld [vmem:[%s4 + $0xac8] sm:$0xff]
      %v900 = vld [vmem:[%s4 + $0xad0] sm:$0xff]
      %v901 = vld [vmem:[%s4 + $0xad8] sm:$0xff]
      %v902 = vld [vmem:[%s4 + $0xae0] sm:$0xff]
      %v903 = vld [vmem:[%s4 + $0xae8] sm:$0xff]
      %v904 = vld [vmem:[%s4 + $0xaf0] sm:$0xff]
      %v905 = vld [vmem:[%s4 + $0xaf8] sm:$0xff]
      %v906 = vld [vmem:[%s4 + $0xb00] sm:$0xff]
      %v907 = vld [vmem:[%s4 + $0xb08] sm:$0xff]
      %v908 = vld [vmem:[%s4 + $0xb10] sm:$0xff]
      %v909 = vld [vmem:[%s4 + $0xb18] sm:$0xff]
      %v910 = vld [vmem:[%s4 + $0xb20] sm:$0xff]
      %v911 = vld [vmem:[%s4 + $0xb28] sm:$0xff]
      %v912 = vld [vmem:[%s4 + $0xb30] sm:$0xff]
      %v913 = vld [vmem:[%s4 + $0xb38] sm:$0xff]
      %v914 = vld [vmem:[%s4 + $0xb40] sm:$0xff]
      %v915 = vld [vmem:[%s4 + $0xb48] sm:$0xff]
      %v916 = vld [vmem:[%s4 + $0xb50] sm:$0xff]
      %v917 = vld [vmem:[%s4 + $0xb58] sm:$0xff]
      %v918 = vld [vmem:[%s4 + $0xb60] sm:$0xff]
      %v919 = vld [vmem:[%s4 + $0xb68] sm:$0xff]
      %v920 = vld [vmem:[%s4 + $0xb70] sm:$0xff]
      %v921 = vld [vmem:[%s4 + $0xb78] sm:$0xff]
      %v922 = vld [vmem:[%s4 + $0xb80] sm:$0xff]
      %v923 = vld [vmem:[%s4 + $0xb88] sm:$0xff]
      %v924 = vld [vmem:[%s4 + $0xb90] sm:$0xff]
      %v925 = vld [vmem:[%s4 + $0xb98] sm:$0xff]
      %v926 = vld [vmem:[%s4 + $0xba0] sm:$0xff]
      %v927 = vld [vmem:[%s4 + $0xba8] sm:$0xff]
      %v928 = vld [vmem:[%s4 + $0xbb0] sm:$0xff]
      %v929 = vld [vmem:[%s4 + $0xbb8] sm:$0xff]
      %v930 = vld [vmem:[%s4 + $0xbc0] sm:$0xff]
      %v931 = vld [vmem:[%s4 + $0xbc8] sm:$0xff]
      %v932 = vld [vmem:[%s4 + $0xbd0] sm:$0xff]
      %v933 = vld [vmem:[%s4 + $0xbd8] sm:$0xff]
      %v934 = vld [vmem:[%s4 + $0xbe0] sm:$0xff]
      %v935 = vld [vmem:[%s4 + $0xbe8] sm:$0xff]
      %v936 = vld [vmem:[%s4 + $0xbf0] sm:$0xff]
      %v937 = vld [vmem:[%s4 + $0xbf8] sm:$0xff]
      %v938 = vld [vmem:[%s4 + $0xc00] sm:$0xff]
      %v939 = vld [vmem:[%s4 + $0xc08] sm:$0xff]
      %v940 = vld [vmem:[%s4 + $0xc10] sm:$0xff]
      %v941 = vld [vmem:[%s4 + $0xc18] sm:$0xff]
      %v942 = vld [vmem:[%s4 + $0xc20] sm:$0xff]
      %v943 = vld [vmem:[%s4 + $0xc28] sm:$0xff]
      %v944 = vld [vmem:[%s4 + $0xc30] sm:$0xff]
      %v945 = vld [vmem:[%s4 + $0xc38] sm:$0xff]
      %v946 = vld [vmem:[%s4 + $0xc40] sm:$0xff]
      %v947 = vld [vmem:[%s4 + $0xc48] sm:$0xff]
      %v948 = vld [vmem:[%s4 + $0xc50] sm:$0xff]
      %v949 = vld [vmem:[%s4 + $0xc58] sm:$0xff]
      %v950 = vld [vmem:[%s4 + $0xc60] sm:$0xff]
      %v951 = vld [vmem:[%s4 + $0xc68] sm:$0xff]
      %v952 = vld [vmem:[%s4 + $0xc70] sm:$0xff]
      %v953 = vld [vmem:[%s4 + $0xc78] sm:$0xff]
      %v954 = vld [vmem:[%s4 + $0xc80] sm:$0xff]
      %v955 = vld [vmem:[%s4 + $0xc88] sm:$0xff]
      %v956 = vld [vmem:[%s4 + $0xc90] sm:$0xff]
      %v957 = vld [vmem:[%s4 + $0xc98] sm:$0xff]
      %v958 = vld [vmem:[%s4 + $0xca0] sm:$0xff]
      %v959 = vld [vmem:[%s4 + $0xca8] sm:$0xff]
      %v960 = vld [vmem:[%s4 + $0xcb0] sm:$0xff]
      %v961 = vld [vmem:[%s4 + $0xcb8] sm:$0xff]
      %v962 = vld [vmem:[%s4 + $0xcc0] sm:$0xff]
      %v963 = vld [vmem:[%s4 + $0xcc8] sm:$0xff]
      %v964 = vld [vmem:[%s4 + $0xcd0] sm:$0xff]
      %v965 = vld [vmem:[%s4 + $0xcd8] sm:$0xff]
      %v966 = vld [vmem:[%s4 + $0xce0] sm:$0xff]
      %v967 = vld [vmem:[%s4 + $0xce8] sm:$0xff]
      %v968 = vld [vmem:[%s4 + $0xcf0] sm:$0xff]
      %v969 = vld [vmem:[%s4 + $0xcf8] sm:$0xff]
      %v970 = vld [vmem:[%s4 + $0xd00] sm:$0xff]
      %v971 = vld [vmem:[%s4 + $0xd08] sm:$0xff]
      %v972 = vld [vmem:[%s4 + $0xd10] sm:$0xff]
      %v973 = vld [vmem:[%s4 + $0xd18] sm:$0xff]
      %v974 = vld [vmem:[%s4 + $0xd20] sm:$0xff]
      %v975 = vld [vmem:[%s4 + $0xd28] sm:$0xff]
      %v976 = vld [vmem:[%s4 + $0xd30] sm:$0xff]
      %v977 = vld [vmem:[%s4 + $0xd38] sm:$0xff]
      %v978 = vld [vmem:[%s4 + $0xd40] sm:$0xff]
      %v979 = vld [vmem:[%s4 + $0xd48] sm:$0xff]
      %v980 = vld [vmem:[%s4 + $0xd50] sm:$0xff]
      %v981 = vld [vmem:[%s4 + $0xd58] sm:$0xff]
      %v982 = vld [vmem:[%s4 + $0xd60] sm:$0xff]
      %v983 = vld [vmem:[%s4 + $0xd68] sm:$0xff]
      %v984 = vld [vmem:[%s4 + $0xd70] sm:$0xff]
      %v985 = vld [vmem:[%s4 + $0xd78] sm:$0xff]
      %v986 = vld [vmem:[%s4 + $0xd80] sm:$0xff]
      %v987 = vld [vmem:[%s4 + $0xd88] sm:$0xff]
      %v988 = vld [vmem:[%s4 + $0xd90] sm:$0xff]
      %v989 = vld [vmem:[%s4 + $0xd98] sm:$0xff]
      %v990 = vld [vmem:[%s4 + $0xda0] sm:$0xff]
      %v991 = vld [vmem:[%s4 + $0xda8] sm:$0xff]
      %v992 = vld [vmem:[%s4 + $0xdb0] sm:$0xff]
      %v993 = vld [vmem:[%s4 + $0xdb8] sm:$0xff]
      %v994 = vld [vmem:[%s4 + $0xdc0] sm:$0xff]
      %v995 = vld [vmem:[%s4 + $0xdc8] sm:$0xff]
      %v996 = vld [vmem:[%s4 + $0xdd0] sm:$0xff]
      %v997 = vld [vmem:[%s4 + $0xdd8] sm:$0xff]
      %v998 = vld [vmem:[%s4 + $0xde0] sm:$0xff]
      %v999 = vld [vmem:[%s4 + $0xde8] sm:$0xff]
      %v1000 = vld [vmem:[%s4 + $0xdf0] sm:$0xff]
      %v1001 = vld [vmem:[%s4 + $0xdf8] sm:$0xff]
      %v1002 = vld [vmem:[%s4 + $0xe00] sm:$0xff]
      %v1003 = vld [vmem:[%s4 + $0xe08] sm:$0xff]
      %v1004 = vld [vmem:[%s4 + $0xe10] sm:$0xff]
      %v1005 = vld [vmem:[%s4 + $0xe18] sm:$0xff]
      %v1006 = vld [vmem:[%s4 + $0xe20] sm:$0xff]
      %v1007 = vld [vmem:[%s4 + $0xe28] sm:$0xff]
      %v1008 = vld [vmem:[%s4 + $0xe30] sm:$0xff]
      %v1009 = vld [vmem:[%s4 + $0xe38] sm:$0xff]
      %v1010 = vld [vmem:[%s4 + $0xe40] sm:$0xff]
      %v1011 = vld [vmem:[%s4 + $0xe48] sm:$0xff]
      %v1012 = vld [vmem:[%s4 + $0xe50] sm:$0xff]
      %v1013 = vld [vmem:[%s4 + $0xe58] sm:$0xff]
      %v1014 = vld [vmem:[%s4 + $0xe60] sm:$0xff]
      %v1015 = vld [vmem:[%s4 + $0xe68] sm:$0xff]
      %v1016 = vld [vmem:[%s4 + $0xe70] sm:$0xff]
      %v1017 = vld [vmem:[%s4 + $0xe78] sm:$0xff]
      %v1018 = vld [vmem:[%s4 + $0xe80] sm:$0xff]
      %v1019 = vld [vmem:[%s4 + $0xe88] sm:$0xff]
      %v1020 = vld [vmem:[%s4 + $0xe90] sm:$0xff]
      %v1021 = vld [vmem:[%s4 + $0xe98] sm:$0xff]
      %v1022 = vld [vmem:[%s4 + $0xea0] sm:$0xff]
      %v1023 = vld [vmem:[%s4 + $0xea8] sm:$0xff]
      %v1024 = vld [vmem:[%s4 + $0xeb0] sm:$0xff]
      %v1025 = vld [vmem:[%s4 + $0xeb8] sm:$0xff]
      %v1026 = vld [vmem:[%s4 + $0xec0] sm:$0xff]
      %v1027 = vld [vmem:[%s4 + $0xec8] sm:$0xff]
      %v1028 = vld [vmem:[%s4 + $0xed0] sm:$0xff]
      %v1029 = vld [vmem:[%s4 + $0xed8] sm:$0xff]
      %v1030 = vld [vmem:[%s4 + $0xee0] sm:$0xff]
      %v1031 = vld [vmem:[%s4 + $0xee8] sm:$0xff]
      %v1032 = vld [vmem:[%s4 + $0xef0] sm:$0xff]
      %v1033 = vld [vmem:[%s4 + $0xef8] sm:$0xff]
      %v1034 = vld [vmem:[%s4 + $0xf00] sm:$0xff]
      %v1035 = vld [vmem:[%s4 + $0xf08] sm:$0xff]
      %v1036 = vld [vmem:[%s4 + $0xf10] sm:$0xff]
      %v1037 = vld [vmem:[%s4 + $0xf18] sm:$0xff]
      %v1038 = vld [vmem:[%s4 + $0xf20] sm:$0xff]
      %v1039 = vld [vmem:[%s4 + $0xf28] sm:$0xff]
      %v1040 = vld [vmem:[%s4 + $0xf30] sm:$0xff]
      %v1041 = vld [vmem:[%s4 + $0xf38] sm:$0xff]
      %v1042 = vld [vmem:[%s4 + $0xf40] sm:$0xff]
      %v1043 = vld [vmem:[%s4 + $0xf48] sm:$0xff]
      %v1044 = vld [vmem:[%s4 + $0xf50] sm:$0xff]
      %v1045 = vld [vmem:[%s4 + $0xf58] sm:$0xff]
      %v1046 = vld [vmem:[%s4 + $0xf60] sm:$0xff]
      %v1047 = vld [vmem:[%s4 + $0xf68] sm:$0xff]
      %v1048 = vld [vmem:[%s4 + $0xf70] sm:$0xff]
      %v1049 = vld [vmem:[%s4 + $0xf78] sm:$0xff]
      %v1050 = vld [vmem:[%s4 + $0xf80] sm:$0xff]
      %v1051 = vld [vmem:[%s4 + $0xf88] sm:$0xff]
      %v1052 = vld [vmem:[%s4 + $0xf90] sm:$0xff]
      %v1053 = vld [vmem:[%s4 + $0xf98] sm:$0xff]
      %v1054 = vld [vmem:[%s4 + $0xfa0] sm:$0xff]
      %v1055 = vld [vmem:[%s4 + $0xfa8] sm:$0xff]
      %v1056 = vld [vmem:[%s4 + $0xfb0] sm:$0xff]
      %v1057 = vld [vmem:[%s4 + $0xfb8] sm:$0xff]
      %v1058 = vld [vmem:[%s4 + $0xfc0] sm:$0xff]
      %v1059 = vld [vmem:[%s4 + $0xfc8] sm:$0xff]
      %v1060 = vld [vmem:[%s4 + $0xfd0] sm:$0xff]
      %v1061 = vld [vmem:[%s4 + $0xfd8] sm:$0xff]
      %v1062 = vld [vmem:[%s4 + $0xfe0] sm:$0xff]
      %v1063 = vld [vmem:[%s4 + $0xfe8] sm:$0xff]
      %v1064 = vld [vmem:[%s4 + $0xff0] sm:$0xff]
      %v1065 = vld [vmem:[%s4 + $0xff8] sm:$0xff]
      %v1578 = vunpack.c.l.b16 %v554
      %v1579 = vunpack.c.h.b16 %v554
      %v1580 = vunpack.c.l.b16 %v555
      %v1581 = vunpack.c.h.b16 %v555
      %v1582 = vunpack.c.l.b16 %v556
      %v1583 = vunpack.c.h.b16 %v556
      %v1584 = vunpack.c.l.b16 %v557
      %v1585 = vunpack.c.h.b16 %v557
      %v1586 = vunpack.c.l.b16 %v558
      %v1587 = vunpack.c.h.b16 %v558
      %v1588 = vunpack.c.l.b16 %v559
      %v1589 = vunpack.c.h.b16 %v559
      %v1590 = vunpack.c.l.b16 %v560
      %v1591 = vunpack.c.h.b16 %v560
      %v1592 = vunpack.c.l.b16 %v561
      %v1593 = vunpack.c.h.b16 %v561
      %v1594 = vunpack.c.l.b16 %v562
      %v1595 = vunpack.c.h.b16 %v562
      %v1596 = vunpack.c.l.b16 %v563
      %v1597 = vunpack.c.h.b16 %v563
      %v1598 = vunpack.c.l.b16 %v564
      %v1599 = vunpack.c.h.b16 %v564
      %v1600 = vunpack.c.l.b16 %v565
      %v1601 = vunpack.c.h.b16 %v565
      %v1602 = vunpack.c.l.b16 %v566
      %v1603 = vunpack.c.h.b16 %v566
      %v1604 = vunpack.c.l.b16 %v567
      %v1605 = vunpack.c.h.b16 %v567
      %v1606 = vunpack.c.l.b16 %v568
      %v1607 = vunpack.c.h.b16 %v568
      %v1608 = vunpack.c.l.b16 %v569
      %v1609 = vunpack.c.h.b16 %v569
      %v1610 = vunpack.c.l.b16 %v570
      %v1611 = vunpack.c.h.b16 %v570
      %v1612 = vunpack.c.l.b16 %v571
      %v1613 = vunpack.c.h.b16 %v571
      %v1614 = vunpack.c.l.b16 %v572
      %v1615 = vunpack.c.h.b16 %v572
      %v1616 = vunpack.c.l.b16 %v573
      %v1617 = vunpack.c.h.b16 %v573
      %v1618 = vunpack.c.l.b16 %v574
      %v1619 = vunpack.c.h.b16 %v574
      %v1620 = vunpack.c.l.b16 %v575
      %v1621 = vunpack.c.h.b16 %v575
      %v1622 = vunpack.c.l.b16 %v576
      %v1623 = vunpack.c.h.b16 %v576
      %v1624 = vunpack.c.l.b16 %v577
      %v1625 = vunpack.c.h.b16 %v577
      %v1626 = vunpack.c.l.b16 %v578
      %v1627 = vunpack.c.h.b16 %v578
      %v1628 = vunpack.c.l.b16 %v579
      %v1629 = vunpack.c.h.b16 %v579
      %v1630 = vunpack.c.l.b16 %v580
      %v1631 = vunpack.c.h.b16 %v580
      %v1632 = vunpack.c.l.b16 %v581
      %v1633 = vunpack.c.h.b16 %v581
      %v1634 = vunpack.c.l.b16 %v582
      %v1635 = vunpack.c.h.b16 %v582
      %v1636 = vunpack.c.l.b16 %v583
      %v1637 = vunpack.c.h.b16 %v583
      %v1638 = vunpack.c.l.b16 %v584
      %v1639 = vunpack.c.h.b16 %v584
      %v1640 = vunpack.c.l.b16 %v585
      %v1641 = vunpack.c.h.b16 %v585
      %v1642 = vunpack.c.l.b16 %v586
      %v1643 = vunpack.c.h.b16 %v586
      %v1644 = vunpack.c.l.b16 %v587
      %v1645 = vunpack.c.h.b16 %v587
      %v1646 = vunpack.c.l.b16 %v588
      %v1647 = vunpack.c.h.b16 %v588
      %v1648 = vunpack.c.l.b16 %v589
      %v1649 = vunpack.c.h.b16 %v589
      %v1650 = vunpack.c.l.b16 %v590
      %v1651 = vunpack.c.h.b16 %v590
      %v1652 = vunpack.c.l.b16 %v591
      %v1653 = vunpack.c.h.b16 %v591
      %v1654 = vunpack.c.l.b16 %v592
      %v1655 = vunpack.c.h.b16 %v592
      %v1656 = vunpack.c.l.b16 %v593
      %v1657 = vunpack.c.h.b16 %v593
      %v1658 = vunpack.c.l.b16 %v594
      %v1659 = vunpack.c.h.b16 %v594
      %v1660 = vunpack.c.l.b16 %v595
      %v1661 = vunpack.c.h.b16 %v595
      %v1662 = vunpack.c.l.b16 %v596
      %v1663 = vunpack.c.h.b16 %v596
      %v1664 = vunpack.c.l.b16 %v597
      %v1665 = vunpack.c.h.b16 %v597
      %v1666 = vunpack.c.l.b16 %v598
      %v1667 = vunpack.c.h.b16 %v598
      %v1668 = vunpack.c.l.b16 %v599
      %v1669 = vunpack.c.h.b16 %v599
      %v1670 = vunpack.c.l.b16 %v600
      %v1671 = vunpack.c.h.b16 %v600
      %v1672 = vunpack.c.l.b16 %v601
      %v1673 = vunpack.c.h.b16 %v601
      %v1674 = vunpack.c.l.b16 %v602
      %v1675 = vunpack.c.h.b16 %v602
      %v1676 = vunpack.c.l.b16 %v603
      %v1677 = vunpack.c.h.b16 %v603
      %v1678 = vunpack.c.l.b16 %v604
      %v1679 = vunpack.c.h.b16 %v604
      %v1680 = vunpack.c.l.b16 %v605
      %v1681 = vunpack.c.h.b16 %v605
      %v1682 = vunpack.c.l.b16 %v606
      %v1683 = vunpack.c.h.b16 %v606
      %v1684 = vunpack.c.l.b16 %v607
      %v1685 = vunpack.c.h.b16 %v607
      %v1686 = vunpack.c.l.b16 %v608
      %v1687 = vunpack.c.h.b16 %v608
      %v1688 = vunpack.c.l.b16 %v609
      %v1689 = vunpack.c.h.b16 %v609
      %v1690 = vunpack.c.l.b16 %v610
      %v1691 = vunpack.c.h.b16 %v610
      %v1692 = vunpack.c.l.b16 %v611
      %v1693 = vunpack.c.h.b16 %v611
      %v1694 = vunpack.c.l.b16 %v612
      %v1695 = vunpack.c.h.b16 %v612
      %v1696 = vunpack.c.l.b16 %v613
      %v1697 = vunpack.c.h.b16 %v613
      %v1698 = vunpack.c.l.b16 %v614
      %v1699 = vunpack.c.h.b16 %v614
      %v1700 = vunpack.c.l.b16 %v615
      %v1701 = vunpack.c.h.b16 %v615
      %v1702 = vunpack.c.l.b16 %v616
      %v1703 = vunpack.c.h.b16 %v616
      %v1704 = vunpack.c.l.b16 %v617
      %v1705 = vunpack.c.h.b16 %v617
      %v1706 = vunpack.c.l.b16 %v618
      %v1707 = vunpack.c.h.b16 %v618
      %v1708 = vunpack.c.l.b16 %v619
      %v1709 = vunpack.c.h.b16 %v619
      %v1710 = vunpack.c.l.b16 %v620
      %v1711 = vunpack.c.h.b16 %v620
      %v1712 = vunpack.c.l.b16 %v621
      %v1713 = vunpack.c.h.b16 %v621
      %v1714 = vunpack.c.l.b16 %v622
      %v1715 = vunpack.c.h.b16 %v622
      %v1716 = vunpack.c.l.b16 %v623
      %v1717 = vunpack.c.h.b16 %v623
      %v1718 = vunpack.c.l.b16 %v624
      %v1719 = vunpack.c.h.b16 %v624
      %v1720 = vunpack.c.l.b16 %v625
      %v1721 = vunpack.c.h.b16 %v625
      %v1722 = vunpack.c.l.b16 %v626
      %v1723 = vunpack.c.h.b16 %v626
      %v1724 = vunpack.c.l.b16 %v627
      %v1725 = vunpack.c.h.b16 %v627
      %v1726 = vunpack.c.l.b16 %v628
      %v1727 = vunpack.c.h.b16 %v628
      %v1728 = vunpack.c.l.b16 %v629
      %v1729 = vunpack.c.h.b16 %v629
      %v1730 = vunpack.c.l.b16 %v630
      %v1731 = vunpack.c.h.b16 %v630
      %v1732 = vunpack.c.l.b16 %v631
      %v1733 = vunpack.c.h.b16 %v631
      %v1734 = vunpack.c.l.b16 %v632
      %v1735 = vunpack.c.h.b16 %v632
      %v1736 = vunpack.c.l.b16 %v633
      %v1737 = vunpack.c.h.b16 %v633
      %v1738 = vunpack.c.l.b16 %v634
      %v1739 = vunpack.c.h.b16 %v634
      %v1740 = vunpack.c.l.b16 %v635
      %v1741 = vunpack.c.h.b16 %v635
      %v1742 = vunpack.c.l.b16 %v636
      %v1743 = vunpack.c.h.b16 %v636
      %v1744 = vunpack.c.l.b16 %v637
      %v1745 = vunpack.c.h.b16 %v637
      %v1746 = vunpack.c.l.b16 %v638
      %v1747 = vunpack.c.h.b16 %v638
      %v1748 = vunpack.c.l.b16 %v639
      %v1749 = vunpack.c.h.b16 %v639
      %v1750 = vunpack.c.l.b16 %v640
      %v1751 = vunpack.c.h.b16 %v640
      %v1752 = vunpack.c.l.b16 %v641
      %v1753 = vunpack.c.h.b16 %v641
      %v1754 = vunpack.c.l.b16 %v642
      %v1755 = vunpack.c.h.b16 %v642
      %v1756 = vunpack.c.l.b16 %v643
      %v1757 = vunpack.c.h.b16 %v643
      %v1758 = vunpack.c.l.b16 %v644
      %v1759 = vunpack.c.h.b16 %v644
      %v1760 = vunpack.c.l.b16 %v645
      %v1761 = vunpack.c.h.b16 %v645
      %v1762 = vunpack.c.l.b16 %v646
      %v1763 = vunpack.c.h.b16 %v646
      %v1764 = vunpack.c.l.b16 %v647
      %v1765 = vunpack.c.h.b16 %v647
      %v1766 = vunpack.c.l.b16 %v648
      %v1767 = vunpack.c.h.b16 %v648
      %v1768 = vunpack.c.l.b16 %v649
      %v1769 = vunpack.c.h.b16 %v649
      %v1770 = vunpack.c.l.b16 %v650
      %v1771 = vunpack.c.h.b16 %v650
      %v1772 = vunpack.c.l.b16 %v651
      %v1773 = vunpack.c.h.b16 %v651
      %v1774 = vunpack.c.l.b16 %v652
      %v1775 = vunpack.c.h.b16 %v652
      %v1776 = vunpack.c.l.b16 %v653
      %v1777 = vunpack.c.h.b16 %v653
      %v1778 = vunpack.c.l.b16 %v654
      %v1779 = vunpack.c.h.b16 %v654
      %v1780 = vunpack.c.l.b16 %v655
      %v1781 = vunpack.c.h.b16 %v655
      %v1782 = vunpack.c.l.b16 %v656
      %v1783 = vunpack.c.h.b16 %v656
      %v1784 = vunpack.c.l.b16 %v657
      %v1785 = vunpack.c.h.b16 %v657
      %v1786 = vunpack.c.l.b16 %v658
      %v1787 = vunpack.c.h.b16 %v658
      %v1788 = vunpack.c.l.b16 %v659
      %v1789 = vunpack.c.h.b16 %v659
      %v1790 = vunpack.c.l.b16 %v660
      %v1791 = vunpack.c.h.b16 %v660
      %v1792 = vunpack.c.l.b16 %v661
      %v1793 = vunpack.c.h.b16 %v661
      %v1794 = vunpack.c.l.b16 %v662
      %v1795 = vunpack.c.h.b16 %v662
      %v1796 = vunpack.c.l.b16 %v663
      %v1797 = vunpack.c.h.b16 %v663
      %v1798 = vunpack.c.l.b16 %v664
      %v1799 = vunpack.c.h.b16 %v664
      %v1800 = vunpack.c.l.b16 %v665
      %v1801 = vunpack.c.h.b16 %v665
      %v1802 = vunpack.c.l.b16 %v666
      %v1803 = vunpack.c.h.b16 %v666
      %v1804 = vunpack.c.l.b16 %v667
      %v1805 = vunpack.c.h.b16 %v667
      %v1806 = vunpack.c.l.b16 %v668
      %v1807 = vunpack.c.h.b16 %v668
      %v1808 = vunpack.c.l.b16 %v669
      %v1809 = vunpack.c.h.b16 %v669
      %v1810 = vunpack.c.l.b16 %v670
      %v1811 = vunpack.c.h.b16 %v670
      %v1812 = vunpack.c.l.b16 %v671
      %v1813 = vunpack.c.h.b16 %v671
      %v1814 = vunpack.c.l.b16 %v672
      %v1815 = vunpack.c.h.b16 %v672
      %v1816 = vunpack.c.l.b16 %v673
      %v1817 = vunpack.c.h.b16 %v673
      %v1818 = vunpack.c.l.b16 %v674
      %v1819 = vunpack.c.h.b16 %v674
      %v1820 = vunpack.c.l.b16 %v675
      %v1821 = vunpack.c.h.b16 %v675
      %v1822 = vunpack.c.l.b16 %v676
      %v1823 = vunpack.c.h.b16 %v676
      %v1824 = vunpack.c.l.b16 %v677
      %v1825 = vunpack.c.h.b16 %v677
      %v1826 = vunpack.c.l.b16 %v678
      %v1827 = vunpack.c.h.b16 %v678
      %v1828 = vunpack.c.l.b16 %v679
      %v1829 = vunpack.c.h.b16 %v679
      %v1830 = vunpack.c.l.b16 %v680
      %v1831 = vunpack.c.h.b16 %v680
      %v1832 = vunpack.c.l.b16 %v681
      %v1833 = vunpack.c.h.b16 %v681
      %v1834 = vunpack.c.l.b16 %v682
      %v1835 = vunpack.c.h.b16 %v682
      %v1836 = vunpack.c.l.b16 %v683
      %v1837 = vunpack.c.h.b16 %v683
      %v1838 = vunpack.c.l.b16 %v684
      %v1839 = vunpack.c.h.b16 %v684
      %v1840 = vunpack.c.l.b16 %v685
      %v1841 = vunpack.c.h.b16 %v685
      %v1842 = vunpack.c.l.b16 %v686
      %v1843 = vunpack.c.h.b16 %v686
      %v1844 = vunpack.c.l.b16 %v687
      %v1845 = vunpack.c.h.b16 %v687
      %v1846 = vunpack.c.l.b16 %v688
      %v1847 = vunpack.c.h.b16 %v688
      %v1848 = vunpack.c.l.b16 %v689
      %v1849 = vunpack.c.h.b16 %v689
      %v1850 = vunpack.c.l.b16 %v690
      %v1851 = vunpack.c.h.b16 %v690
      %v1852 = vunpack.c.l.b16 %v691
      %v1853 = vunpack.c.h.b16 %v691
      %v1854 = vunpack.c.l.b16 %v692
      %v1855 = vunpack.c.h.b16 %v692
      %v1856 = vunpack.c.l.b16 %v693
      %v1857 = vunpack.c.h.b16 %v693
      %v1858 = vunpack.c.l.b16 %v694
      %v1859 = vunpack.c.h.b16 %v694
      %v1860 = vunpack.c.l.b16 %v695
      %v1861 = vunpack.c.h.b16 %v695
      %v1862 = vunpack.c.l.b16 %v696
      %v1863 = vunpack.c.h.b16 %v696
      %v1864 = vunpack.c.l.b16 %v697
      %v1865 = vunpack.c.h.b16 %v697
      %v1866 = vunpack.c.l.b16 %v698
      %v1867 = vunpack.c.h.b16 %v698
      %v1868 = vunpack.c.l.b16 %v699
      %v1869 = vunpack.c.h.b16 %v699
      %v1870 = vunpack.c.l.b16 %v700
      %v1871 = vunpack.c.h.b16 %v700
      %v1872 = vunpack.c.l.b16 %v701
      %v1873 = vunpack.c.h.b16 %v701
      %v1874 = vunpack.c.l.b16 %v702
      %v1875 = vunpack.c.h.b16 %v702
      %v1876 = vunpack.c.l.b16 %v703
      %v1877 = vunpack.c.h.b16 %v703
      %v1878 = vunpack.c.l.b16 %v704
      %v1879 = vunpack.c.h.b16 %v704
      %v1880 = vunpack.c.l.b16 %v705
      %v1881 = vunpack.c.h.b16 %v705
      %v1882 = vunpack.c.l.b16 %v706
      %v1883 = vunpack.c.h.b16 %v706
      %v1884 = vunpack.c.l.b16 %v707
      %v1885 = vunpack.c.h.b16 %v707
      %v1886 = vunpack.c.l.b16 %v708
      %v1887 = vunpack.c.h.b16 %v708
      %v1888 = vunpack.c.l.b16 %v709
      %v1889 = vunpack.c.h.b16 %v709
      %v1890 = vunpack.c.l.b16 %v710
      %v1891 = vunpack.c.h.b16 %v710
      %v1892 = vunpack.c.l.b16 %v711
      %v1893 = vunpack.c.h.b16 %v711
      %v1894 = vunpack.c.l.b16 %v712
      %v1895 = vunpack.c.h.b16 %v712
      %v1896 = vunpack.c.l.b16 %v713
      %v1897 = vunpack.c.h.b16 %v713
      %v1898 = vunpack.c.l.b16 %v714
      %v1899 = vunpack.c.h.b16 %v714
      %v1900 = vunpack.c.l.b16 %v715
      %v1901 = vunpack.c.h.b16 %v715
      %v1902 = vunpack.c.l.b16 %v716
      %v1903 = vunpack.c.h.b16 %v716
      %v1904 = vunpack.c.l.b16 %v717
      %v1905 = vunpack.c.h.b16 %v717
      %v1906 = vunpack.c.l.b16 %v718
      %v1907 = vunpack.c.h.b16 %v718
      %v1908 = vunpack.c.l.b16 %v719
      %v1909 = vunpack.c.h.b16 %v719
      %v1910 = vunpack.c.l.b16 %v720
      %v1911 = vunpack.c.h.b16 %v720
      %v1912 = vunpack.c.l.b16 %v721
      %v1913 = vunpack.c.h.b16 %v721
      %v1914 = vunpack.c.l.b16 %v722
      %v1915 = vunpack.c.h.b16 %v722
      %v1916 = vunpack.c.l.b16 %v723
      %v1917 = vunpack.c.h.b16 %v723
      %v1918 = vunpack.c.l.b16 %v724
      %v1919 = vunpack.c.h.b16 %v724
      %v1920 = vunpack.c.l.b16 %v725
      %v1921 = vunpack.c.h.b16 %v725
      %v1922 = vunpack.c.l.b16 %v726
      %v1923 = vunpack.c.h.b16 %v726
      %v1924 = vunpack.c.l.b16 %v727
      %v1925 = vunpack.c.h.b16 %v727
      %v1926 = vunpack.c.l.b16 %v728
      %v1927 = vunpack.c.h.b16 %v728
      %v1928 = vunpack.c.l.b16 %v729
      %v1929 = vunpack.c.h.b16 %v729
      %v1930 = vunpack.c.l.b16 %v730
      %v1931 = vunpack.c.h.b16 %v730
      %v1932 = vunpack.c.l.b16 %v731
      %v1933 = vunpack.c.h.b16 %v731
      %v1934 = vunpack.c.l.b16 %v732
      %v1935 = vunpack.c.h.b16 %v732
      %v1936 = vunpack.c.l.b16 %v733
      %v1937 = vunpack.c.h.b16 %v733
      %v1938 = vunpack.c.l.b16 %v734
      %v1939 = vunpack.c.h.b16 %v734
      %v1940 = vunpack.c.l.b16 %v735
      %v1941 = vunpack.c.h.b16 %v735
      %v1942 = vunpack.c.l.b16 %v736
      %v1943 = vunpack.c.h.b16 %v736
      %v1944 = vunpack.c.l.b16 %v737
      %v1945 = vunpack.c.h.b16 %v737
      %v1946 = vunpack.c.l.b16 %v738
      %v1947 = vunpack.c.h.b16 %v738
      %v1948 = vunpack.c.l.b16 %v739
      %v1949 = vunpack.c.h.b16 %v739
      %v1950 = vunpack.c.l.b16 %v740
      %v1951 = vunpack.c.h.b16 %v740
      %v1952 = vunpack.c.l.b16 %v741
      %v1953 = vunpack.c.h.b16 %v741
      %v1954 = vunpack.c.l.b16 %v742
      %v1955 = vunpack.c.h.b16 %v742
      %v1956 = vunpack.c.l.b16 %v743
      %v1957 = vunpack.c.h.b16 %v743
      %v1958 = vunpack.c.l.b16 %v744
      %v1959 = vunpack.c.h.b16 %v744
      %v1960 = vunpack.c.l.b16 %v745
      %v1961 = vunpack.c.h.b16 %v745
      %v1962 = vunpack.c.l.b16 %v746
      %v1963 = vunpack.c.h.b16 %v746
      %v1964 = vunpack.c.l.b16 %v747
      %v1965 = vunpack.c.h.b16 %v747
      %v1966 = vunpack.c.l.b16 %v748
      %v1967 = vunpack.c.h.b16 %v748
      %v1968 = vunpack.c.l.b16 %v749
      %v1969 = vunpack.c.h.b16 %v749
      %v1970 = vunpack.c.l.b16 %v750
      %v1971 = vunpack.c.h.b16 %v750
      %v1972 = vunpack.c.l.b16 %v751
      %v1973 = vunpack.c.h.b16 %v751
      %v1974 = vunpack.c.l.b16 %v752
      %v1975 = vunpack.c.h.b16 %v752
      %v1976 = vunpack.c.l.b16 %v753
      %v1977 = vunpack.c.h.b16 %v753
      %v1978 = vunpack.c.l.b16 %v754
      %v1979 = vunpack.c.h.b16 %v754
      %v1980 = vunpack.c.l.b16 %v755
      %v1981 = vunpack.c.h.b16 %v755
      %v1982 = vunpack.c.l.b16 %v756
      %v1983 = vunpack.c.h.b16 %v756
      %v1984 = vunpack.c.l.b16 %v757
      %v1985 = vunpack.c.h.b16 %v757
      %v1986 = vunpack.c.l.b16 %v758
      %v1987 = vunpack.c.h.b16 %v758
      %v1988 = vunpack.c.l.b16 %v759
      %v1989 = vunpack.c.h.b16 %v759
      %v1990 = vunpack.c.l.b16 %v760
      %v1991 = vunpack.c.h.b16 %v760
      %v1992 = vunpack.c.l.b16 %v761
      %v1993 = vunpack.c.h.b16 %v761
      %v1994 = vunpack.c.l.b16 %v762
      %v1995 = vunpack.c.h.b16 %v762
      %v1996 = vunpack.c.l.b16 %v763
      %v1997 = vunpack.c.h.b16 %v763
      %v1998 = vunpack.c.l.b16 %v764
      %v1999 = vunpack.c.h.b16 %v764
      %v2000 = vunpack.c.l.b16 %v765
      %v2001 = vunpack.c.h.b16 %v765
      %v2002 = vunpack.c.l.b16 %v766
      %v2003 = vunpack.c.h.b16 %v766
      %v2004 = vunpack.c.l.b16 %v767
      %v2005 = vunpack.c.h.b16 %v767
      %v2006 = vunpack.c.l.b16 %v768
      %v2007 = vunpack.c.h.b16 %v768
      %v2008 = vunpack.c.l.b16 %v769
      %v2009 = vunpack.c.h.b16 %v769
      %v2010 = vunpack.c.l.b16 %v770
      %v2011 = vunpack.c.h.b16 %v770
      %v2012 = vunpack.c.l.b16 %v771
      %v2013 = vunpack.c.h.b16 %v771
      %v2014 = vunpack.c.l.b16 %v772
      %v2015 = vunpack.c.h.b16 %v772
      %v2016 = vunpack.c.l.b16 %v773
      %v2017 = vunpack.c.h.b16 %v773
      %v2018 = vunpack.c.l.b16 %v774
      %v2019 = vunpack.c.h.b16 %v774
      %v2020 = vunpack.c.l.b16 %v775
      %v2021 = vunpack.c.h.b16 %v775
      %v2022 = vunpack.c.l.b16 %v776
      %v2023 = vunpack.c.h.b16 %v776
      %v2024 = vunpack.c.l.b16 %v777
      %v2025 = vunpack.c.h.b16 %v777
      %v2026 = vunpack.c.l.b16 %v778
      %v2027 = vunpack.c.h.b16 %v778
      %v2028 = vunpack.c.l.b16 %v779
      %v2029 = vunpack.c.h.b16 %v779
      %v2030 = vunpack.c.l.b16 %v780
      %v2031 = vunpack.c.h.b16 %v780
      %v2032 = vunpack.c.l.b16 %v781
      %v2033 = vunpack.c.h.b16 %v781
      %v2034 = vunpack.c.l.b16 %v782
      %v2035 = vunpack.c.h.b16 %v782
      %v2036 = vunpack.c.l.b16 %v783
      %v2037 = vunpack.c.h.b16 %v783
      %v2038 = vunpack.c.l.b16 %v784
      %v2039 = vunpack.c.h.b16 %v784
      %v2040 = vunpack.c.l.b16 %v785
      %v2041 = vunpack.c.h.b16 %v785
      %v2042 = vunpack.c.l.b16 %v786
      %v2043 = vunpack.c.h.b16 %v786
      %v2044 = vunpack.c.l.b16 %v787
      %v2045 = vunpack.c.h.b16 %v787
      %v2046 = vunpack.c.l.b16 %v788
      %v2047 = vunpack.c.h.b16 %v788
      %v2048 = vunpack.c.l.b16 %v789
      %v2049 = vunpack.c.h.b16 %v789
      %v2050 = vunpack.c.l.b16 %v790
      %v2051 = vunpack.c.h.b16 %v790
      %v2052 = vunpack.c.l.b16 %v791
      %v2053 = vunpack.c.h.b16 %v791
      %v2054 = vunpack.c.l.b16 %v792
      %v2055 = vunpack.c.h.b16 %v792
      %v2056 = vunpack.c.l.b16 %v793
      %v2057 = vunpack.c.h.b16 %v793
      %v2058 = vunpack.c.l.b16 %v794
      %v2059 = vunpack.c.h.b16 %v794
      %v2060 = vunpack.c.l.b16 %v795
      %v2061 = vunpack.c.h.b16 %v795
      %v2062 = vunpack.c.l.b16 %v796
      %v2063 = vunpack.c.h.b16 %v796
      %v2064 = vunpack.c.l.b16 %v797
      %v2065 = vunpack.c.h.b16 %v797
      %v2066 = vunpack.c.l.b16 %v798
      %v2067 = vunpack.c.h.b16 %v798
      %v2068 = vunpack.c.l.b16 %v799
      %v2069 = vunpack.c.h.b16 %v799
      %v2070 = vunpack.c.l.b16 %v800
      %v2071 = vunpack.c.h.b16 %v800
      %v2072 = vunpack.c.l.b16 %v801
      %v2073 = vunpack.c.h.b16 %v801
      %v2074 = vunpack.c.l.b16 %v802
      %v2075 = vunpack.c.h.b16 %v802
      %v2076 = vunpack.c.l.b16 %v803
      %v2077 = vunpack.c.h.b16 %v803
      %v2078 = vunpack.c.l.b16 %v804
      %v2079 = vunpack.c.h.b16 %v804
      %v2080 = vunpack.c.l.b16 %v805
      %v2081 = vunpack.c.h.b16 %v805
      %v2082 = vunpack.c.l.b16 %v806
      %v2083 = vunpack.c.h.b16 %v806
      %v2084 = vunpack.c.l.b16 %v807
      %v2085 = vunpack.c.h.b16 %v807
      %v2086 = vunpack.c.l.b16 %v808
      %v2087 = vunpack.c.h.b16 %v808
      %v2088 = vunpack.c.l.b16 %v809
      %v2089 = vunpack.c.h.b16 %v809
      %v2090 = vunpack.c.l.b16 %v810
      %v2091 = vunpack.c.h.b16 %v810
      %v2092 = vunpack.c.l.b16 %v811
      %v2093 = vunpack.c.h.b16 %v811
      %v2094 = vunpack.c.l.b16 %v812
      %v2095 = vunpack.c.h.b16 %v812
      %v2096 = vunpack.c.l.b16 %v813
      %v2097 = vunpack.c.h.b16 %v813
      %v2098 = vunpack.c.l.b16 %v814
      %v2099 = vunpack.c.h.b16 %v814
      %v2100 = vunpack.c.l.b16 %v815
      %v2101 = vunpack.c.h.b16 %v815
      %v2102 = vunpack.c.l.b16 %v816
      %v2103 = vunpack.c.h.b16 %v816
      %v2104 = vunpack.c.l.b16 %v817
      %v2105 = vunpack.c.h.b16 %v817
      %v2106 = vunpack.c.l.b16 %v818
      %v2107 = vunpack.c.h.b16 %v818
      %v2108 = vunpack.c.l.b16 %v819
      %v2109 = vunpack.c.h.b16 %v819
      %v2110 = vunpack.c.l.b16 %v820
      %v2111 = vunpack.c.h.b16 %v820
      %v2112 = vunpack.c.l.b16 %v821
      %v2113 = vunpack.c.h.b16 %v821
      %v2114 = vunpack.c.l.b16 %v822
      %v2115 = vunpack.c.h.b16 %v822
      %v2116 = vunpack.c.l.b16 %v823
      %v2117 = vunpack.c.h.b16 %v823
      %v2118 = vunpack.c.l.b16 %v824
      %v2119 = vunpack.c.h.b16 %v824
      %v2120 = vunpack.c.l.b16 %v825
      %v2121 = vunpack.c.h.b16 %v825
      %v2122 = vunpack.c.l.b16 %v826
      %v2123 = vunpack.c.h.b16 %v826
      %v2124 = vunpack.c.l.b16 %v827
      %v2125 = vunpack.c.h.b16 %v827
      %v2126 = vunpack.c.l.b16 %v828
      %v2127 = vunpack.c.h.b16 %v828
      %v2128 = vunpack.c.l.b16 %v829
      %v2129 = vunpack.c.h.b16 %v829
      %v2130 = vunpack.c.l.b16 %v830
      %v2131 = vunpack.c.h.b16 %v830
      %v2132 = vunpack.c.l.b16 %v831
      %v2133 = vunpack.c.h.b16 %v831
      %v2134 = vunpack.c.l.b16 %v832
      %v2135 = vunpack.c.h.b16 %v832
      %v2136 = vunpack.c.l.b16 %v833
      %v2137 = vunpack.c.h.b16 %v833
      %v2138 = vunpack.c.l.b16 %v834
      %v2139 = vunpack.c.h.b16 %v834
      %v2140 = vunpack.c.l.b16 %v835
      %v2141 = vunpack.c.h.b16 %v835
      %v2142 = vunpack.c.l.b16 %v836
      %v2143 = vunpack.c.h.b16 %v836
      %v2144 = vunpack.c.l.b16 %v837
      %v2145 = vunpack.c.h.b16 %v837
      %v2146 = vunpack.c.l.b16 %v838
      %v2147 = vunpack.c.h.b16 %v838
      %v2148 = vunpack.c.l.b16 %v839
      %v2149 = vunpack.c.h.b16 %v839
      %v2150 = vunpack.c.l.b16 %v840
      %v2151 = vunpack.c.h.b16 %v840
      %v2152 = vunpack.c.l.b16 %v841
      %v2153 = vunpack.c.h.b16 %v841
      %v2154 = vunpack.c.l.b16 %v842
      %v2155 = vunpack.c.h.b16 %v842
      %v2156 = vunpack.c.l.b16 %v843
      %v2157 = vunpack.c.h.b16 %v843
      %v2158 = vunpack.c.l.b16 %v844
      %v2159 = vunpack.c.h.b16 %v844
      %v2160 = vunpack.c.l.b16 %v845
      %v2161 = vunpack.c.h.b16 %v845
      %v2162 = vunpack.c.l.b16 %v846
      %v2163 = vunpack.c.h.b16 %v846
      %v2164 = vunpack.c.l.b16 %v847
      %v2165 = vunpack.c.h.b16 %v847
      %v2166 = vunpack.c.l.b16 %v848
      %v2167 = vunpack.c.h.b16 %v848
      %v2168 = vunpack.c.l.b16 %v849
      %v2169 = vunpack.c.h.b16 %v849
      %v2170 = vunpack.c.l.b16 %v850
      %v2171 = vunpack.c.h.b16 %v850
      %v2172 = vunpack.c.l.b16 %v851
      %v2173 = vunpack.c.h.b16 %v851
      %v2174 = vunpack.c.l.b16 %v852
      %v2175 = vunpack.c.h.b16 %v852
      %v2176 = vunpack.c.l.b16 %v853
      %v2177 = vunpack.c.h.b16 %v853
      %v2178 = vunpack.c.l.b16 %v854
      %v2179 = vunpack.c.h.b16 %v854
      %v2180 = vunpack.c.l.b16 %v855
      %v2181 = vunpack.c.h.b16 %v855
      %v2182 = vunpack.c.l.b16 %v856
      %v2183 = vunpack.c.h.b16 %v856
      %v2184 = vunpack.c.l.b16 %v857
      %v2185 = vunpack.c.h.b16 %v857
      %v2186 = vunpack.c.l.b16 %v858
      %v2187 = vunpack.c.h.b16 %v858
      %v2188 = vunpack.c.l.b16 %v859
      %v2189 = vunpack.c.h.b16 %v859
      %v2190 = vunpack.c.l.b16 %v860
      %v2191 = vunpack.c.h.b16 %v860
      %v2192 = vunpack.c.l.b16 %v861
      %v2193 = vunpack.c.h.b16 %v861
      %v2194 = vunpack.c.l.b16 %v862
      %v2195 = vunpack.c.h.b16 %v862
      %v2196 = vunpack.c.l.b16 %v863
      %v2197 = vunpack.c.h.b16 %v863
      %v2198 = vunpack.c.l.b16 %v864
      %v2199 = vunpack.c.h.b16 %v864
      %v2200 = vunpack.c.l.b16 %v865
      %v2201 = vunpack.c.h.b16 %v865
      %v2202 = vunpack.c.l.b16 %v866
      %v2203 = vunpack.c.h.b16 %v866
      %v2204 = vunpack.c.l.b16 %v867
      %v2205 = vunpack.c.h.b16 %v867
      %v2206 = vunpack.c.l.b16 %v868
      %v2207 = vunpack.c.h.b16 %v868
      %v2208 = vunpack.c.l.b16 %v869
      %v2209 = vunpack.c.h.b16 %v869
      %v2210 = vunpack.c.l.b16 %v870
      %v2211 = vunpack.c.h.b16 %v870
      %v2212 = vunpack.c.l.b16 %v871
      %v2213 = vunpack.c.h.b16 %v871
      %v2214 = vunpack.c.l.b16 %v872
      %v2215 = vunpack.c.h.b16 %v872
      %v2216 = vunpack.c.l.b16 %v873
      %v2217 = vunpack.c.h.b16 %v873
      %v2218 = vunpack.c.l.b16 %v874
      %v2219 = vunpack.c.h.b16 %v874
      %v2220 = vunpack.c.l.b16 %v875
      %v2221 = vunpack.c.h.b16 %v875
      %v2222 = vunpack.c.l.b16 %v876
      %v2223 = vunpack.c.h.b16 %v876
      %v2224 = vunpack.c.l.b16 %v877
      %v2225 = vunpack.c.h.b16 %v877
      %v2226 = vunpack.c.l.b16 %v878
      %v2227 = vunpack.c.h.b16 %v878
      %v2228 = vunpack.c.l.b16 %v879
      %v2229 = vunpack.c.h.b16 %v879
      %v2230 = vunpack.c.l.b16 %v880
      %v2231 = vunpack.c.h.b16 %v880
      %v2232 = vunpack.c.l.b16 %v881
      %v2233 = vunpack.c.h.b16 %v881
      %v2234 = vunpack.c.l.b16 %v882
      %v2235 = vunpack.c.h.b16 %v882
      %v2236 = vunpack.c.l.b16 %v883
      %v2237 = vunpack.c.h.b16 %v883
      %v2238 = vunpack.c.l.b16 %v884
      %v2239 = vunpack.c.h.b16 %v884
      %v2240 = vunpack.c.l.b16 %v885
      %v2241 = vunpack.c.h.b16 %v885
      %v2242 = vunpack.c.l.b16 %v886
      %v2243 = vunpack.c.h.b16 %v886
      %v2244 = vunpack.c.l.b16 %v887
      %v2245 = vunpack.c.h.b16 %v887
      %v2246 = vunpack.c.l.b16 %v888
      %v2247 = vunpack.c.h.b16 %v888
      %v2248 = vunpack.c.l.b16 %v889
      %v2249 = vunpack.c.h.b16 %v889
      %v2250 = vunpack.c.l.b16 %v890
      %v2251 = vunpack.c.h.b16 %v890
      %v2252 = vunpack.c.l.b16 %v891
      %v2253 = vunpack.c.h.b16 %v891
      %v2254 = vunpack.c.l.b16 %v892
      %v2255 = vunpack.c.h.b16 %v892
      %v2256 = vunpack.c.l.b16 %v893
      %v2257 = vunpack.c.h.b16 %v893
      %v2258 = vunpack.c.l.b16 %v894
      %v2259 = vunpack.c.h.b16 %v894
      %v2260 = vunpack.c.l.b16 %v895
      %v2261 = vunpack.c.h.b16 %v895
      %v2262 = vunpack.c.l.b16 %v896
      %v2263 = vunpack.c.h.b16 %v896
      %v2264 = vunpack.c.l.b16 %v897
      %v2265 = vunpack.c.h.b16 %v897
      %v2266 = vunpack.c.l.b16 %v898
      %v2267 = vunpack.c.h.b16 %v898
      %v2268 = vunpack.c.l.b16 %v899
      %v2269 = vunpack.c.h.b16 %v899
      %v2270 = vunpack.c.l.b16 %v900
      %v2271 = vunpack.c.h.b16 %v900
      %v2272 = vunpack.c.l.b16 %v901
      %v2273 = vunpack.c.h.b16 %v901
      %v2274 = vunpack.c.l.b16 %v902
      %v2275 = vunpack.c.h.b16 %v902
      %v2276 = vunpack.c.l.b16 %v903
      %v2277 = vunpack.c.h.b16 %v903
      %v2278 = vunpack.c.l.b16 %v904
      %v2279 = vunpack.c.h.b16 %v904
      %v2280 = vunpack.c.l.b16 %v905
      %v2281 = vunpack.c.h.b16 %v905
      %v2282 = vunpack.c.l.b16 %v906
      %v2283 = vunpack.c.h.b16 %v906
      %v2284 = vunpack.c.l.b16 %v907
      %v2285 = vunpack.c.h.b16 %v907
      %v2286 = vunpack.c.l.b16 %v908
      %v2287 = vunpack.c.h.b16 %v908
      %v2288 = vunpack.c.l.b16 %v909
      %v2289 = vunpack.c.h.b16 %v909
      %v2290 = vunpack.c.l.b16 %v910
      %v2291 = vunpack.c.h.b16 %v910
      %v2292 = vunpack.c.l.b16 %v911
      %v2293 = vunpack.c.h.b16 %v911
      %v2294 = vunpack.c.l.b16 %v912
      %v2295 = vunpack.c.h.b16 %v912
      %v2296 = vunpack.c.l.b16 %v913
      %v2297 = vunpack.c.h.b16 %v913
      %v2298 = vunpack.c.l.b16 %v914
      %v2299 = vunpack.c.h.b16 %v914
      %v2300 = vunpack.c.l.b16 %v915
      %v2301 = vunpack.c.h.b16 %v915
      %v2302 = vunpack.c.l.b16 %v916
      %v2303 = vunpack.c.h.b16 %v916
      %v2304 = vunpack.c.l.b16 %v917
      %v2305 = vunpack.c.h.b16 %v917
      %v2306 = vunpack.c.l.b16 %v918
      %v2307 = vunpack.c.h.b16 %v918
      %v2308 = vunpack.c.l.b16 %v919
      %v2309 = vunpack.c.h.b16 %v919
      %v2310 = vunpack.c.l.b16 %v920
      %v2311 = vunpack.c.h.b16 %v920
      %v2312 = vunpack.c.l.b16 %v921
      %v2313 = vunpack.c.h.b16 %v921
      %v2314 = vunpack.c.l.b16 %v922
      %v2315 = vunpack.c.h.b16 %v922
      %v2316 = vunpack.c.l.b16 %v923
      %v2317 = vunpack.c.h.b16 %v923
      %v2318 = vunpack.c.l.b16 %v924
      %v2319 = vunpack.c.h.b16 %v924
      %v2320 = vunpack.c.l.b16 %v925
      %v2321 = vunpack.c.h.b16 %v925
      %v2322 = vunpack.c.l.b16 %v926
      %v2323 = vunpack.c.h.b16 %v926
      %v2324 = vunpack.c.l.b16 %v927
      %v2325 = vunpack.c.h.b16 %v927
      %v2326 = vunpack.c.l.b16 %v928
      %v2327 = vunpack.c.h.b16 %v928
      %v2328 = vunpack.c.l.b16 %v929
      %v2329 = vunpack.c.h.b16 %v929
      %v2330 = vunpack.c.l.b16 %v930
      %v2331 = vunpack.c.h.b16 %v930
      %v2332 = vunpack.c.l.b16 %v931
      %v2333 = vunpack.c.h.b16 %v931
      %v2334 = vunpack.c.l.b16 %v932
      %v2335 = vunpack.c.h.b16 %v932
      %v2336 = vunpack.c.l.b16 %v933
      %v2337 = vunpack.c.h.b16 %v933
      %v2338 = vunpack.c.l.b16 %v934
      %v2339 = vunpack.c.h.b16 %v934
      %v2340 = vunpack.c.l.b16 %v935
      %v2341 = vunpack.c.h.b16 %v935
      %v2342 = vunpack.c.l.b16 %v936
      %v2343 = vunpack.c.h.b16 %v936
      %v2344 = vunpack.c.l.b16 %v937
      %v2345 = vunpack.c.h.b16 %v937
      %v2346 = vunpack.c.l.b16 %v938
      %v2347 = vunpack.c.h.b16 %v938
      %v2348 = vunpack.c.l.b16 %v939
      %v2349 = vunpack.c.h.b16 %v939
      %v2350 = vunpack.c.l.b16 %v940
      %v2351 = vunpack.c.h.b16 %v940
      %v2352 = vunpack.c.l.b16 %v941
      %v2353 = vunpack.c.h.b16 %v941
      %v2354 = vunpack.c.l.b16 %v942
      %v2355 = vunpack.c.h.b16 %v942
      %v2356 = vunpack.c.l.b16 %v943
      %v2357 = vunpack.c.h.b16 %v943
      %v2358 = vunpack.c.l.b16 %v944
      %v2359 = vunpack.c.h.b16 %v944
      %v2360 = vunpack.c.l.b16 %v945
      %v2361 = vunpack.c.h.b16 %v945
      %v2362 = vunpack.c.l.b16 %v946
      %v2363 = vunpack.c.h.b16 %v946
      %v2364 = vunpack.c.l.b16 %v947
      %v2365 = vunpack.c.h.b16 %v947
      %v2366 = vunpack.c.l.b16 %v948
      %v2367 = vunpack.c.h.b16 %v948
      %v2368 = vunpack.c.l.b16 %v949
      %v2369 = vunpack.c.h.b16 %v949
      %v2370 = vunpack.c.l.b16 %v950
      %v2371 = vunpack.c.h.b16 %v950
      %v2372 = vunpack.c.l.b16 %v951
      %v2373 = vunpack.c.h.b16 %v951
      %v2374 = vunpack.c.l.b16 %v952
      %v2375 = vunpack.c.h.b16 %v952
      %v2376 = vunpack.c.l.b16 %v953
      %v2377 = vunpack.c.h.b16 %v953
      %v2378 = vunpack.c.l.b16 %v954
      %v2379 = vunpack.c.h.b16 %v954
      %v2380 = vunpack.c.l.b16 %v955
      %v2381 = vunpack.c.h.b16 %v955
      %v2382 = vunpack.c.l.b16 %v956
      %v2383 = vunpack.c.h.b16 %v956
      %v2384 = vunpack.c.l.b16 %v957
      %v2385 = vunpack.c.h.b16 %v957
      %v2386 = vunpack.c.l.b16 %v958
      %v2387 = vunpack.c.h.b16 %v958
      %v2388 = vunpack.c.l.b16 %v959
      %v2389 = vunpack.c.h.b16 %v959
      %v2390 = vunpack.c.l.b16 %v960
      %v2391 = vunpack.c.h.b16 %v960
      %v2392 = vunpack.c.l.b16 %v961
      %v2393 = vunpack.c.h.b16 %v961
      %v2394 = vunpack.c.l.b16 %v962
      %v2395 = vunpack.c.h.b16 %v962
      %v2396 = vunpack.c.l.b16 %v963
      %v2397 = vunpack.c.h.b16 %v963
      %v2398 = vunpack.c.l.b16 %v964
      %v2399 = vunpack.c.h.b16 %v964
      %v2400 = vunpack.c.l.b16 %v965
      %v2401 = vunpack.c.h.b16 %v965
      %v2402 = vunpack.c.l.b16 %v966
      %v2403 = vunpack.c.h.b16 %v966
      %v2404 = vunpack.c.l.b16 %v967
      %v2405 = vunpack.c.h.b16 %v967
      %v2406 = vunpack.c.l.b16 %v968
      %v2407 = vunpack.c.h.b16 %v968
      %v2408 = vunpack.c.l.b16 %v969
      %v2409 = vunpack.c.h.b16 %v969
      %v2410 = vunpack.c.l.b16 %v970
      %v2411 = vunpack.c.h.b16 %v970
      %v2412 = vunpack.c.l.b16 %v971
      %v2413 = vunpack.c.h.b16 %v971
      %v2414 = vunpack.c.l.b16 %v972
      %v2415 = vunpack.c.h.b16 %v972
      %v2416 = vunpack.c.l.b16 %v973
      %v2417 = vunpack.c.h.b16 %v973
      %v2418 = vunpack.c.l.b16 %v974
      %v2419 = vunpack.c.h.b16 %v974
      %v2420 = vunpack.c.l.b16 %v975
      %v2421 = vunpack.c.h.b16 %v975
      %v2422 = vunpack.c.l.b16 %v976
      %v2423 = vunpack.c.h.b16 %v976
      %v2424 = vunpack.c.l.b16 %v977
      %v2425 = vunpack.c.h.b16 %v977
      %v2426 = vunpack.c.l.b16 %v978
      %v2427 = vunpack.c.h.b16 %v978
      %v2428 = vunpack.c.l.b16 %v979
      %v2429 = vunpack.c.h.b16 %v979
      %v2430 = vunpack.c.l.b16 %v980
      %v2431 = vunpack.c.h.b16 %v980
      %v2432 = vunpack.c.l.b16 %v981
      %v2433 = vunpack.c.h.b16 %v981
      %v2434 = vunpack.c.l.b16 %v982
      %v2435 = vunpack.c.h.b16 %v982
      %v2436 = vunpack.c.l.b16 %v983
      %v2437 = vunpack.c.h.b16 %v983
      %v2438 = vunpack.c.l.b16 %v984
      %v2439 = vunpack.c.h.b16 %v984
      %v2440 = vunpack.c.l.b16 %v985
      %v2441 = vunpack.c.h.b16 %v985
      %v2442 = vunpack.c.l.b16 %v986
      %v2443 = vunpack.c.h.b16 %v986
      %v2444 = vunpack.c.l.b16 %v987
      %v2445 = vunpack.c.h.b16 %v987
      %v2446 = vunpack.c.l.b16 %v988
      %v2447 = vunpack.c.h.b16 %v988
      %v2448 = vunpack.c.l.b16 %v989
      %v2449 = vunpack.c.h.b16 %v989
      %v2450 = vunpack.c.l.b16 %v990
      %v2451 = vunpack.c.h.b16 %v990
      %v2452 = vunpack.c.l.b16 %v991
      %v2453 = vunpack.c.h.b16 %v991
      %v2454 = vunpack.c.l.b16 %v992
      %v2455 = vunpack.c.h.b16 %v992
      %v2456 = vunpack.c.l.b16 %v993
      %v2457 = vunpack.c.h.b16 %v993
      %v2458 = vunpack.c.l.b16 %v994
      %v2459 = vunpack.c.h.b16 %v994
      %v2460 = vunpack.c.l.b16 %v995
      %v2461 = vunpack.c.h.b16 %v995
      %v2462 = vunpack.c.l.b16 %v996
      %v2463 = vunpack.c.h.b16 %v996
      %v2464 = vunpack.c.l.b16 %v997
      %v2465 = vunpack.c.h.b16 %v997
      %v2466 = vunpack.c.l.b16 %v998
      %v2467 = vunpack.c.h.b16 %v998
      %v2468 = vunpack.c.l.b16 %v999
      %v2469 = vunpack.c.h.b16 %v999
      %v2470 = vunpack.c.l.b16 %v1000
      %v2471 = vunpack.c.h.b16 %v1000
      %v2472 = vunpack.c.l.b16 %v1001
      %v2473 = vunpack.c.h.b16 %v1001
      %v2474 = vunpack.c.l.b16 %v1002
      %v2475 = vunpack.c.h.b16 %v1002
      %v2476 = vunpack.c.l.b16 %v1003
      %v2477 = vunpack.c.h.b16 %v1003
      %v2478 = vunpack.c.l.b16 %v1004
      %v2479 = vunpack.c.h.b16 %v1004
      %v2480 = vunpack.c.l.b16 %v1005
      %v2481 = vunpack.c.h.b16 %v1005
      %v2482 = vunpack.c.l.b16 %v1006
      %v2483 = vunpack.c.h.b16 %v1006
      %v2484 = vunpack.c.l.b16 %v1007
      %v2485 = vunpack.c.h.b16 %v1007
      %v2486 = vunpack.c.l.b16 %v1008
      %v2487 = vunpack.c.h.b16 %v1008
      %v2488 = vunpack.c.l.b16 %v1009
      %v2489 = vunpack.c.h.b16 %v1009
      %v2490 = vunpack.c.l.b16 %v1010
      %v2491 = vunpack.c.h.b16 %v1010
      %v2492 = vunpack.c.l.b16 %v1011
      %v2493 = vunpack.c.h.b16 %v1011
      %v2494 = vunpack.c.l.b16 %v1012
      %v2495 = vunpack.c.h.b16 %v1012
      %v2496 = vunpack.c.l.b16 %v1013
      %v2497 = vunpack.c.h.b16 %v1013
      %v2498 = vunpack.c.l.b16 %v1014
      %v2499 = vunpack.c.h.b16 %v1014
      %v2500 = vunpack.c.l.b16 %v1015
      %v2501 = vunpack.c.h.b16 %v1015
      %v2502 = vunpack.c.l.b16 %v1016
      %v2503 = vunpack.c.h.b16 %v1016
      %v2504 = vunpack.c.l.b16 %v1017
      %v2505 = vunpack.c.h.b16 %v1017
      %v2506 = vunpack.c.l.b16 %v1018
      %v2507 = vunpack.c.h.b16 %v1018
      %v2508 = vunpack.c.l.b16 %v1019
      %v2509 = vunpack.c.h.b16 %v1019
      %v2510 = vunpack.c.l.b16 %v1020
      %v2511 = vunpack.c.h.b16 %v1020
      %v2512 = vunpack.c.l.b16 %v1021
      %v2513 = vunpack.c.h.b16 %v1021
      %v2514 = vunpack.c.l.b16 %v1022
      %v2515 = vunpack.c.h.b16 %v1022
      %v2516 = vunpack.c.l.b16 %v1023
      %v2517 = vunpack.c.h.b16 %v1023
      %v2518 = vunpack.c.l.b16 %v1024
      %v2519 = vunpack.c.h.b16 %v1024
      %v2520 = vunpack.c.l.b16 %v1025
      %v2521 = vunpack.c.h.b16 %v1025
      %v2522 = vunpack.c.l.b16 %v1026
      %v2523 = vunpack.c.h.b16 %v1026
      %v2524 = vunpack.c.l.b16 %v1027
      %v2525 = vunpack.c.h.b16 %v1027
      %v2526 = vunpack.c.l.b16 %v1028
      %v2527 = vunpack.c.h.b16 %v1028
      %v2528 = vunpack.c.l.b16 %v1029
      %v2529 = vunpack.c.h.b16 %v1029
      %v2530 = vunpack.c.l.b16 %v1030
      %v2531 = vunpack.c.h.b16 %v1030
      %v2532 = vunpack.c.l.b16 %v1031
      %v2533 = vunpack.c.h.b16 %v1031
      %v2534 = vunpack.c.l.b16 %v1032
      %v2535 = vunpack.c.h.b16 %v1032
      %v2536 = vunpack.c.l.b16 %v1033
      %v2537 = vunpack.c.h.b16 %v1033
      %v2538 = vunpack.c.l.b16 %v1034
      %v2539 = vunpack.c.h.b16 %v1034
      %v2540 = vunpack.c.l.b16 %v1035
      %v2541 = vunpack.c.h.b16 %v1035
      %v2542 = vunpack.c.l.b16 %v1036
      %v2543 = vunpack.c.h.b16 %v1036
      %v2544 = vunpack.c.l.b16 %v1037
      %v2545 = vunpack.c.h.b16 %v1037
      %v2546 = vunpack.c.l.b16 %v1038
      %v2547 = vunpack.c.h.b16 %v1038
      %v2548 = vunpack.c.l.b16 %v1039
      %v2549 = vunpack.c.h.b16 %v1039
      %v2550 = vunpack.c.l.b16 %v1040
      %v2551 = vunpack.c.h.b16 %v1040
      %v2552 = vunpack.c.l.b16 %v1041
      %v2553 = vunpack.c.h.b16 %v1041
      %v2554 = vunpack.c.l.b16 %v1042
      %v2555 = vunpack.c.h.b16 %v1042
      %v2556 = vunpack.c.l.b16 %v1043
      %v2557 = vunpack.c.h.b16 %v1043
      %v2558 = vunpack.c.l.b16 %v1044
      %v2559 = vunpack.c.h.b16 %v1044
      %v2560 = vunpack.c.l.b16 %v1045
      %v2561 = vunpack.c.h.b16 %v1045
      %v2562 = vunpack.c.l.b16 %v1046
      %v2563 = vunpack.c.h.b16 %v1046
      %v2564 = vunpack.c.l.b16 %v1047
      %v2565 = vunpack.c.h.b16 %v1047
      %v2566 = vunpack.c.l.b16 %v1048
      %v2567 = vunpack.c.h.b16 %v1048
      %v2568 = vunpack.c.l.b16 %v1049
      %v2569 = vunpack.c.h.b16 %v1049
      %v2570 = vunpack.c.l.b16 %v1050
      %v2571 = vunpack.c.h.b16 %v1050
      %v2572 = vunpack.c.l.b16 %v1051
      %v2573 = vunpack.c.h.b16 %v1051
      %v2574 = vunpack.c.l.b16 %v1052
      %v2575 = vunpack.c.h.b16 %v1052
      %v2576 = vunpack.c.l.b16 %v1053
      %v2577 = vunpack.c.h.b16 %v1053
      %v2578 = vunpack.c.l.b16 %v1054
      %v2579 = vunpack.c.h.b16 %v1054
      %v2580 = vunpack.c.l.b16 %v1055
      %v2581 = vunpack.c.h.b16 %v1055
      %v2582 = vunpack.c.l.b16 %v1056
      %v2583 = vunpack.c.h.b16 %v1056
      %v2584 = vunpack.c.l.b16 %v1057
      %v2585 = vunpack.c.h.b16 %v1057
      %v2586 = vunpack.c.l.b16 %v1058
      %v2587 = vunpack.c.h.b16 %v1058
      %v2588 = vunpack.c.l.b16 %v1059
      %v2589 = vunpack.c.h.b16 %v1059
      %v2590 = vunpack.c.l.b16 %v1060
      %v2591 = vunpack.c.h.b16 %v1060
      %v2592 = vunpack.c.l.b16 %v1061
      %v2593 = vunpack.c.h.b16 %v1061
      %v2594 = vunpack.c.l.b16 %v1062
      %v2595 = vunpack.c.h.b16 %v1062
      %v2596 = vunpack.c.l.b16 %v1063
      %v2597 = vunpack.c.h.b16 %v1063
      %v2598 = vunpack.c.l.b16 %v1064
      %v2599 = vunpack.c.h.b16 %v1064
      %v2600 = vunpack.c.l.b16 %v1065
      %v2601 = vunpack.c.h.b16 %v1065
      %v2602 = vpack.c.b16 %v1586, %v1578
      %v2603 = vpack.c.b16 %v1587, %v1579
      %v2604 = vpack.c.b16 %v1588, %v1580
      %v2605 = vpack.c.b16 %v1589, %v1581
      %v2606 = vpack.c.b16 %v1590, %v1582
      %v2607 = vpack.c.b16 %v1591, %v1583
      %v2608 = vpack.c.b16 %v1592, %v1584
      %v2609 = vpack.c.b16 %v1593, %v1585
      %v2610 = vpack.c.b16 %v1602, %v1594
      %v2611 = vpack.c.b16 %v1603, %v1595
      %v2612 = vpack.c.b16 %v1604, %v1596
      %v2613 = vpack.c.b16 %v1605, %v1597
      %v2614 = vpack.c.b16 %v1606, %v1598
      %v2615 = vpack.c.b16 %v1607, %v1599
      %v2616 = vpack.c.b16 %v1608, %v1600
      %v2617 = vpack.c.b16 %v1609, %v1601
      %v2618 = vpack.c.b16 %v1618, %v1610
      %v2619 = vpack.c.b16 %v1619, %v1611
      %v2620 = vpack.c.b16 %v1620, %v1612
      %v2621 = vpack.c.b16 %v1621, %v1613
      %v2622 = vpack.c.b16 %v1622, %v1614
      %v2623 = vpack.c.b16 %v1623, %v1615
      %v2624 = vpack.c.b16 %v1624, %v1616
      %v2625 = vpack.c.b16 %v1625, %v1617
      %v2626 = vpack.c.b16 %v1634, %v1626
      %v2627 = vpack.c.b16 %v1635, %v1627
      %v2628 = vpack.c.b16 %v1636, %v1628
      %v2629 = vpack.c.b16 %v1637, %v1629
      %v2630 = vpack.c.b16 %v1638, %v1630
      %v2631 = vpack.c.b16 %v1639, %v1631
      %v2632 = vpack.c.b16 %v1640, %v1632
      %v2633 = vpack.c.b16 %v1641, %v1633
      %v2634 = vpack.c.b16 %v1650, %v1642
      %v2635 = vpack.c.b16 %v1651, %v1643
      %v2636 = vpack.c.b16 %v1652, %v1644
      %v2637 = vpack.c.b16 %v1653, %v1645
      %v2638 = vpack.c.b16 %v1654, %v1646
      %v2639 = vpack.c.b16 %v1655, %v1647
      %v2640 = vpack.c.b16 %v1656, %v1648
      %v2641 = vpack.c.b16 %v1657, %v1649
      %v2642 = vpack.c.b16 %v1666, %v1658
      %v2643 = vpack.c.b16 %v1667, %v1659
      %v2644 = vpack.c.b16 %v1668, %v1660
      %v2645 = vpack.c.b16 %v1669, %v1661
      %v2646 = vpack.c.b16 %v1670, %v1662
      %v2647 = vpack.c.b16 %v1671, %v1663
      %v2648 = vpack.c.b16 %v1672, %v1664
      %v2649 = vpack.c.b16 %v1673, %v1665
      %v2650 = vpack.c.b16 %v1682, %v1674
      %v2651 = vpack.c.b16 %v1683, %v1675
      %v2652 = vpack.c.b16 %v1684, %v1676
      %v2653 = vpack.c.b16 %v1685, %v1677
      %v2654 = vpack.c.b16 %v1686, %v1678
      %v2655 = vpack.c.b16 %v1687, %v1679
      %v2656 = vpack.c.b16 %v1688, %v1680
      %v2657 = vpack.c.b16 %v1689, %v1681
      %v2658 = vpack.c.b16 %v1698, %v1690
      %v2659 = vpack.c.b16 %v1699, %v1691
      %v2660 = vpack.c.b16 %v1700, %v1692
      %v2661 = vpack.c.b16 %v1701, %v1693
      %v2662 = vpack.c.b16 %v1702, %v1694
      %v2663 = vpack.c.b16 %v1703, %v1695
      %v2664 = vpack.c.b16 %v1704, %v1696
      %v2665 = vpack.c.b16 %v1705, %v1697
      %v2666 = vpack.c.b16 %v1714, %v1706
      %v2667 = vpack.c.b16 %v1715, %v1707
      %v2668 = vpack.c.b16 %v1716, %v1708
      %v2669 = vpack.c.b16 %v1717, %v1709
      %v2670 = vpack.c.b16 %v1718, %v1710
      %v2671 = vpack.c.b16 %v1719, %v1711
      %v2672 = vpack.c.b16 %v1720, %v1712
      %v2673 = vpack.c.b16 %v1721, %v1713
      %v2674 = vpack.c.b16 %v1730, %v1722
      %v2675 = vpack.c.b16 %v1731, %v1723
      %v2676 = vpack.c.b16 %v1732, %v1724
      %v2677 = vpack.c.b16 %v1733, %v1725
      %v2678 = vpack.c.b16 %v1734, %v1726
      %v2679 = vpack.c.b16 %v1735, %v1727
      %v2680 = vpack.c.b16 %v1736, %v1728
      %v2681 = vpack.c.b16 %v1737, %v1729
      %v2682 = vpack.c.b16 %v1746, %v1738
      %v2683 = vpack.c.b16 %v1747, %v1739
      %v2684 = vpack.c.b16 %v1748, %v1740
      %v2685 = vpack.c.b16 %v1749, %v1741
      %v2686 = vpack.c.b16 %v1750, %v1742
      %v2687 = vpack.c.b16 %v1751, %v1743
      %v2688 = vpack.c.b16 %v1752, %v1744
      %v2689 = vpack.c.b16 %v1753, %v1745
      %v2690 = vpack.c.b16 %v1762, %v1754
      %v2691 = vpack.c.b16 %v1763, %v1755
      %v2692 = vpack.c.b16 %v1764, %v1756
      %v2693 = vpack.c.b16 %v1765, %v1757
      %v2694 = vpack.c.b16 %v1766, %v1758
      %v2695 = vpack.c.b16 %v1767, %v1759
      %v2696 = vpack.c.b16 %v1768, %v1760
      %v2697 = vpack.c.b16 %v1769, %v1761
      %v2698 = vpack.c.b16 %v1778, %v1770
      %v2699 = vpack.c.b16 %v1779, %v1771
      %v2700 = vpack.c.b16 %v1780, %v1772
      %v2701 = vpack.c.b16 %v1781, %v1773
      %v2702 = vpack.c.b16 %v1782, %v1774
      %v2703 = vpack.c.b16 %v1783, %v1775
      %v2704 = vpack.c.b16 %v1784, %v1776
      %v2705 = vpack.c.b16 %v1785, %v1777
      %v2706 = vpack.c.b16 %v1794, %v1786
      %v2707 = vpack.c.b16 %v1795, %v1787
      %v2708 = vpack.c.b16 %v1796, %v1788
      %v2709 = vpack.c.b16 %v1797, %v1789
      %v2710 = vpack.c.b16 %v1798, %v1790
      %v2711 = vpack.c.b16 %v1799, %v1791
      %v2712 = vpack.c.b16 %v1800, %v1792
      %v2713 = vpack.c.b16 %v1801, %v1793
      %v2714 = vpack.c.b16 %v1810, %v1802
      %v2715 = vpack.c.b16 %v1811, %v1803
      %v2716 = vpack.c.b16 %v1812, %v1804
      %v2717 = vpack.c.b16 %v1813, %v1805
      %v2718 = vpack.c.b16 %v1814, %v1806
      %v2719 = vpack.c.b16 %v1815, %v1807
      %v2720 = vpack.c.b16 %v1816, %v1808
      %v2721 = vpack.c.b16 %v1817, %v1809
      %v2722 = vpack.c.b16 %v1826, %v1818
      %v2723 = vpack.c.b16 %v1827, %v1819
      %v2724 = vpack.c.b16 %v1828, %v1820
      %v2725 = vpack.c.b16 %v1829, %v1821
      %v2726 = vpack.c.b16 %v1830, %v1822
      %v2727 = vpack.c.b16 %v1831, %v1823
      %v2728 = vpack.c.b16 %v1832, %v1824
      %v2729 = vpack.c.b16 %v1833, %v1825
      %v2730 = vpack.c.b16 %v1842, %v1834
      %v2731 = vpack.c.b16 %v1843, %v1835
      %v2732 = vpack.c.b16 %v1844, %v1836
      %v2733 = vpack.c.b16 %v1845, %v1837
      %v2734 = vpack.c.b16 %v1846, %v1838
      %v2735 = vpack.c.b16 %v1847, %v1839
      %v2736 = vpack.c.b16 %v1848, %v1840
      %v2737 = vpack.c.b16 %v1849, %v1841
      %v2738 = vpack.c.b16 %v1858, %v1850
      %v2739 = vpack.c.b16 %v1859, %v1851
      %v2740 = vpack.c.b16 %v1860, %v1852
      %v2741 = vpack.c.b16 %v1861, %v1853
      %v2742 = vpack.c.b16 %v1862, %v1854
      %v2743 = vpack.c.b16 %v1863, %v1855
      %v2744 = vpack.c.b16 %v1864, %v1856
      %v2745 = vpack.c.b16 %v1865, %v1857
      %v2746 = vpack.c.b16 %v1874, %v1866
      %v2747 = vpack.c.b16 %v1875, %v1867
      %v2748 = vpack.c.b16 %v1876, %v1868
      %v2749 = vpack.c.b16 %v1877, %v1869
      %v2750 = vpack.c.b16 %v1878, %v1870
      %v2751 = vpack.c.b16 %v1879, %v1871
      %v2752 = vpack.c.b16 %v1880, %v1872
      %v2753 = vpack.c.b16 %v1881, %v1873
      %v2754 = vpack.c.b16 %v1890, %v1882
      %v2755 = vpack.c.b16 %v1891, %v1883
      %v2756 = vpack.c.b16 %v1892, %v1884
      %v2757 = vpack.c.b16 %v1893, %v1885
      %v2758 = vpack.c.b16 %v1894, %v1886
      %v2759 = vpack.c.b16 %v1895, %v1887
      %v2760 = vpack.c.b16 %v1896, %v1888
      %v2761 = vpack.c.b16 %v1897, %v1889
      %v2762 = vpack.c.b16 %v1906, %v1898
      %v2763 = vpack.c.b16 %v1907, %v1899
      %v2764 = vpack.c.b16 %v1908, %v1900
      %v2765 = vpack.c.b16 %v1909, %v1901
      %v2766 = vpack.c.b16 %v1910, %v1902
      %v2767 = vpack.c.b16 %v1911, %v1903
      %v2768 = vpack.c.b16 %v1912, %v1904
      %v2769 = vpack.c.b16 %v1913, %v1905
      %v2770 = vpack.c.b16 %v1922, %v1914
      %v2771 = vpack.c.b16 %v1923, %v1915
      %v2772 = vpack.c.b16 %v1924, %v1916
      %v2773 = vpack.c.b16 %v1925, %v1917
      %v2774 = vpack.c.b16 %v1926, %v1918
      %v2775 = vpack.c.b16 %v1927, %v1919
      %v2776 = vpack.c.b16 %v1928, %v1920
      %v2777 = vpack.c.b16 %v1929, %v1921
      %v2778 = vpack.c.b16 %v1938, %v1930
      %v2779 = vpack.c.b16 %v1939, %v1931
      %v2780 = vpack.c.b16 %v1940, %v1932
      %v2781 = vpack.c.b16 %v1941, %v1933
      %v2782 = vpack.c.b16 %v1942, %v1934
      %v2783 = vpack.c.b16 %v1943, %v1935
      %v2784 = vpack.c.b16 %v1944, %v1936
      %v2785 = vpack.c.b16 %v1945, %v1937
      %v2786 = vpack.c.b16 %v1954, %v1946
      %v2787 = vpack.c.b16 %v1955, %v1947
      %v2788 = vpack.c.b16 %v1956, %v1948
      %v2789 = vpack.c.b16 %v1957, %v1949
      %v2790 = vpack.c.b16 %v1958, %v1950
      %v2791 = vpack.c.b16 %v1959, %v1951
      %v2792 = vpack.c.b16 %v1960, %v1952
      %v2793 = vpack.c.b16 %v1961, %v1953
      %v2794 = vpack.c.b16 %v1970, %v1962
      %v2795 = vpack.c.b16 %v1971, %v1963
      %v2796 = vpack.c.b16 %v1972, %v1964
      %v2797 = vpack.c.b16 %v1973, %v1965
      %v2798 = vpack.c.b16 %v1974, %v1966
      %v2799 = vpack.c.b16 %v1975, %v1967
      %v2800 = vpack.c.b16 %v1976, %v1968
      %v2801 = vpack.c.b16 %v1977, %v1969
      %v2802 = vpack.c.b16 %v1986, %v1978
      %v2803 = vpack.c.b16 %v1987, %v1979
      %v2804 = vpack.c.b16 %v1988, %v1980
      %v2805 = vpack.c.b16 %v1989, %v1981
      %v2806 = vpack.c.b16 %v1990, %v1982
      %v2807 = vpack.c.b16 %v1991, %v1983
      %v2808 = vpack.c.b16 %v1992, %v1984
      %v2809 = vpack.c.b16 %v1993, %v1985
      %v2810 = vpack.c.b16 %v2002, %v1994
      %v2811 = vpack.c.b16 %v2003, %v1995
      %v2812 = vpack.c.b16 %v2004, %v1996
      %v2813 = vpack.c.b16 %v2005, %v1997
      %v2814 = vpack.c.b16 %v2006, %v1998
      %v2815 = vpack.c.b16 %v2007, %v1999
      %v2816 = vpack.c.b16 %v2008, %v2000
      %v2817 = vpack.c.b16 %v2009, %v2001
      %v2818 = vpack.c.b16 %v2018, %v2010
      %v2819 = vpack.c.b16 %v2019, %v2011
      %v2820 = vpack.c.b16 %v2020, %v2012
      %v2821 = vpack.c.b16 %v2021, %v2013
      %v2822 = vpack.c.b16 %v2022, %v2014
      %v2823 = vpack.c.b16 %v2023, %v2015
      %v2824 = vpack.c.b16 %v2024, %v2016
      %v2825 = vpack.c.b16 %v2025, %v2017
      %v2826 = vpack.c.b16 %v2034, %v2026
      %v2827 = vpack.c.b16 %v2035, %v2027
      %v2828 = vpack.c.b16 %v2036, %v2028
      %v2829 = vpack.c.b16 %v2037, %v2029
      %v2830 = vpack.c.b16 %v2038, %v2030
      %v2831 = vpack.c.b16 %v2039, %v2031
      %v2832 = vpack.c.b16 %v2040, %v2032
      %v2833 = vpack.c.b16 %v2041, %v2033
      %v2834 = vpack.c.b16 %v2050, %v2042
      %v2835 = vpack.c.b16 %v2051, %v2043
      %v2836 = vpack.c.b16 %v2052, %v2044
      %v2837 = vpack.c.b16 %v2053, %v2045
      %v2838 = vpack.c.b16 %v2054, %v2046
      %v2839 = vpack.c.b16 %v2055, %v2047
      %v2840 = vpack.c.b16 %v2056, %v2048
      %v2841 = vpack.c.b16 %v2057, %v2049
      %v2842 = vpack.c.b16 %v2066, %v2058
      %v2843 = vpack.c.b16 %v2067, %v2059
      %v2844 = vpack.c.b16 %v2068, %v2060
      %v2845 = vpack.c.b16 %v2069, %v2061
      %v2846 = vpack.c.b16 %v2070, %v2062
      %v2847 = vpack.c.b16 %v2071, %v2063
      %v2848 = vpack.c.b16 %v2072, %v2064
      %v2849 = vpack.c.b16 %v2073, %v2065
      %v2850 = vpack.c.b16 %v2082, %v2074
      %v2851 = vpack.c.b16 %v2083, %v2075
      %v2852 = vpack.c.b16 %v2084, %v2076
      %v2853 = vpack.c.b16 %v2085, %v2077
      %v2854 = vpack.c.b16 %v2086, %v2078
      %v2855 = vpack.c.b16 %v2087, %v2079
      %v2856 = vpack.c.b16 %v2088, %v2080
      %v2857 = vpack.c.b16 %v2089, %v2081
      %v2858 = vpack.c.b16 %v2098, %v2090
      %v2859 = vpack.c.b16 %v2099, %v2091
      %v2860 = vpack.c.b16 %v2100, %v2092
      %v2861 = vpack.c.b16 %v2101, %v2093
      %v2862 = vpack.c.b16 %v2102, %v2094
      %v2863 = vpack.c.b16 %v2103, %v2095
      %v2864 = vpack.c.b16 %v2104, %v2096
      %v2865 = vpack.c.b16 %v2105, %v2097
      %v2866 = vpack.c.b16 %v2114, %v2106
      %v2867 = vpack.c.b16 %v2115, %v2107
      %v2868 = vpack.c.b16 %v2116, %v2108
      %v2869 = vpack.c.b16 %v2117, %v2109
      %v2870 = vpack.c.b16 %v2118, %v2110
      %v2871 = vpack.c.b16 %v2119, %v2111
      %v2872 = vpack.c.b16 %v2120, %v2112
      %v2873 = vpack.c.b16 %v2121, %v2113
      %v2874 = vpack.c.b16 %v2130, %v2122
      %v2875 = vpack.c.b16 %v2131, %v2123
      %v2876 = vpack.c.b16 %v2132, %v2124
      %v2877 = vpack.c.b16 %v2133, %v2125
      %v2878 = vpack.c.b16 %v2134, %v2126
      %v2879 = vpack.c.b16 %v2135, %v2127
      %v2880 = vpack.c.b16 %v2136, %v2128
      %v2881 = vpack.c.b16 %v2137, %v2129
      %v2882 = vpack.c.b16 %v2146, %v2138
      %v2883 = vpack.c.b16 %v2147, %v2139
      %v2884 = vpack.c.b16 %v2148, %v2140
      %v2885 = vpack.c.b16 %v2149, %v2141
      %v2886 = vpack.c.b16 %v2150, %v2142
      %v2887 = vpack.c.b16 %v2151, %v2143
      %v2888 = vpack.c.b16 %v2152, %v2144
      %v2889 = vpack.c.b16 %v2153, %v2145
      %v2890 = vpack.c.b16 %v2162, %v2154
      %v2891 = vpack.c.b16 %v2163, %v2155
      %v2892 = vpack.c.b16 %v2164, %v2156
      %v2893 = vpack.c.b16 %v2165, %v2157
      %v2894 = vpack.c.b16 %v2166, %v2158
      %v2895 = vpack.c.b16 %v2167, %v2159
      %v2896 = vpack.c.b16 %v2168, %v2160
      %v2897 = vpack.c.b16 %v2169, %v2161
      %v2898 = vpack.c.b16 %v2178, %v2170
      %v2899 = vpack.c.b16 %v2179, %v2171
      %v2900 = vpack.c.b16 %v2180, %v2172
      %v2901 = vpack.c.b16 %v2181, %v2173
      %v2902 = vpack.c.b16 %v2182, %v2174
      %v2903 = vpack.c.b16 %v2183, %v2175
      %v2904 = vpack.c.b16 %v2184, %v2176
      %v2905 = vpack.c.b16 %v2185, %v2177
      %v2906 = vpack.c.b16 %v2194, %v2186
      %v2907 = vpack.c.b16 %v2195, %v2187
      %v2908 = vpack.c.b16 %v2196, %v2188
      %v2909 = vpack.c.b16 %v2197, %v2189
      %v2910 = vpack.c.b16 %v2198, %v2190
      %v2911 = vpack.c.b16 %v2199, %v2191
      %v2912 = vpack.c.b16 %v2200, %v2192
      %v2913 = vpack.c.b16 %v2201, %v2193
      %v2914 = vpack.c.b16 %v2210, %v2202
      %v2915 = vpack.c.b16 %v2211, %v2203
      %v2916 = vpack.c.b16 %v2212, %v2204
      %v2917 = vpack.c.b16 %v2213, %v2205
      %v2918 = vpack.c.b16 %v2214, %v2206
      %v2919 = vpack.c.b16 %v2215, %v2207
      %v2920 = vpack.c.b16 %v2216, %v2208
      %v2921 = vpack.c.b16 %v2217, %v2209
      %v2922 = vpack.c.b16 %v2226, %v2218
      %v2923 = vpack.c.b16 %v2227, %v2219
      %v2924 = vpack.c.b16 %v2228, %v2220
      %v2925 = vpack.c.b16 %v2229, %v2221
      %v2926 = vpack.c.b16 %v2230, %v2222
      %v2927 = vpack.c.b16 %v2231, %v2223
      %v2928 = vpack.c.b16 %v2232, %v2224
      %v2929 = vpack.c.b16 %v2233, %v2225
      %v2930 = vpack.c.b16 %v2242, %v2234
      %v2931 = vpack.c.b16 %v2243, %v2235
      %v2932 = vpack.c.b16 %v2244, %v2236
      %v2933 = vpack.c.b16 %v2245, %v2237
      %v2934 = vpack.c.b16 %v2246, %v2238
      %v2935 = vpack.c.b16 %v2247, %v2239
      %v2936 = vpack.c.b16 %v2248, %v2240
      %v2937 = vpack.c.b16 %v2249, %v2241
      %v2938 = vpack.c.b16 %v2258, %v2250
      %v2939 = vpack.c.b16 %v2259, %v2251
      %v2940 = vpack.c.b16 %v2260, %v2252
      %v2941 = vpack.c.b16 %v2261, %v2253
      %v2942 = vpack.c.b16 %v2262, %v2254
      %v2943 = vpack.c.b16 %v2263, %v2255
      %v2944 = vpack.c.b16 %v2264, %v2256
      %v2945 = vpack.c.b16 %v2265, %v2257
      %v2946 = vpack.c.b16 %v2274, %v2266
      %v2947 = vpack.c.b16 %v2275, %v2267
      %v2948 = vpack.c.b16 %v2276, %v2268
      %v2949 = vpack.c.b16 %v2277, %v2269
      %v2950 = vpack.c.b16 %v2278, %v2270
      %v2951 = vpack.c.b16 %v2279, %v2271
      %v2952 = vpack.c.b16 %v2280, %v2272
      %v2953 = vpack.c.b16 %v2281, %v2273
      %v2954 = vpack.c.b16 %v2290, %v2282
      %v2955 = vpack.c.b16 %v2291, %v2283
      %v2956 = vpack.c.b16 %v2292, %v2284
      %v2957 = vpack.c.b16 %v2293, %v2285
      %v2958 = vpack.c.b16 %v2294, %v2286
      %v2959 = vpack.c.b16 %v2295, %v2287
      %v2960 = vpack.c.b16 %v2296, %v2288
      %v2961 = vpack.c.b16 %v2297, %v2289
      %v2962 = vpack.c.b16 %v2306, %v2298
      %v2963 = vpack.c.b16 %v2307, %v2299
      %v2964 = vpack.c.b16 %v2308, %v2300
      %v2965 = vpack.c.b16 %v2309, %v2301
      %v2966 = vpack.c.b16 %v2310, %v2302
      %v2967 = vpack.c.b16 %v2311, %v2303
      %v2968 = vpack.c.b16 %v2312, %v2304
      %v2969 = vpack.c.b16 %v2313, %v2305
      %v2970 = vpack.c.b16 %v2322, %v2314
      %v2971 = vpack.c.b16 %v2323, %v2315
      %v2972 = vpack.c.b16 %v2324, %v2316
      %v2973 = vpack.c.b16 %v2325, %v2317
      %v2974 = vpack.c.b16 %v2326, %v2318
      %v2975 = vpack.c.b16 %v2327, %v2319
      %v2976 = vpack.c.b16 %v2328, %v2320
      %v2977 = vpack.c.b16 %v2329, %v2321
      %v2978 = vpack.c.b16 %v2338, %v2330
      %v2979 = vpack.c.b16 %v2339, %v2331
      %v2980 = vpack.c.b16 %v2340, %v2332
      %v2981 = vpack.c.b16 %v2341, %v2333
      %v2982 = vpack.c.b16 %v2342, %v2334
      %v2983 = vpack.c.b16 %v2343, %v2335
      %v2984 = vpack.c.b16 %v2344, %v2336
      %v2985 = vpack.c.b16 %v2345, %v2337
      %v2986 = vpack.c.b16 %v2354, %v2346
      %v2987 = vpack.c.b16 %v2355, %v2347
      %v2988 = vpack.c.b16 %v2356, %v2348
      %v2989 = vpack.c.b16 %v2357, %v2349
      %v2990 = vpack.c.b16 %v2358, %v2350
      %v2991 = vpack.c.b16 %v2359, %v2351
      %v2992 = vpack.c.b16 %v2360, %v2352
      %v2993 = vpack.c.b16 %v2361, %v2353
      %v2994 = vpack.c.b16 %v2370, %v2362
      %v2995 = vpack.c.b16 %v2371, %v2363
      %v2996 = vpack.c.b16 %v2372, %v2364
      %v2997 = vpack.c.b16 %v2373, %v2365
      %v2998 = vpack.c.b16 %v2374, %v2366
      %v2999 = vpack.c.b16 %v2375, %v2367
      %v3000 = vpack.c.b16 %v2376, %v2368
      %v3001 = vpack.c.b16 %v2377, %v2369
      %v3002 = vpack.c.b16 %v2386, %v2378
      %v3003 = vpack.c.b16 %v2387, %v2379
      %v3004 = vpack.c.b16 %v2388, %v2380
      %v3005 = vpack.c.b16 %v2389, %v2381
      %v3006 = vpack.c.b16 %v2390, %v2382
      %v3007 = vpack.c.b16 %v2391, %v2383
      %v3008 = vpack.c.b16 %v2392, %v2384
      %v3009 = vpack.c.b16 %v2393, %v2385
      %v3010 = vpack.c.b16 %v2402, %v2394
      %v3011 = vpack.c.b16 %v2403, %v2395
      %v3012 = vpack.c.b16 %v2404, %v2396
      %v3013 = vpack.c.b16 %v2405, %v2397
      %v3014 = vpack.c.b16 %v2406, %v2398
      %v3015 = vpack.c.b16 %v2407, %v2399
      %v3016 = vpack.c.b16 %v2408, %v2400
      %v3017 = vpack.c.b16 %v2409, %v2401
      %v3018 = vpack.c.b16 %v2418, %v2410
      %v3019 = vpack.c.b16 %v2419, %v2411
      %v3020 = vpack.c.b16 %v2420, %v2412
      %v3021 = vpack.c.b16 %v2421, %v2413
      %v3022 = vpack.c.b16 %v2422, %v2414
      %v3023 = vpack.c.b16 %v2423, %v2415
      %v3024 = vpack.c.b16 %v2424, %v2416
      %v3025 = vpack.c.b16 %v2425, %v2417
      %v3026 = vpack.c.b16 %v2434, %v2426
      %v3027 = vpack.c.b16 %v2435, %v2427
      %v3028 = vpack.c.b16 %v2436, %v2428
      %v3029 = vpack.c.b16 %v2437, %v2429
      %v3030 = vpack.c.b16 %v2438, %v2430
      %v3031 = vpack.c.b16 %v2439, %v2431
      %v3032 = vpack.c.b16 %v2440, %v2432
      %v3033 = vpack.c.b16 %v2441, %v2433
      %v3034 = vpack.c.b16 %v2450, %v2442
      %v3035 = vpack.c.b16 %v2451, %v2443
      %v3036 = vpack.c.b16 %v2452, %v2444
      %v3037 = vpack.c.b16 %v2453, %v2445
      %v3038 = vpack.c.b16 %v2454, %v2446
      %v3039 = vpack.c.b16 %v2455, %v2447
      %v3040 = vpack.c.b16 %v2456, %v2448
      %v3041 = vpack.c.b16 %v2457, %v2449
      %v3042 = vpack.c.b16 %v2466, %v2458
      %v3043 = vpack.c.b16 %v2467, %v2459
      %v3044 = vpack.c.b16 %v2468, %v2460
      %v3045 = vpack.c.b16 %v2469, %v2461
      %v3046 = vpack.c.b16 %v2470, %v2462
      %v3047 = vpack.c.b16 %v2471, %v2463
      %v3048 = vpack.c.b16 %v2472, %v2464
      %v3049 = vpack.c.b16 %v2473, %v2465
      %v3050 = vpack.c.b16 %v2482, %v2474
      %v3051 = vpack.c.b16 %v2483, %v2475
      %v3052 = vpack.c.b16 %v2484, %v2476
      %v3053 = vpack.c.b16 %v2485, %v2477
      %v3054 = vpack.c.b16 %v2486, %v2478
      %v3055 = vpack.c.b16 %v2487, %v2479
      %v3056 = vpack.c.b16 %v2488, %v2480
      %v3057 = vpack.c.b16 %v2489, %v2481
      %v3058 = vpack.c.b16 %v2498, %v2490
      %v3059 = vpack.c.b16 %v2499, %v2491
      %v3060 = vpack.c.b16 %v2500, %v2492
      %v3061 = vpack.c.b16 %v2501, %v2493
      %v3062 = vpack.c.b16 %v2502, %v2494
      %v3063 = vpack.c.b16 %v2503, %v2495
      %v3064 = vpack.c.b16 %v2504, %v2496
      %v3065 = vpack.c.b16 %v2505, %v2497
      %v3066 = vpack.c.b16 %v2514, %v2506
      %v3067 = vpack.c.b16 %v2515, %v2507
      %v3068 = vpack.c.b16 %v2516, %v2508
      %v3069 = vpack.c.b16 %v2517, %v2509
      %v3070 = vpack.c.b16 %v2518, %v2510
      %v3071 = vpack.c.b16 %v2519, %v2511
      %v3072 = vpack.c.b16 %v2520, %v2512
      %v3073 = vpack.c.b16 %v2521, %v2513
      %v3074 = vpack.c.b16 %v2530, %v2522
      %v3075 = vpack.c.b16 %v2531, %v2523
      %v3076 = vpack.c.b16 %v2532, %v2524
      %v3077 = vpack.c.b16 %v2533, %v2525
      %v3078 = vpack.c.b16 %v2534, %v2526
      %v3079 = vpack.c.b16 %v2535, %v2527
      %v3080 = vpack.c.b16 %v2536, %v2528
      %v3081 = vpack.c.b16 %v2537, %v2529
      %v3082 = vpack.c.b16 %v2546, %v2538
      %v3083 = vpack.c.b16 %v2547, %v2539
      %v3084 = vpack.c.b16 %v2548, %v2540
      %v3085 = vpack.c.b16 %v2549, %v2541
      %v3086 = vpack.c.b16 %v2550, %v2542
      %v3087 = vpack.c.b16 %v2551, %v2543
      %v3088 = vpack.c.b16 %v2552, %v2544
      %v3089 = vpack.c.b16 %v2553, %v2545
      %v3090 = vpack.c.b16 %v2562, %v2554
      %v3091 = vpack.c.b16 %v2563, %v2555
      %v3092 = vpack.c.b16 %v2564, %v2556
      %v3093 = vpack.c.b16 %v2565, %v2557
      %v3094 = vpack.c.b16 %v2566, %v2558
      %v3095 = vpack.c.b16 %v2567, %v2559
      %v3096 = vpack.c.b16 %v2568, %v2560
      %v3097 = vpack.c.b16 %v2569, %v2561
      %v3098 = vpack.c.b16 %v2578, %v2570
      %v3099 = vpack.c.b16 %v2579, %v2571
      %v3100 = vpack.c.b16 %v2580, %v2572
      %v3101 = vpack.c.b16 %v2581, %v2573
      %v3102 = vpack.c.b16 %v2582, %v2574
      %v3103 = vpack.c.b16 %v2583, %v2575
      %v3104 = vpack.c.b16 %v2584, %v2576
      %v3105 = vpack.c.b16 %v2585, %v2577
      %v3106 = vpack.c.b16 %v2594, %v2586
      %v3107 = vpack.c.b16 %v2595, %v2587
      %v3108 = vpack.c.b16 %v2596, %v2588
      %v3109 = vpack.c.b16 %v2597, %v2589
      %v3110 = vpack.c.b16 %v2598, %v2590
      %v3111 = vpack.c.b16 %v2599, %v2591
      %v3112 = vpack.c.b16 %v2600, %v2592
      %v3113 = vpack.c.b16 %v2601, %v2593
      %3626 = vmatprep.subr.bf16.mxu0 %v2603
      %3627 = vmatpush1.bf16.msra.mxu0 %v2602
      %3628 = vmatprep.subr.bf16.mxu0 %v2611
      %3629 = vmatpush1.bf16.msra.mxu0 %v2610
      %3630 = vmatprep.subr.bf16.mxu0 %v2619
      %3631 = vmatpush1.bf16.msra.mxu0 %v2618
      %3632 = vmatprep.subr.bf16.mxu0 %v2627
      %3633 = vmatpush1.bf16.msra.mxu0 %v2626
      %3634 = vmatprep.subr.bf16.mxu0 %v2635
      %3635 = vmatpush1.bf16.msra.mxu0 %v2634
      %3636 = vmatprep.subr.bf16.mxu0 %v2643
      %3637 = vmatpush1.bf16.msra.mxu0 %v2642
      %3638 = vmatprep.subr.bf16.mxu0 %v2651
      %3639 = vmatpush1.bf16.msra.mxu0 %v2650
      %3640 = vmatprep.subr.bf16.mxu0 %v2659
      %3641 = vmatpush1.bf16.msra.mxu0 %v2658
      %3642 = vmatprep.subr.bf16.mxu0 %v2667
      %3643 = vmatpush1.bf16.msra.mxu0 %v2666
      %3644 = vmatprep.subr.bf16.mxu0 %v2675
      %3645 = vmatpush1.bf16.msra.mxu0 %v2674
      %3646 = vmatprep.subr.bf16.mxu0 %v2683
      %3647 = vmatpush1.bf16.msra.mxu0 %v2682
      %3648 = vmatprep.subr.bf16.mxu0 %v2691
      %3649 = vmatpush1.bf16.msra.mxu0 %v2690
      %3650 = vmatprep.subr.bf16.mxu0 %v2699
      %3651 = vmatpush1.bf16.msra.mxu0 %v2698
      %3652 = vmatprep.subr.bf16.mxu0 %v2707
      %3653 = vmatpush1.bf16.msra.mxu0 %v2706
      %3654 = vmatprep.subr.bf16.mxu0 %v2715
      %3655 = vmatpush1.bf16.msra.mxu0 %v2714
      %3656 = vmatprep.subr.bf16.mxu0 %v2723
      %3657 = vmatpush1.bf16.msra.mxu0 %v2722
      %3658 = vmatprep.mubr.bf16.mxu0 %v482
      %3659 = vmatmul.mubr.bf16.gmra.mrb[0].mxu0 %v481
      %v3660 = vpop.f32.mrb[0].mxu0
      %v3661 = vadd.f32 0.0, %v3660
      %v3662 = vpop.f32.mrb[0].mxu0
      %v3663 = vadd.f32 0.0, %v3662
      %v3664 = vpop.f32.mrb[0].mxu0
      %v3665 = vadd.f32 0.0, %v3664
      %v3666 = vpop.f32.mrb[0].mxu0
      %v3667 = vadd.f32 0.0, %v3666
      %3668 = vmatprep.mubr.bf16.mxu0 %v547
      %3669 = vmatmul.mubr.bf16.gmra.mrb[0].mxu0 %v546
      %v3670 = vpop.f32.mrb[0].mxu0
      %v3671 = vadd.f32 0.0, %v3670
      %v3672 = vpop.f32.mrb[0].mxu0
      %v3673 = vadd.f32 0.0, %v3672
      %v3674 = vpop.f32.mrb[0].mxu0
      %v3675 = vadd.f32 0.0, %v3674
      %v3676 = vpop.f32.mrb[0].mxu0
      %v3677 = vadd.f32 0.0, %v3676
      %3678 = vdwg.mxu0
      %3679 = vmatprep.subr.bf16.mxu0 %v2731
      %3680 = vmatpush1.bf16.msra.mxu0 %v2730
      %3681 = vmatprep.subr.bf16.mxu0 %v2739
      %3682 = vmatpush1.bf16.msra.mxu0 %v2738
      %3683 = vmatprep.subr.bf16.mxu0 %v2747
      %3684 = vmatpush1.bf16.msra.mxu0 %v2746
      %3685 = vmatprep.subr.bf16.mxu0 %v2755
      %3686 = vmatpush1.bf16.msra.mxu0 %v2754
      %3687 = vmatprep.subr.bf16.mxu0 %v2763
      %3688 = vmatpush1.bf16.msra.mxu0 %v2762
      %3689 = vmatprep.subr.bf16.mxu0 %v2771
      %3690 = vmatpush1.bf16.msra.mxu0 %v2770
      %3691 = vmatprep.subr.bf16.mxu0 %v2779
      %3692 = vmatpush1.bf16.msra.mxu0 %v2778
      %3693 = vmatprep.subr.bf16.mxu0 %v2787
      %3694 = vmatpush1.bf16.msra.mxu0 %v2786
      %3695 = vmatprep.subr.bf16.mxu0 %v2795
      %3696 = vmatpush1.bf16.msra.mxu0 %v2794
      %3697 = vmatprep.subr.bf16.mxu0 %v2803
      %3698 = vmatpush1.bf16.msra.mxu0 %v2802
      %3699 = vmatprep.subr.bf16.mxu0 %v2811
      %3700 = vmatpush1.bf16.msra.mxu0 %v2810
      %3701 = vmatprep.subr.bf16.mxu0 %v2819
      %3702 = vmatpush1.bf16.msra.mxu0 %v2818
      %3703 = vmatprep.subr.bf16.mxu0 %v2827
      %3704 = vmatpush1.bf16.msra.mxu0 %v2826
      %3705 = vmatprep.subr.bf16.mxu0 %v2835
      %3706 = vmatpush1.bf16.msra.mxu0 %v2834
      %3707 = vmatprep.subr.bf16.mxu0 %v2843
      %3708 = vmatpush1.bf16.msra.mxu0 %v2842
      %3709 = vmatprep.subr.bf16.mxu0 %v2851
      %3710 = vmatpush1.bf16.msra.mxu0 %v2850
      %3711 = vmatprep.mubr.bf16.mxu0 %v484
      %3712 = vmatmul.mubr.bf16.gmra.mrb[0].mxu0 %v483
      %v3713 = vpop.f32.mrb[0].mxu0
      %v3714 = vadd.f32 %v3661, %v3713
      %v3715 = vpop.f32.mrb[0].mxu0
      %v3716 = vadd.f32 %v3663, %v3715
      %v3717 = vpop.f32.mrb[0].mxu0
      %v3718 = vadd.f32 %v3665, %v3717
      %v3719 = vpop.f32.mrb[0].mxu0
      %v3720 = vadd.f32 %v3667, %v3719
      %3721 = vmatprep.mubr.bf16.mxu0 %v549
      %3722 = vmatmul.mubr.bf16.gmra.mrb[0].mxu0 %v548
      %v3723 = vpop.f32.mrb[0].mxu0
      %v3724 = vadd.f32 %v3671, %v3723
      %v3725 = vpop.f32.mrb[0].mxu0
      %v3726 = vadd.f32 %v3673, %v3725
      %v3727 = vpop.f32.mrb[0].mxu0
      %v3728 = vadd.f32 %v3675, %v3727
      %v3729 = vpop.f32.mrb[0].mxu0
      %v3730 = vadd.f32 %v3677, %v3729
      %3731 = vdwg.mxu0
      %3732 = vmatprep.subr.bf16.mxu0 %v2859
      %3733 = vmatpush1.bf16.msra.mxu0 %v2858
      %3734 = vmatprep.subr.bf16.mxu0 %v2867
      %3735 = vmatpush1.bf16.msra.mxu0 %v2866
      %3736 = vmatprep.subr.bf16.mxu0 %v2875
      %3737 = vmatpush1.bf16.msra.mxu0 %v2874
      %3738 = vmatprep.subr.bf16.mxu0 %v2883
      %3739 = vmatpush1.bf16.msra.mxu0 %v2882
      %3740 = vmatprep.subr.bf16.mxu0 %v2891
      %3741 = vmatpush1.bf16.msra.mxu0 %v2890
      %3742 = vmatprep.subr.bf16.mxu0 %v2899
      %3743 = vmatpush1.bf16.msra.mxu0 %v2898
      %3744 = vmatprep.subr.bf16.mxu0 %v2907
      %3745 = vmatpush1.bf16.msra.mxu0 %v2906
      %3746 = vmatprep.subr.bf16.mxu0 %v2915
      %3747 = vmatpush1.bf16.msra.mxu0 %v2914
      %3748 = vmatprep.subr.bf16.mxu0 %v2923
      %3749 = vmatpush1.bf16.msra.mxu0 %v2922
      %3750 = vmatprep.subr.bf16.mxu0 %v2931
      %3751 = vmatpush1.bf16.msra.mxu0 %v2930
      %3752 = vmatprep.subr.bf16.mxu0 %v2939
      %3753 = vmatpush1.bf16.msra.mxu0 %v2938
      %3754 = vmatprep.subr.bf16.mxu0 %v2947
      %3755 = vmatpush1.bf16.msra.mxu0 %v2946
      %3756 = vmatprep.subr.bf16.mxu0 %v2955
      %3757 = vmatpush1.bf16.msra.mxu0 %v2954
      %3758 = vmatprep.subr.bf16.mxu0 %v2963
      %3759 = vmatpush1.bf16.msra.mxu0 %v2962
      %3760 = vmatprep.subr.bf16.mxu0 %v2971
      %3761 = vmatpush1.bf16.msra.mxu0 %v2970
      %3762 = vmatprep.subr.bf16.mxu0 %v2979
      %3763 = vmatpush1.bf16.msra.mxu0 %v2978
      %3764 = vmatprep.mubr.bf16.mxu0 %v486
      %3765 = vmatmul.mubr.bf16.gmra.mrb[0].mxu0 %v485
      %v3766 = vpop.f32.mrb[0].mxu0
      %v3767 = vadd.f32 %v3714, %v3766
      %v3768 = vpop.f32.mrb[0].mxu0
      %v3769 = vadd.f32 %v3716, %v3768
      %v3770 = vpop.f32.mrb[0].mxu0
      %v3771 = vadd.f32 %v3718, %v3770
      %v3772 = vpop.f32.mrb[0].mxu0
      %v3773 = vadd.f32 %v3720, %v3772
      %3774 = vmatprep.mubr.bf16.mxu0 %v551
      %3775 = vmatmul.mubr.bf16.gmra.mrb[0].mxu0 %v550
      %v3776 = vpop.f32.mrb[0].mxu0
      %v3777 = vadd.f32 %v3724, %v3776
      %v3778 = vpop.f32.mrb[0].mxu0
      %v3779 = vadd.f32 %v3726, %v3778
      %v3780 = vpop.f32.mrb[0].mxu0
      %v3781 = vadd.f32 %v3728, %v3780
      %v3782 = vpop.f32.mrb[0].mxu0
      %v3783 = vadd.f32 %v3730, %v3782
      %3784 = vdwg.mxu0
      %3785 = vmatprep.subr.bf16.mxu0 %v2987
      %3786 = vmatpush1.bf16.msra.mxu0 %v2986
      %3787 = vmatprep.subr.bf16.mxu0 %v2995
      %3788 = vmatpush1.bf16.msra.mxu0 %v2994
      %3789 = vmatprep.subr.bf16.mxu0 %v3003
      %3790 = vmatpush1.bf16.msra.mxu0 %v3002
      %3791 = vmatprep.subr.bf16.mxu0 %v3011
      %3792 = vmatpush1.bf16.msra.mxu0 %v3010
      %3793 = vmatprep.subr.bf16.mxu0 %v3019
      %3794 = vmatpush1.bf16.msra.mxu0 %v3018
      %3795 = vmatprep.subr.bf16.mxu0 %v3027
      %3796 = vmatpush1.bf16.msra.mxu0 %v3026
      %3797 = vmatprep.subr.bf16.mxu0 %v3035
      %3798 = vmatpush1.bf16.msra.mxu0 %v3034
      %3799 = vmatprep.subr.bf16.mxu0 %v3043
      %3800 = vmatpush1.bf16.msra.mxu0 %v3042
      %3801 = vmatprep.subr.bf16.mxu0 %v3051
      %3802 = vmatpush1.bf16.msra.mxu0 %v3050
      %3803 = vmatprep.subr.bf16.mxu0 %v3059
      %3804 = vmatpush1.bf16.msra.mxu0 %v3058
      %3805 = vmatprep.subr.bf16.mxu0 %v3067
      %3806 = vmatpush1.bf16.msra.mxu0 %v3066
      %3807 = vmatprep.subr.bf16.mxu0 %v3075
      %3808 = vmatpush1.bf16.msra.mxu0 %v3074
      %3809 = vmatprep.subr.bf16.mxu0 %v3083
      %3810 = vmatpush1.bf16.msra.mxu0 %v3082
      %3811 = vmatprep.subr.bf16.mxu0 %v3091
      %3812 = vmatpush1.bf16.msra.mxu0 %v3090
      %3813 = vmatprep.subr.bf16.mxu0 %v3099
      %3814 = vmatpush1.bf16.msra.mxu0 %v3098
      %3815 = vmatprep.subr.bf16.mxu0 %v3107
      %3816 = vmatpush1.bf16.msra.mxu0 %v3106
      %3817 = vmatprep.mubr.bf16.mxu0 %v488
      %3818 = vmatmul.mubr.bf16.gmra.mrb[0].mxu0 %v487
      %v3819 = vpop.f32.mrb[0].mxu0
      %v3820 = vadd.f32 %v3767, %v3819
      %v3821 = vpop.f32.mrb[0].mxu0
      %v3822 = vadd.f32 %v3769, %v3821
      %v3823 = vpop.f32.mrb[0].mxu0
      %v3824 = vadd.f32 %v3771, %v3823
      %v3825 = vpop.f32.mrb[0].mxu0
      %v3826 = vadd.f32 %v3773, %v3825
      %3827 = vmatprep.mubr.bf16.mxu0 %v553
      %3828 = vmatmul.mubr.bf16.gmra.mrb[0].mxu0 %v552
      %v3829 = vpop.f32.mrb[0].mxu0
      %v3830 = vadd.f32 %v3777, %v3829
      %v3831 = vpop.f32.mrb[0].mxu0
      %v3832 = vadd.f32 %v3779, %v3831
      %v3833 = vpop.f32.mrb[0].mxu0
      %v3834 = vadd.f32 %v3781, %v3833
      %v3835 = vpop.f32.mrb[0].mxu0
      %v3836 = vadd.f32 %v3783, %v3835
      %3837 = vdwg.mxu0
      %3838 = vmatprep.subr.bf16.mxu0 %v2605
      %3839 = vmatpush1.bf16.msra.mxu0 %v2604
      %3840 = vmatprep.subr.bf16.mxu0 %v2613
      %3841 = vmatpush1.bf16.msra.mxu0 %v2612
      %3842 = vmatprep.subr.bf16.mxu0 %v2621
      %3843 = vmatpush1.bf16.msra.mxu0 %v2620
      %3844 = vmatprep.subr.bf16.mxu0 %v2629
      %3845 = vmatpush1.bf16.msra.mxu0 %v2628
      %3846 = vmatprep.subr.bf16.mxu0 %v2637
      %3847 = vmatpush1.bf16.msra.mxu0 %v2636
      %3848 = vmatprep.subr.bf16.mxu0 %v2645
      %3849 = vmatpush1.bf16.msra.mxu0 %v2644
      %3850 = vmatprep.subr.bf16.mxu0 %v2653
      %3851 = vmatpush1.bf16.msra.mxu0 %v2652
      %3852 = vmatprep.subr.bf16.mxu0 %v2661
      %3853 = vmatpush1.bf16.msra.mxu0 %v2660
      %3854 = vmatprep.subr.bf16.mxu0 %v2669
      %3855 = vmatpush1.bf16.msra.mxu0 %v2668
      %3856 = vmatprep.subr.bf16.mxu0 %v2677
      %3857 = vmatpush1.bf16.msra.mxu0 %v2676
      %3858 = vmatprep.subr.bf16.mxu0 %v2685
      %3859 = vmatpush1.bf16.msra.mxu0 %v2684
      %3860 = vmatprep.subr.bf16.mxu0 %v2693
      %3861 = vmatpush1.bf16.msra.mxu0 %v2692
      %3862 = vmatprep.subr.bf16.mxu0 %v2701
      %3863 = vmatpush1.bf16.msra.mxu0 %v2700
      %3864 = vmatprep.subr.bf16.mxu0 %v2709
      %3865 = vmatpush1.bf16.msra.mxu0 %v2708
      %3866 = vmatprep.subr.bf16.mxu0 %v2717
      %3867 = vmatpush1.bf16.msra.mxu0 %v2716
      %3868 = vmatprep.subr.bf16.mxu0 %v2725
      %3869 = vmatpush1.bf16.msra.mxu0 %v2724
      %3870 = vmatprep.mubr.bf16.mxu0 %v482
      %3871 = vmatmul.mubr.bf16.gmra.mrb[0].mxu0 %v481
      %v3872 = vpop.f32.mrb[0].mxu0
      %v3873 = vadd.f32 0.0, %v3872
      %v3874 = vpop.f32.mrb[0].mxu0
      %v3875 = vadd.f32 0.0, %v3874
      %v3876 = vpop.f32.mrb[0].mxu0
      %v3877 = vadd.f32 0.0, %v3876
      %v3878 = vpop.f32.mrb[0].mxu0
      %v3879 = vadd.f32 0.0, %v3878
      %3880 = vmatprep.mubr.bf16.mxu0 %v547
      %3881 = vmatmul.mubr.bf16.gmra.mrb[0].mxu0 %v546
      %v3882 = vpop.f32.mrb[0].mxu0
      %v3883 = vadd.f32 0.0, %v3882
      %v3884 = vpop.f32.mrb[0].mxu0
      %v3885 = vadd.f32 0.0, %v3884
      %v3886 = vpop.f32.mrb[0].mxu0
      %v3887 = vadd.f32 0.0, %v3886
      %v3888 = vpop.f32.mrb[0].mxu0
      %v3889 = vadd.f32 0.0, %v3888
      %3890 = vdwg.mxu0
      %3891 = vmatprep.subr.bf16.mxu0 %v2733
      %3892 = vmatpush1.bf16.msra.mxu0 %v2732
      %3893 = vmatprep.subr.bf16.mxu0 %v2741
      %3894 = vmatpush1.bf16.msra.mxu0 %v2740
      %3895 = vmatprep.subr.bf16.mxu0 %v2749
      %3896 = vmatpush1.bf16.msra.mxu0 %v2748
      %3897 = vmatprep.subr.bf16.mxu0 %v2757
      %3898 = vmatpush1.bf16.msra.mxu0 %v2756
      %3899 = vmatprep.subr.bf16.mxu0 %v2765
      %3900 = vmatpush1.bf16.msra.mxu0 %v2764
      %3901 = vmatprep.subr.bf16.mxu0 %v2773
      %3902 = vmatpush1.bf16.msra.mxu0 %v2772
      %3903 = vmatprep.subr.bf16.mxu0 %v2781
      %3904 = vmatpush1.bf16.msra.mxu0 %v2780
      %3905 = vmatprep.subr.bf16.mxu0 %v2789
      %3906 = vmatpush1.bf16.msra.mxu0 %v2788
      %3907 = vmatprep.subr.bf16.mxu0 %v2797
      %3908 = vmatpush1.bf16.msra.mxu0 %v2796
      %3909 = vmatprep.subr.bf16.mxu0 %v2805
      %3910 = vmatpush1.bf16.msra.mxu0 %v2804
      %3911 = vmatprep.subr.bf16.mxu0 %v2813
      %3912 = vmatpush1.bf16.msra.mxu0 %v2812
      %3913 = vmatprep.subr.bf16.mxu0 %v2821
      %3914 = vmatpush1.bf16.msra.mxu0 %v2820
      %3915 = vmatprep.subr.bf16.mxu0 %v2829
      %3916 = vmatpush1.bf16.msra.mxu0 %v2828
      %3917 = vmatprep.subr.bf16.mxu0 %v2837
      %3918 = vmatpush1.bf16.msra.mxu0 %v2836
      %3919 = vmatprep.subr.bf16.mxu0 %v2845
      %3920 = vmatpush1.bf16.msra.mxu0 %v2844
      %3921 = vmatprep.subr.bf16.mxu0 %v2853
      %3922 = vmatpush1.bf16.msra.mxu0 %v2852
      %3923 = vmatprep.mubr.bf16.mxu0 %v484
      %3924 = vmatmul.mubr.bf16.gmra.mrb[0].mxu0 %v483
      %v3925 = vpop.f32.mrb[0].mxu0
      %v3926 = vadd.f32 %v3873, %v3925
      %v3927 = vpop.f32.mrb[0].mxu0
      %v3928 = vadd.f32 %v3875, %v3927
      %v3929 = vpop.f32.mrb[0].mxu0
      %v3930 = vadd.f32 %v3877, %v3929
      %v3931 = vpop.f32.mrb[0].mxu0
      %v3932 = vadd.f32 %v3879, %v3931
      %3933 = vmatprep.mubr.bf16.mxu0 %v549
      %3934 = vmatmul.mubr.bf16.gmra.mrb[0].mxu0 %v548
      %v3935 = vpop.f32.mrb[0].mxu0
      %v3936 = vadd.f32 %v3883, %v3935
      %v3937 = vpop.f32.mrb[0].mxu0
      %v3938 = vadd.f32 %v3885, %v3937
      %v3939 = vpop.f32.mrb[0].mxu0
      %v3940 = vadd.f32 %v3887, %v3939
      %v3941 = vpop.f32.mrb[0].mxu0
      %v3942 = vadd.f32 %v3889, %v3941
      %3943 = vdwg.mxu0
      %3944 = vmatprep.subr.bf16.mxu0 %v2861
      %3945 = vmatpush1.bf16.msra.mxu0 %v2860
      %3946 = vmatprep.subr.bf16.mxu0 %v2869
      %3947 = vmatpush1.bf16.msra.mxu0 %v2868
      %3948 = vmatprep.subr.bf16.mxu0 %v2877
      %3949 = vmatpush1.bf16.msra.mxu0 %v2876
      %3950 = vmatprep.subr.bf16.mxu0 %v2885
      %3951 = vmatpush1.bf16.msra.mxu0 %v2884
      %3952 = vmatprep.subr.bf16.mxu0 %v2893
      %3953 = vmatpush1.bf16.msra.mxu0 %v2892
      %3954 = vmatprep.subr.bf16.mxu0 %v2901
      %3955 = vmatpush1.bf16.msra.mxu0 %v2900
      %3956 = vmatprep.subr.bf16.mxu0 %v2909
      %3957 = vmatpush1.bf16.msra.mxu0 %v2908
      %3958 = vmatprep.subr.bf16.mxu0 %v2917
      %3959 = vmatpush1.bf16.msra.mxu0 %v2916
      %3960 = vmatprep.subr.bf16.mxu0 %v2925
      %3961 = vmatpush1.bf16.msra.mxu0 %v2924
      %3962 = vmatprep.subr.bf16.mxu0 %v2933
      %3963 = vmatpush1.bf16.msra.mxu0 %v2932
      %3964 = vmatprep.subr.bf16.mxu0 %v2941
      %3965 = vmatpush1.bf16.msra.mxu0 %v2940
      %3966 = vmatprep.subr.bf16.mxu0 %v2949
      %3967 = vmatpush1.bf16.msra.mxu0 %v2948
      %3968 = vmatprep.subr.bf16.mxu0 %v2957
      %3969 = vmatpush1.bf16.msra.mxu0 %v2956
      %3970 = vmatprep.subr.bf16.mxu0 %v2965
      %3971 = vmatpush1.bf16.msra.mxu0 %v2964
      %3972 = vmatprep.subr.bf16.mxu0 %v2973
      %3973 = vmatpush1.bf16.msra.mxu0 %v2972
      %3974 = vmatprep.subr.bf16.mxu0 %v2981
      %3975 = vmatpush1.bf16.msra.mxu0 %v2980
      %3976 = vmatprep.mubr.bf16.mxu0 %v486
      %3977 = vmatmul.mubr.bf16.gmra.mrb[0].mxu0 %v485
      %v3978 = vpop.f32.mrb[0].mxu0
      %v3979 = vadd.f32 %v3926, %v3978
      %v3980 = vpop.f32.mrb[0].mxu0
      %v3981 = vadd.f32 %v3928, %v3980
      %v3982 = vpop.f32.mrb[0].mxu0
      %v3983 = vadd.f32 %v3930, %v3982
      %v3984 = vpop.f32.mrb[0].mxu0
      %v3985 = vadd.f32 %v3932, %v3984
      %3986 = vmatprep.mubr.bf16.mxu0 %v551
      %3987 = vmatmul.mubr.bf16.gmra.mrb[0].mxu0 %v550
      %v3988 = vpop.f32.mrb[0].mxu0
      %v3989 = vadd.f32 %v3936, %v3988
      %v3990 = vpop.f32.mrb[0].mxu0
      %v3991 = vadd.f32 %v3938, %v3990
      %v3992 = vpop.f32.mrb[0].mxu0
      %v3993 = vadd.f32 %v3940, %v3992
      %v3994 = vpop.f32.mrb[0].mxu0
      %v3995 = vadd.f32 %v3942, %v3994
      %3996 = vdwg.mxu0
      %3997 = vmatprep.subr.bf16.mxu0 %v2989
      %3998 = vmatpush1.bf16.msra.mxu0 %v2988
      %3999 = vmatprep.subr.bf16.mxu0 %v2997
      %4000 = vmatpush1.bf16.msra.mxu0 %v2996
      %4001 = vmatprep.subr.bf16.mxu0 %v3005
      %4002 = vmatpush1.bf16.msra.mxu0 %v3004
      %4003 = vmatprep.subr.bf16.mxu0 %v3013
      %4004 = vmatpush1.bf16.msra.mxu0 %v3012
      %4005 = vmatprep.subr.bf16.mxu0 %v3021
      %4006 = vmatpush1.bf16.msra.mxu0 %v3020
      %4007 = vmatprep.subr.bf16.mxu0 %v3029
      %4008 = vmatpush1.bf16.msra.mxu0 %v3028
      %4009 = vmatprep.subr.bf16.mxu0 %v3037
      %4010 = vmatpush1.bf16.msra.mxu0 %v3036
      %4011 = vmatprep.subr.bf16.mxu0 %v3045
      %4012 = vmatpush1.bf16.msra.mxu0 %v3044
      %4013 = vmatprep.subr.bf16.mxu0 %v3053
      %4014 = vmatpush1.bf16.msra.mxu0 %v3052
      %4015 = vmatprep.subr.bf16.mxu0 %v3061
      %4016 = vmatpush1.bf16.msra.mxu0 %v3060
      %4017 = vmatprep.subr.bf16.mxu0 %v3069
      %4018 = vmatpush1.bf16.msra.mxu0 %v3068
      %4019 = vmatprep.subr.bf16.mxu0 %v3077
      %4020 = vmatpush1.bf16.msra.mxu0 %v3076
      %4021 = vmatprep.subr.bf16.mxu0 %v3085
      %4022 = vmatpush1.bf16.msra.mxu0 %v3084
      %4023 = vmatprep.subr.bf16.mxu0 %v3093
      %4024 = vmatpush1.bf16.msra.mxu0 %v3092
      %4025 = vmatprep.subr.bf16.mxu0 %v3101
      %4026 = vmatpush1.bf16.msra.mxu0 %v3100
      %4027 = vmatprep.subr.bf16.mxu0 %v3109
      %4028 = vmatpush1.bf16.msra.mxu0 %v3108
      %4029 = vmatprep.mubr.bf16.mxu0 %v488
      %4030 = vmatmul.mubr.bf16.gmra.mrb[0].mxu0 %v487
      %v4031 = vpop.f32.mrb[0].mxu0
      %v4032 = vadd.f32 %v3979, %v4031
      %v4033 = vpop.f32.mrb[0].mxu0
      %v4034 = vadd.f32 %v3981, %v4033
      %v4035 = vpop.f32.mrb[0].mxu0
      %v4036 = vadd.f32 %v3983, %v4035
      %v4037 = vpop.f32.mrb[0].mxu0
      %v4038 = vadd.f32 %v3985, %v4037
      %4039 = vmatprep.mubr.bf16.mxu0 %v553
      %4040 = vmatmul.mubr.bf16.gmra.mrb[0].mxu0 %v552
      %v4041 = vpop.f32.mrb[0].mxu0
      %v4042 = vadd.f32 %v3989, %v4041
      %v4043 = vpop.f32.mrb[0].mxu0
      %v4044 = vadd.f32 %v3991, %v4043
      %v4045 = vpop.f32.mrb[0].mxu0
      %v4046 = vadd.f32 %v3993, %v4045
      %v4047 = vpop.f32.mrb[0].mxu0
      %v4048 = vadd.f32 %v3995, %v4047
      %4049 = vdwg.mxu0
      %4050 = vmatprep.subr.bf16.mxu0 %v2607
      %4051 = vmatpush1.bf16.msra.mxu0 %v2606
      %4052 = vmatprep.subr.bf16.mxu0 %v2615
      %4053 = vmatpush1.bf16.msra.mxu0 %v2614
      %4054 = vmatprep.subr.bf16.mxu0 %v2623
      %4055 = vmatpush1.bf16.msra.mxu0 %v2622
      %4056 = vmatprep.subr.bf16.mxu0 %v2631
      %4057 = vmatpush1.bf16.msra.mxu0 %v2630
      %4058 = vmatprep.subr.bf16.mxu0 %v2639
      %4059 = vmatpush1.bf16.msra.mxu0 %v2638
      %4060 = vmatprep.subr.bf16.mxu0 %v2647
      %4061 = vmatpush1.bf16.msra.mxu0 %v2646
      %4062 = vmatprep.subr.bf16.mxu0 %v2655
      %4063 = vmatpush1.bf16.msra.mxu0 %v2654
      %4064 = vmatprep.subr.bf16.mxu0 %v2663
      %4065 = vmatpush1.bf16.msra.mxu0 %v2662
      %4066 = vmatprep.subr.bf16.mxu0 %v2671
      %4067 = vmatpush1.bf16.msra.mxu0 %v2670
      %4068 = vmatprep.subr.bf16.mxu0 %v2679
      %4069 = vmatpush1.bf16.msra.mxu0 %v2678
      %4070 = vmatprep.subr.bf16.mxu0 %v2687
      %4071 = vmatpush1.bf16.msra.mxu0 %v2686
      %4072 = vmatprep.subr.bf16.mxu0 %v2695
      %4073 = vmatpush1.bf16.msra.mxu0 %v2694
      %4074 = vmatprep.subr.bf16.mxu0 %v2703
      %4075 = vmatpush1.bf16.msra.mxu0 %v2702
      %4076 = vmatprep.subr.bf16.mxu0 %v2711
      %4077 = vmatpush1.bf16.msra.mxu0 %v2710
      %4078 = vmatprep.subr.bf16.mxu0 %v2719
      %4079 = vmatpush1.bf16.msra.mxu0 %v2718
      %4080 = vmatprep.subr.bf16.mxu0 %v2727
      %4081 = vmatpush1.bf16.msra.mxu0 %v2726
      %4082 = vmatprep.mubr.bf16.mxu0 %v482
      %4083 = vmatmul.mubr.bf16.gmra.mrb[0].mxu0 %v481
      %v4084 = vpop.f32.mrb[0].mxu0
      %v4085 = vadd.f32 0.0, %v4084
      %v4086 = vpop.f32.mrb[0].mxu0
      %v4087 = vadd.f32 0.0, %v4086
      %v4088 = vpop.f32.mrb[0].mxu0
      %v4089 = vadd.f32 0.0, %v4088
      %v4090 = vpop.f32.mrb[0].mxu0
      %v4091 = vadd.f32 0.0, %v4090
      %4092 = vmatprep.mubr.bf16.mxu0 %v547
      %4093 = vmatmul.mubr.bf16.gmra.mrb[0].mxu0 %v546
      %v4094 = vpop.f32.mrb[0].mxu0
      %v4095 = vadd.f32 0.0, %v4094
      %v4096 = vpop.f32.mrb[0].mxu0
      %v4097 = vadd.f32 0.0, %v4096
      %v4098 = vpop.f32.mrb[0].mxu0
      %v4099 = vadd.f32 0.0, %v4098
      %v4100 = vpop.f32.mrb[0].mxu0
      %v4101 = vadd.f32 0.0, %v4100
      %4102 = vdwg.mxu0
      %4103 = vmatprep.subr.bf16.mxu0 %v2735
      %4104 = vmatpush1.bf16.msra.mxu0 %v2734
      %4105 = vmatprep.subr.bf16.mxu0 %v2743
      %4106 = vmatpush1.bf16.msra.mxu0 %v2742
      %4107 = vmatprep.subr.bf16.mxu0 %v2751
      %4108 = vmatpush1.bf16.msra.mxu0 %v2750
      %4109 = vmatprep.subr.bf16.mxu0 %v2759
      %4110 = vmatpush1.bf16.msra.mxu0 %v2758
      %4111 = vmatprep.subr.bf16.mxu0 %v2767
      %4112 = vmatpush1.bf16.msra.mxu0 %v2766
      %4113 = vmatprep.subr.bf16.mxu0 %v2775
      %4114 = vmatpush1.bf16.msra.mxu0 %v2774
      %4115 = vmatprep.subr.bf16.mxu0 %v2783
      %4116 = vmatpush1.bf16.msra.mxu0 %v2782
      %4117 = vmatprep.subr.bf16.mxu0 %v2791
      %4118 = vmatpush1.bf16.msra.mxu0 %v2790
      %4119 = vmatprep.subr.bf16.mxu0 %v2799
      %4120 = vmatpush1.bf16.msra.mxu0 %v2798
      %4121 = vmatprep.subr.bf16.mxu0 %v2807
      %4122 = vmatpush1.bf16.msra.mxu0 %v2806
      %4123 = vmatprep.subr.bf16.mxu0 %v2815
      %4124 = vmatpush1.bf16.msra.mxu0 %v2814
      %4125 = vmatprep.subr.bf16.mxu0 %v2823
      %4126 = vmatpush1.bf16.msra.mxu0 %v2822
      %4127 = vmatprep.subr.bf16.mxu0 %v2831
      %4128 = vmatpush1.bf16.msra.mxu0 %v2830
      %4129 = vmatprep.subr.bf16.mxu0 %v2839
      %4130 = vmatpush1.bf16.msra.mxu0 %v2838
      %4131 = vmatprep.subr.bf16.mxu0 %v2847
      %4132 = vmatpush1.bf16.msra.mxu0 %v2846
      %4133 = vmatprep.subr.bf16.mxu0 %v2855
      %4134 = vmatpush1.bf16.msra.mxu0 %v2854
      %4135 = vmatprep.mubr.bf16.mxu0 %v484
      %4136 = vmatmul.mubr.bf16.gmra.mrb[0].mxu0 %v483
      %v4137 = vpop.f32.mrb[0].mxu0
      %v4138 = vadd.f32 %v4085, %v4137
      %v4139 = vpop.f32.mrb[0].mxu0
      %v4140 = vadd.f32 %v4087, %v4139
      %v4141 = vpop.f32.mrb[0].mxu0
      %v4142 = vadd.f32 %v4089, %v4141
      %v4143 = vpop.f32.mrb[0].mxu0
      %v4144 = vadd.f32 %v4091, %v4143
      %4145 = vmatprep.mubr.bf16.mxu0 %v549
      %4146 = vmatmul.mubr.bf16.gmra.mrb[0].mxu0 %v548
      %v4147 = vpop.f32.mrb[0].mxu0
      %v4148 = vadd.f32 %v4095, %v4147
      %v4149 = vpop.f32.mrb[0].mxu0
      %v4150 = vadd.f32 %v4097, %v4149
      %v4151 = vpop.f32.mrb[0].mxu0
      %v4152 = vadd.f32 %v4099, %v4151
      %v4153 = vpop.f32.mrb[0].mxu0
      %v4154 = vadd.f32 %v4101, %v4153
      %4155 = vdwg.mxu0
      %4156 = vmatprep.subr.bf16.mxu0 %v2863
      %4157 = vmatpush1.bf16.msra.mxu0 %v2862
      %4158 = vmatprep.subr.bf16.mxu0 %v2871
      %4159 = vmatpush1.bf16.msra.mxu0 %v2870
      %4160 = vmatprep.subr.bf16.mxu0 %v2879
      %4161 = vmatpush1.bf16.msra.mxu0 %v2878
      %4162 = vmatprep.subr.bf16.mxu0 %v2887
      %4163 = vmatpush1.bf16.msra.mxu0 %v2886
      %4164 = vmatprep.subr.bf16.mxu0 %v2895
      %4165 = vmatpush1.bf16.msra.mxu0 %v2894
      %4166 = vmatprep.subr.bf16.mxu0 %v2903
      %4167 = vmatpush1.bf16.msra.mxu0 %v2902
      %4168 = vmatprep.subr.bf16.mxu0 %v2911
      %4169 = vmatpush1.bf16.msra.mxu0 %v2910
      %4170 = vmatprep.subr.bf16.mxu0 %v2919
      %4171 = vmatpush1.bf16.msra.mxu0 %v2918
      %4172 = vmatprep.subr.bf16.mxu0 %v2927
      %4173 = vmatpush1.bf16.msra.mxu0 %v2926
      %4174 = vmatprep.subr.bf16.mxu0 %v2935
      %4175 = vmatpush1.bf16.msra.mxu0 %v2934
      %4176 = vmatprep.subr.bf16.mxu0 %v2943
      %4177 = vmatpush1.bf16.msra.mxu0 %v2942
      %4178 = vmatprep.subr.bf16.mxu0 %v2951
      %4179 = vmatpush1.bf16.msra.mxu0 %v2950
      %4180 = vmatprep.subr.bf16.mxu0 %v2959
      %4181 = vmatpush1.bf16.msra.mxu0 %v2958
      %4182 = vmatprep.subr.bf16.mxu0 %v2967
      %4183 = vmatpush1.bf16.msra.mxu0 %v2966
      %4184 = vmatprep.subr.bf16.mxu0 %v2975
      %4185 = vmatpush1.bf16.msra.mxu0 %v2974
      %4186 = vmatprep.subr.bf16.mxu0 %v2983
      %4187 = vmatpush1.bf16.msra.mxu0 %v2982
      %4188 = vmatprep.mubr.bf16.mxu0 %v486
      %4189 = vmatmul.mubr.bf16.gmra.mrb[0].mxu0 %v485
      %v4190 = vpop.f32.mrb[0].mxu0
      %v4191 = vadd.f32 %v4138, %v4190
      %v4192 = vpop.f32.mrb[0].mxu0
      %v4193 = vadd.f32 %v4140, %v4192
      %v4194 = vpop.f32.mrb[0].mxu0
      %v4195 = vadd.f32 %v4142, %v4194
      %v4196 = vpop.f32.mrb[0].mxu0
      %v4197 = vadd.f32 %v4144, %v4196
      %4198 = vmatprep.mubr.bf16.mxu0 %v551
      %4199 = vmatmul.mubr.bf16.gmra.mrb[0].mxu0 %v550
      %v4200 = vpop.f32.mrb[0].mxu0
      %v4201 = vadd.f32 %v4148, %v4200
      %v4202 = vpop.f32.mrb[0].mxu0
      %v4203 = vadd.f32 %v4150, %v4202
      %v4204 = vpop.f32.mrb[0].mxu0
      %v4205 = vadd.f32 %v4152, %v4204
      %v4206 = vpop.f32.mrb[0].mxu0
      %v4207 = vadd.f32 %v4154, %v4206
      %4208 = vdwg.mxu0
      %4209 = vmatprep.subr.bf16.mxu0 %v2991
      %4210 = vmatpush1.bf16.msra.mxu0 %v2990
      %4211 = vmatprep.subr.bf16.mxu0 %v2999
      %4212 = vmatpush1.bf16.msra.mxu0 %v2998
      %4213 = vmatprep.subr.bf16.mxu0 %v3007
      %4214 = vmatpush1.bf16.msra.mxu0 %v3006
      %4215 = vmatprep.subr.bf16.mxu0 %v3015
      %4216 = vmatpush1.bf16.msra.mxu0 %v3014
      %4217 = vmatprep.subr.bf16.mxu0 %v3023
      %4218 = vmatpush1.bf16.msra.mxu0 %v3022
      %4219 = vmatprep.subr.bf16.mxu0 %v3031
      %4220 = vmatpush1.bf16.msra.mxu0 %v3030
      %4221 = vmatprep.subr.bf16.mxu0 %v3039
      %4222 = vmatpush1.bf16.msra.mxu0 %v3038
      %4223 = vmatprep.subr.bf16.mxu0 %v3047
      %4224 = vmatpush1.bf16.msra.mxu0 %v3046
      %4225 = vmatprep.subr.bf16.mxu0 %v3055
      %4226 = vmatpush1.bf16.msra.mxu0 %v3054
      %4227 = vmatprep.subr.bf16.mxu0 %v3063
      %4228 = vmatpush1.bf16.msra.mxu0 %v3062
      %4229 = vmatprep.subr.bf16.mxu0 %v3071
      %4230 = vmatpush1.bf16.msra.mxu0 %v3070
      %4231 = vmatprep.subr.bf16.mxu0 %v3079
      %4232 = vmatpush1.bf16.msra.mxu0 %v3078
      %4233 = vmatprep.subr.bf16.mxu0 %v3087
      %4234 = vmatpush1.bf16.msra.mxu0 %v3086
      %4235 = vmatprep.subr.bf16.mxu0 %v3095
      %4236 = vmatpush1.bf16.msra.mxu0 %v3094
      %4237 = vmatprep.subr.bf16.mxu0 %v3103
      %4238 = vmatpush1.bf16.msra.mxu0 %v3102
      %4239 = vmatprep.subr.bf16.mxu0 %v3111
      %4240 = vmatpush1.bf16.msra.mxu0 %v3110
      %4241 = vmatprep.mubr.bf16.mxu0 %v488
      %4242 = vmatmul.mubr.bf16.gmra.mrb[0].mxu0 %v487
      %v4243 = vpop.f32.mrb[0].mxu0
      %v4244 = vadd.f32 %v4191, %v4243
      %v4245 = vpop.f32.mrb[0].mxu0
      %v4246 = vadd.f32 %v4193, %v4245
      %v4247 = vpop.f32.mrb[0].mxu0
      %v4248 = vadd.f32 %v4195, %v4247
      %v4249 = vpop.f32.mrb[0].mxu0
      %v4250 = vadd.f32 %v4197, %v4249
      %4251 = vmatprep.mubr.bf16.mxu0 %v553
      %4252 = vmatmul.mubr.bf16.gmra.mrb[0].mxu0 %v552
      %v4253 = vpop.f32.mrb[0].mxu0
      %v4254 = vadd.f32 %v4201, %v4253
      %v4255 = vpop.f32.mrb[0].mxu0
      %v4256 = vadd.f32 %v4203, %v4255
      %v4257 = vpop.f32.mrb[0].mxu0
      %v4258 = vadd.f32 %v4205, %v4257
      %v4259 = vpop.f32.mrb[0].mxu0
      %v4260 = vadd.f32 %v4207, %v4259
      %4261 = vdwg.mxu0
      %4262 = vmatprep.subr.bf16.mxu0 %v2609
      %4263 = vmatpush1.bf16.msra.mxu0 %v2608
      %4264 = vmatprep.subr.bf16.mxu0 %v2617
      %4265 = vmatpush1.bf16.msra.mxu0 %v2616
      %4266 = vmatprep.subr.bf16.mxu0 %v2625
      %4267 = vmatpush1.bf16.msra.mxu0 %v2624
      %4268 = vmatprep.subr.bf16.mxu0 %v2633
      %4269 = vmatpush1.bf16.msra.mxu0 %v2632
      %4270 = vmatprep.subr.bf16.mxu0 %v2641
      %4271 = vmatpush1.bf16.msra.mxu0 %v2640
      %4272 = vmatprep.subr.bf16.mxu0 %v2649
      %4273 = vmatpush1.bf16.msra.mxu0 %v2648
      %4274 = vmatprep.subr.bf16.mxu0 %v2657
      %4275 = vmatpush1.bf16.msra.mxu0 %v2656
      %4276 = vmatprep.subr.bf16.mxu0 %v2665
      %4277 = vmatpush1.bf16.msra.mxu0 %v2664
      %4278 = vmatprep.subr.bf16.mxu0 %v2673
      %4279 = vmatpush1.bf16.msra.mxu0 %v2672
      %4280 = vmatprep.subr.bf16.mxu0 %v2681
      %4281 = vmatpush1.bf16.msra.mxu0 %v2680
      %4282 = vmatprep.subr.bf16.mxu0 %v2689
      %4283 = vmatpush1.bf16.msra.mxu0 %v2688
      %4284 = vmatprep.subr.bf16.mxu0 %v2697
      %4285 = vmatpush1.bf16.msra.mxu0 %v2696
      %4286 = vmatprep.subr.bf16.mxu0 %v2705
      %4287 = vmatpush1.bf16.msra.mxu0 %v2704
      %4288 = vmatprep.subr.bf16.mxu0 %v2713
      %4289 = vmatpush1.bf16.msra.mxu0 %v2712
      %4290 = vmatprep.subr.bf16.mxu0 %v2721
      %4291 = vmatpush1.bf16.msra.mxu0 %v2720
      %4292 = vmatprep.subr.bf16.mxu0 %v2729
      %4293 = vmatpush1.bf16.msra.mxu0 %v2728
      %4294 = vmatprep.mubr.bf16.mxu0 %v482
      %4295 = vmatmul.mubr.bf16.gmra.mrb[0].mxu0 %v481
      %v4296 = vpop.f32.mrb[0].mxu0
      %v4297 = vadd.f32 0.0, %v4296
      %v4298 = vpop.f32.mrb[0].mxu0
      %v4299 = vadd.f32 0.0, %v4298
      %v4300 = vpop.f32.mrb[0].mxu0
      %v4301 = vadd.f32 0.0, %v4300
      %v4302 = vpop.f32.mrb[0].mxu0
      %v4303 = vadd.f32 0.0, %v4302
      %4304 = vmatprep.mubr.bf16.mxu0 %v547
      %4305 = vmatmul.mubr.bf16.gmra.mrb[0].mxu0 %v546
      %v4306 = vpop.f32.mrb[0].mxu0
      %v4307 = vadd.f32 0.0, %v4306
      %v4308 = vpop.f32.mrb[0].mxu0
      %v4309 = vadd.f32 0.0, %v4308
      %v4310 = vpop.f32.mrb[0].mxu0
      %v4311 = vadd.f32 0.0, %v4310
      %v4312 = vpop.f32.mrb[0].mxu0
      %v4313 = vadd.f32 0.0, %v4312
      %4314 = vdwg.mxu0
      %4315 = vmatprep.subr.bf16.mxu0 %v2737
      %4316 = vmatpush1.bf16.msra.mxu0 %v2736
      %4317 = vmatprep.subr.bf16.mxu0 %v2745
      %4318 = vmatpush1.bf16.msra.mxu0 %v2744
      %4319 = vmatprep.subr.bf16.mxu0 %v2753
      %4320 = vmatpush1.bf16.msra.mxu0 %v2752
      %4321 = vmatprep.subr.bf16.mxu0 %v2761
      %4322 = vmatpush1.bf16.msra.mxu0 %v2760
      %4323 = vmatprep.subr.bf16.mxu0 %v2769
      %4324 = vmatpush1.bf16.msra.mxu0 %v2768
      %4325 = vmatprep.subr.bf16.mxu0 %v2777
      %4326 = vmatpush1.bf16.msra.mxu0 %v2776
      %4327 = vmatprep.subr.bf16.mxu0 %v2785
      %4328 = vmatpush1.bf16.msra.mxu0 %v2784
      %4329 = vmatprep.subr.bf16.mxu0 %v2793
      %4330 = vmatpush1.bf16.msra.mxu0 %v2792
      %4331 = vmatprep.subr.bf16.mxu0 %v2801
      %4332 = vmatpush1.bf16.msra.mxu0 %v2800
      %4333 = vmatprep.subr.bf16.mxu0 %v2809
      %4334 = vmatpush1.bf16.msra.mxu0 %v2808
      %4335 = vmatprep.subr.bf16.mxu0 %v2817
      %4336 = vmatpush1.bf16.msra.mxu0 %v2816
      %4337 = vmatprep.subr.bf16.mxu0 %v2825
      %4338 = vmatpush1.bf16.msra.mxu0 %v2824
      %4339 = vmatprep.subr.bf16.mxu0 %v2833
      %4340 = vmatpush1.bf16.msra.mxu0 %v2832
      %4341 = vmatprep.subr.bf16.mxu0 %v2841
      %4342 = vmatpush1.bf16.msra.mxu0 %v2840
      %4343 = vmatprep.subr.bf16.mxu0 %v2849
      %4344 = vmatpush1.bf16.msra.mxu0 %v2848
      %4345 = vmatprep.subr.bf16.mxu0 %v2857
      %4346 = vmatpush1.bf16.msra.mxu0 %v2856
      %4347 = vmatprep.mubr.bf16.mxu0 %v484
      %4348 = vmatmul.mubr.bf16.gmra.mrb[0].mxu0 %v483
      %v4349 = vpop.f32.mrb[0].mxu0
      %v4350 = vadd.f32 %v4297, %v4349
      %v4351 = vpop.f32.mrb[0].mxu0
      %v4352 = vadd.f32 %v4299, %v4351
      %v4353 = vpop.f32.mrb[0].mxu0
      %v4354 = vadd.f32 %v4301, %v4353
      %v4355 = vpop.f32.mrb[0].mxu0
      %v4356 = vadd.f32 %v4303, %v4355
      %4357 = vmatprep.mubr.bf16.mxu0 %v549
      %4358 = vmatmul.mubr.bf16.gmra.mrb[0].mxu0 %v548
      %v4359 = vpop.f32.mrb[0].mxu0
      %v4360 = vadd.f32 %v4307, %v4359
      %v4361 = vpop.f32.mrb[0].mxu0
      %v4362 = vadd.f32 %v4309, %v4361
      %v4363 = vpop.f32.mrb[0].mxu0
      %v4364 = vadd.f32 %v4311, %v4363
      %v4365 = vpop.f32.mrb[0].mxu0
      %v4366 = vadd.f32 %v4313, %v4365
      %4367 = vdwg.mxu0
      %4368 = vmatprep.subr.bf16.mxu0 %v2865
      %4369 = vmatpush1.bf16.msra.mxu0 %v2864
      %4370 = vmatprep.subr.bf16.mxu0 %v2873
      %4371 = vmatpush1.bf16.msra.mxu0 %v2872
      %4372 = vmatprep.subr.bf16.mxu0 %v2881
      %4373 = vmatpush1.bf16.msra.mxu0 %v2880
      %4374 = vmatprep.subr.bf16.mxu0 %v2889
      %4375 = vmatpush1.bf16.msra.mxu0 %v2888
      %4376 = vmatprep.subr.bf16.mxu0 %v2897
      %4377 = vmatpush1.bf16.msra.mxu0 %v2896
      %4378 = vmatprep.subr.bf16.mxu0 %v2905
      %4379 = vmatpush1.bf16.msra.mxu0 %v2904
      %4380 = vmatprep.subr.bf16.mxu0 %v2913
      %4381 = vmatpush1.bf16.msra.mxu0 %v2912
      %4382 = vmatprep.subr.bf16.mxu0 %v2921
      %4383 = vmatpush1.bf16.msra.mxu0 %v2920
      %4384 = vmatprep.subr.bf16.mxu0 %v2929
      %4385 = vmatpush1.bf16.msra.mxu0 %v2928
      %4386 = vmatprep.subr.bf16.mxu0 %v2937
      %4387 = vmatpush1.bf16.msra.mxu0 %v2936
      %4388 = vmatprep.subr.bf16.mxu0 %v2945
      %4389 = vmatpush1.bf16.msra.mxu0 %v2944
      %4390 = vmatprep.subr.bf16.mxu0 %v2953
      %4391 = vmatpush1.bf16.msra.mxu0 %v2952
      %4392 = vmatprep.subr.bf16.mxu0 %v2961
      %4393 = vmatpush1.bf16.msra.mxu0 %v2960
      %4394 = vmatprep.subr.bf16.mxu0 %v2969
      %4395 = vmatpush1.bf16.msra.mxu0 %v2968
      %4396 = vmatprep.subr.bf16.mxu0 %v2977
      %4397 = vmatpush1.bf16.msra.mxu0 %v2976
      %4398 = vmatprep.subr.bf16.mxu0 %v2985
      %4399 = vmatpush1.bf16.msra.mxu0 %v2984
      %4400 = vmatprep.mubr.bf16.mxu0 %v486
      %4401 = vmatmul.mubr.bf16.gmra.mrb[0].mxu0 %v485
      %v4402 = vpop.f32.mrb[0].mxu0
      %v4403 = vadd.f32 %v4350, %v4402
      %v4404 = vpop.f32.mrb[0].mxu0
      %v4405 = vadd.f32 %v4352, %v4404
      %v4406 = vpop.f32.mrb[0].mxu0
      %v4407 = vadd.f32 %v4354, %v4406
      %v4408 = vpop.f32.mrb[0].mxu0
      %v4409 = vadd.f32 %v4356, %v4408
      %4410 = vmatprep.mubr.bf16.mxu0 %v551
      %4411 = vmatmul.mubr.bf16.gmra.mrb[0].mxu0 %v550
      %v4412 = vpop.f32.mrb[0].mxu0
      %v4413 = vadd.f32 %v4360, %v4412
      %v4414 = vpop.f32.mrb[0].mxu0
      %v4415 = vadd.f32 %v4362, %v4414
      %v4416 = vpop.f32.mrb[0].mxu0
      %v4417 = vadd.f32 %v4364, %v4416
      %v4418 = vpop.f32.mrb[0].mxu0
      %v4419 = vadd.f32 %v4366, %v4418
      %4420 = vdwg.mxu0
      %4421 = vmatprep.subr.bf16.mxu0 %v2993
      %4422 = vmatpush1.bf16.msra.mxu0 %v2992
      %4423 = vmatprep.subr.bf16.mxu0 %v3001
      %4424 = vmatpush1.bf16.msra.mxu0 %v3000
      %4425 = vmatprep.subr.bf16.mxu0 %v3009
      %4426 = vmatpush1.bf16.msra.mxu0 %v3008
      %4427 = vmatprep.subr.bf16.mxu0 %v3017
      %4428 = vmatpush1.bf16.msra.mxu0 %v3016
      %4429 = vmatprep.subr.bf16.mxu0 %v3025
      %4430 = vmatpush1.bf16.msra.mxu0 %v3024
      %4431 = vmatprep.subr.bf16.mxu0 %v3033
      %4432 = vmatpush1.bf16.msra.mxu0 %v3032
      %4433 = vmatprep.subr.bf16.mxu0 %v3041
      %4434 = vmatpush1.bf16.msra.mxu0 %v3040
      %4435 = vmatprep.subr.bf16.mxu0 %v3049
      %4436 = vmatpush1.bf16.msra.mxu0 %v3048
      %4437 = vmatprep.subr.bf16.mxu0 %v3057
      %4438 = vmatpush1.bf16.msra.mxu0 %v3056
      %4439 = vmatprep.subr.bf16.mxu0 %v3065
      %4440 = vmatpush1.bf16.msra.mxu0 %v3064
      %4441 = vmatprep.subr.bf16.mxu0 %v3073
      %4442 = vmatpush1.bf16.msra.mxu0 %v3072
      %4443 = vmatprep.subr.bf16.mxu0 %v3081
      %4444 = vmatpush1.bf16.msra.mxu0 %v3080
      %4445 = vmatprep.subr.bf16.mxu0 %v3089
      %4446 = vmatpush1.bf16.msra.mxu0 %v3088
      %4447 = vmatprep.subr.bf16.mxu0 %v3097
      %4448 = vmatpush1.bf16.msra.mxu0 %v3096
      %4449 = vmatprep.subr.bf16.mxu0 %v3105
      %4450 = vmatpush1.bf16.msra.mxu0 %v3104
      %4451 = vmatprep.subr.bf16.mxu0 %v3113
      %4452 = vmatpush1.bf16.msra.mxu0 %v3112
      %4453 = vmatprep.mubr.bf16.mxu0 %v488
      %4454 = vmatmul.mubr.bf16.gmra.mrb[0].mxu0 %v487
      %v4455 = vpop.f32.mrb[0].mxu0
      %v4456 = vadd.f32 %v4403, %v4455
      %v4457 = vpop.f32.mrb[0].mxu0
      %v4458 = vadd.f32 %v4405, %v4457
      %v4459 = vpop.f32.mrb[0].mxu0
      %v4460 = vadd.f32 %v4407, %v4459
      %v4461 = vpop.f32.mrb[0].mxu0
      %v4462 = vadd.f32 %v4409, %v4461
      %4463 = vmatprep.mubr.bf16.mxu0 %v553
      %4464 = vmatmul.mubr.bf16.gmra.mrb[0].mxu0 %v552
      %v4465 = vpop.f32.mrb[0].mxu0
      %v4466 = vadd.f32 %v4413, %v4465
      %v4467 = vpop.f32.mrb[0].mxu0
      %v4468 = vadd.f32 %v4415, %v4467
      %v4469 = vpop.f32.mrb[0].mxu0
      %v4470 = vadd.f32 %v4417, %v4469
      %v4471 = vpop.f32.mrb[0].mxu0
      %v4472 = vadd.f32 %v4419, %v4471
      %4473 = vdwg.mxu0
      %v4474 = vmul.f32 %v3820, %v3820
      %v4475 = vmul.f32 %v3822, %v3822
      %v4476 = vmul.f32 %v4032, %v4032
      %v4477 = vmul.f32 %v4034, %v4034
      %v4478 = vmul.f32 %v3824, %v3824
      %v4479 = vmul.f32 %v3826, %v3826
      %v4480 = vmul.f32 %v4036, %v4036
      %v4481 = vmul.f32 %v4038, %v4038
      %v4482 = vmul.f32 %v3830, %v3830
      %v4483 = vmul.f32 %v3832, %v3832
      %v4484 = vmul.f32 %v4042, %v4042
      %v4485 = vmul.f32 %v4044, %v4044
      %v4486 = vmul.f32 %v3834, %v3834
      %v4487 = vmul.f32 %v3836, %v3836
      %v4488 = vmul.f32 %v4046, %v4046
      %v4489 = vmul.f32 %v4048, %v4048
      %v4490 = vmul.f32 %v4244, %v4244
      %v4491 = vmul.f32 %v4246, %v4246
      %v4492 = vmul.f32 %v4456, %v4456
      %v4493 = vmul.f32 %v4458, %v4458
      %v4494 = vmul.f32 %v4248, %v4248
      %v4495 = vmul.f32 %v4250, %v4250
      %v4496 = vmul.f32 %v4460, %v4460
      %v4497 = vmul.f32 %v4462, %v4462
      %v4498 = vmul.f32 %v4254, %v4254
      %v4499 = vmul.f32 %v4256, %v4256
      %v4500 = vmul.f32 %v4466, %v4466
      %v4501 = vmul.f32 %v4468, %v4468
      %v4502 = vmul.f32 %v4258, %v4258
      %v4503 = vmul.f32 %v4260, %v4260
      %v4504 = vmul.f32 %v4470, %v4470
      %v4505 = vmul.f32 %v4472, %v4472
      %v4506 = vadd.f32 %v4474, %v4490
      %v4507 = vadd.f32 %v4475, %v4491
      %v4508 = vadd.f32 %v4476, %v4492
      %v4509 = vadd.f32 %v4477, %v4493
      %v4510 = vadd.f32 %v4478, %v4494
      %v4511 = vadd.f32 %v4479, %v4495
      %v4512 = vadd.f32 %v4480, %v4496
      %v4513 = vadd.f32 %v4481, %v4497
      %v4514 = vadd.f32 %v4482, %v4498
      %v4515 = vadd.f32 %v4483, %v4499
      %v4516 = vadd.f32 %v4484, %v4500
      %v4517 = vadd.f32 %v4485, %v4501
      %v4518 = vadd.f32 %v4486, %v4502
      %v4519 = vadd.f32 %v4487, %v4503
      %v4520 = vadd.f32 %v4488, %v4504
      %v4521 = vadd.f32 %v4489, %v4505
      %v4522 = vpack.c.bf16 %v4510, %v4506
      %v4523 = vpack.c.bf16 %v4511, %v4507
      %v4524 = vpack.c.bf16 %v4512, %v4508
      %v4525 = vpack.c.bf16 %v4513, %v4509
      %v4526 = vpack.c.bf16 %v4518, %v4514
      %v4527 = vpack.c.bf16 %v4519, %v4515
      %v4528 = vpack.c.bf16 %v4520, %v4516
      %v4529 = vpack.c.bf16 %v4521, %v4517
      %v4530 = vld [vmem:[%s5] sm:$0xf]
      %v4531 = vld [vmem:[%s5 + $0x4] sm:$0xf]
      %v4532 = vld [vmem:[%s5 + $0x8] sm:$0xf]
      %v4533 = vld [vmem:[%s5 + $0xc] sm:$0xf]
      %v4534 = vld [vmem:[%s5 + $0x10] sm:$0xf]
      %v4535 = vld [vmem:[%s5 + $0x14] sm:$0xf]
      %v4536 = vld [vmem:[%s5 + $0x18] sm:$0xf]
      %v4537 = vld [vmem:[%s5 + $0x1c] sm:$0xf]
      %v4538 = vld [vmem:[%s5 + $0x20] sm:$0xf]
      %v4539 = vld [vmem:[%s5 + $0x24] sm:$0xf]
      %v4540 = vld [vmem:[%s5 + $0x28] sm:$0xf]
      %v4541 = vld [vmem:[%s5 + $0x2c] sm:$0xf]
      %v4542 = vld [vmem:[%s5 + $0x30] sm:$0xf]
      %v4543 = vld [vmem:[%s5 + $0x34] sm:$0xf]
      %v4544 = vld [vmem:[%s5 + $0x38] sm:$0xf]
      %v4545 = vld [vmem:[%s5 + $0x3c] sm:$0xf]
      %v4546 = vld [vmem:[%s5 + $0x40] sm:$0xf]
      %v4547 = vld [vmem:[%s5 + $0x44] sm:$0xf]
      %v4548 = vld [vmem:[%s5 + $0x48] sm:$0xf]
      %v4549 = vld [vmem:[%s5 + $0x4c] sm:$0xf]
      %v4550 = vld [vmem:[%s5 + $0x50] sm:$0xf]
      %v4551 = vld [vmem:[%s5 + $0x54] sm:$0xf]
      %v4552 = vld [vmem:[%s5 + $0x58] sm:$0xf]
      %v4553 = vld [vmem:[%s5 + $0x5c] sm:$0xf]
      %v4554 = vld [vmem:[%s5 + $0x60] sm:$0xf]
      %v4555 = vld [vmem:[%s5 + $0x64] sm:$0xf]
      %v4556 = vld [vmem:[%s5 + $0x68] sm:$0xf]
      %v4557 = vld [vmem:[%s5 + $0x6c] sm:$0xf]
      %v4558 = vld [vmem:[%s5 + $0x70] sm:$0xf]
      %v4559 = vld [vmem:[%s5 + $0x74] sm:$0xf]
      %v4560 = vld [vmem:[%s5 + $0x78] sm:$0xf]
      %v4561 = vld [vmem:[%s5 + $0x7c] sm:$0xf]
      %v4562 = vld [vmem:[%s5 + $0x80] sm:$0xf]
      %v4563 = vld [vmem:[%s5 + $0x84] sm:$0xf]
      %v4564 = vld [vmem:[%s5 + $0x88] sm:$0xf]
      %v4565 = vld [vmem:[%s5 + $0x8c] sm:$0xf]
      %v4566 = vld [vmem:[%s5 + $0x90] sm:$0xf]
      %v4567 = vld [vmem:[%s5 + $0x94] sm:$0xf]
      %v4568 = vld [vmem:[%s5 + $0x98] sm:$0xf]
      %v4569 = vld [vmem:[%s5 + $0x9c] sm:$0xf]
      %v4570 = vld [vmem:[%s5 + $0xa0] sm:$0xf]
      %v4571 = vld [vmem:[%s5 + $0xa4] sm:$0xf]
      %v4572 = vld [vmem:[%s5 + $0xa8] sm:$0xf]
      %v4573 = vld [vmem:[%s5 + $0xac] sm:$0xf]
      %v4574 = vld [vmem:[%s5 + $0xb0] sm:$0xf]
      %v4575 = vld [vmem:[%s5 + $0xb4] sm:$0xf]
      %v4576 = vld [vmem:[%s5 + $0xb8] sm:$0xf]
      %v4577 = vld [vmem:[%s5 + $0xbc] sm:$0xf]
      %v4578 = vld [vmem:[%s5 + $0xc0] sm:$0xf]
      %v4579 = vld [vmem:[%s5 + $0xc4] sm:$0xf]
      %v4580 = vld [vmem:[%s5 + $0xc8] sm:$0xf]
      %v4581 = vld [vmem:[%s5 + $0xcc] sm:$0xf]
      %v4582 = vld [vmem:[%s5 + $0xd0] sm:$0xf]
      %v4583 = vld [vmem:[%s5 + $0xd4] sm:$0xf]
      %v4584 = vld [vmem:[%s5 + $0xd8] sm:$0xf]
      %v4585 = vld [vmem:[%s5 + $0xdc] sm:$0xf]
      %v4586 = vld [vmem:[%s5 + $0xe0] sm:$0xf]
      %v4587 = vld [vmem:[%s5 + $0xe4] sm:$0xf]
      %v4588 = vld [vmem:[%s5 + $0xe8] sm:$0xf]
      %v4589 = vld [vmem:[%s5 + $0xec] sm:$0xf]
      %v4590 = vld [vmem:[%s5 + $0xf0] sm:$0xf]
      %v4591 = vld [vmem:[%s5 + $0xf4] sm:$0xf]
      %v4592 = vld [vmem:[%s5 + $0xf8] sm:$0xf]
      %v4593 = vld [vmem:[%s5 + $0xfc] sm:$0xf]
      %v4658 = vunpack.c.l.b16 %v4530
      %v4659 = vunpack.c.l.b16 %v4531
      %v4660 = vunpack.c.l.b16 %v4532
      %v4661 = vunpack.c.l.b16 %v4533
      %v4662 = vunpack.c.l.b16 %v4534
      %v4663 = vunpack.c.l.b16 %v4535
      %v4664 = vunpack.c.l.b16 %v4536
      %v4665 = vunpack.c.l.b16 %v4537
      %v4666 = vunpack.c.l.b16 %v4538
      %v4667 = vunpack.c.l.b16 %v4539
      %v4668 = vunpack.c.l.b16 %v4540
      %v4669 = vunpack.c.l.b16 %v4541
      %v4670 = vunpack.c.l.b16 %v4542
      %v4671 = vunpack.c.l.b16 %v4543
      %v4672 = vunpack.c.l.b16 %v4544
      %v4673 = vunpack.c.l.b16 %v4545
      %v4674 = vunpack.c.l.b16 %v4546
      %v4675 = vunpack.c.l.b16 %v4547
      %v4676 = vunpack.c.l.b16 %v4548
      %v4677 = vunpack.c.l.b16 %v4549
      %v4678 = vunpack.c.l.b16 %v4550
      %v4679 = vunpack.c.l.b16 %v4551
      %v4680 = vunpack.c.l.b16 %v4552
      %v4681 = vunpack.c.l.b16 %v4553
      %v4682 = vunpack.c.l.b16 %v4554
      %v4683 = vunpack.c.l.b16 %v4555
      %v4684 = vunpack.c.l.b16 %v4556
      %v4685 = vunpack.c.l.b16 %v4557
      %v4686 = vunpack.c.l.b16 %v4558
      %v4687 = vunpack.c.l.b16 %v4559
      %v4688 = vunpack.c.l.b16 %v4560
      %v4689 = vunpack.c.l.b16 %v4561
      %v4690 = vunpack.c.l.b16 %v4562
      %v4691 = vunpack.c.l.b16 %v4563
      %v4692 = vunpack.c.l.b16 %v4564
      %v4693 = vunpack.c.l.b16 %v4565
      %v4694 = vunpack.c.l.b16 %v4566
      %v4695 = vunpack.c.l.b16 %v4567
      %v4696 = vunpack.c.l.b16 %v4568
      %v4697 = vunpack.c.l.b16 %v4569
      %v4698 = vunpack.c.l.b16 %v4570
      %v4699 = vunpack.c.l.b16 %v4571
      %v4700 = vunpack.c.l.b16 %v4572
      %v4701 = vunpack.c.l.b16 %v4573
      %v4702 = vunpack.c.l.b16 %v4574
      %v4703 = vunpack.c.l.b16 %v4575
      %v4704 = vunpack.c.l.b16 %v4576
      %v4705 = vunpack.c.l.b16 %v4577
      %v4706 = vunpack.c.l.b16 %v4578
      %v4707 = vunpack.c.l.b16 %v4579
      %v4708 = vunpack.c.l.b16 %v4580
      %v4709 = vunpack.c.l.b16 %v4581
      %v4710 = vunpack.c.l.b16 %v4582
      %v4711 = vunpack.c.l.b16 %v4583
      %v4712 = vunpack.c.l.b16 %v4584
      %v4713 = vunpack.c.l.b16 %v4585
      %v4714 = vunpack.c.l.b16 %v4586
      %v4715 = vunpack.c.l.b16 %v4587
      %v4716 = vunpack.c.l.b16 %v4588
      %v4717 = vunpack.c.l.b16 %v4589
      %v4718 = vunpack.c.l.b16 %v4590
      %v4719 = vunpack.c.l.b16 %v4591
      %v4720 = vunpack.c.l.b16 %v4592
      %v4721 = vunpack.c.l.b16 %v4593
      %v4722 = vpack.c.b16 %v4659, %v4658
      %v4723 = vpack.c.b16 %v4661, %v4660
      %v4724 = vpack.c.b16 %v4663, %v4662
      %v4725 = vpack.c.b16 %v4665, %v4664
      %v4726 = vpack.c.b16 %v4667, %v4666
      %v4727 = vpack.c.b16 %v4669, %v4668
      %v4728 = vpack.c.b16 %v4671, %v4670
      %v4729 = vpack.c.b16 %v4673, %v4672
      %v4730 = vpack.c.b16 %v4675, %v4674
      %v4731 = vpack.c.b16 %v4677, %v4676
      %v4732 = vpack.c.b16 %v4679, %v4678
      %v4733 = vpack.c.b16 %v4681, %v4680
      %v4734 = vpack.c.b16 %v4683, %v4682
      %v4735 = vpack.c.b16 %v4685, %v4684
      %v4736 = vpack.c.b16 %v4687, %v4686
      %v4737 = vpack.c.b16 %v4689, %v4688
      %v4738 = vpack.c.b16 %v4691, %v4690
      %v4739 = vpack.c.b16 %v4693, %v4692
      %v4740 = vpack.c.b16 %v4695, %v4694
      %v4741 = vpack.c.b16 %v4697, %v4696
      %v4742 = vpack.c.b16 %v4699, %v4698
      %v4743 = vpack.c.b16 %v4701, %v4700
      %v4744 = vpack.c.b16 %v4703, %v4702
      %v4745 = vpack.c.b16 %v4705, %v4704
      %v4746 = vpack.c.b16 %v4707, %v4706
      %v4747 = vpack.c.b16 %v4709, %v4708
      %v4748 = vpack.c.b16 %v4711, %v4710
      %v4749 = vpack.c.b16 %v4713, %v4712
      %v4750 = vpack.c.b16 %v4715, %v4714
      %v4751 = vpack.c.b16 %v4717, %v4716
      %v4752 = vpack.c.b16 %v4719, %v4718
      %v4753 = vpack.c.b16 %v4721, %v4720
      %4786 = vmatprep.subr.bf16.mxu0 0
      %4787 = vmatpush1.bf16.msra.mxu0 %v4722
      %4788 = vmatprep.subr.bf16.mxu0 0
      %4789 = vmatpush1.bf16.msra.mxu0 %v4723
      %4790 = vmatprep.subr.bf16.mxu0 0
      %4791 = vmatpush1.bf16.msra.mxu0 %v4724
      %4792 = vmatprep.subr.bf16.mxu0 0
      %4793 = vmatpush1.bf16.msra.mxu0 %v4725
      %4794 = vmatprep.subr.bf16.mxu0 0
      %4795 = vmatpush1.bf16.msra.mxu0 %v4726
      %4796 = vmatprep.subr.bf16.mxu0 0
      %4797 = vmatpush1.bf16.msra.mxu0 %v4727
      %4798 = vmatprep.subr.bf16.mxu0 0
      %4799 = vmatpush1.bf16.msra.mxu0 %v4728
      %4800 = vmatprep.subr.bf16.mxu0 0
      %4801 = vmatpush1.bf16.msra.mxu0 %v4729
      %4802 = vmatprep.subr.bf16.mxu0 0
      %4803 = vmatpush1.bf16.msra.mxu0 %v4730
      %4804 = vmatprep.subr.bf16.mxu0 0
      %4805 = vmatpush1.bf16.msra.mxu0 %v4731
      %4806 = vmatprep.subr.bf16.mxu0 0
      %4807 = vmatpush1.bf16.msra.mxu0 %v4732
      %4808 = vmatprep.subr.bf16.mxu0 0
      %4809 = vmatpush1.bf16.msra.mxu0 %v4733
      %4810 = vmatprep.subr.bf16.mxu0 0
      %4811 = vmatpush1.bf16.msra.mxu0 %v4734
      %4812 = vmatprep.subr.bf16.mxu0 0
      %4813 = vmatpush1.bf16.msra.mxu0 %v4735
      %4814 = vmatprep.subr.bf16.mxu0 0
      %4815 = vmatpush1.bf16.msra.mxu0 %v4736
      %4816 = vmatprep.subr.bf16.mxu0 0
      %4817 = vmatpush1.bf16.msra.mxu0 %v4737
      %4818 = vmatprep.mubr.bf16.mxu0 %v4523
      %4819 = vmatmul.mubr.bf16.gmra.mrb[0].mxu0 %v4522
      %v4820 = vpop.f32.mrb[0].mxu0
      %v4821 = vadd.f32 1e-05, %v4820
      %v4822 = vpop.f32.mrb[0].mxu0
      %v4823 = vpop.f32.mrb[0].mxu0
      %v4824 = vadd.f32 1e-05, %v4823
      %v4825 = vpop.f32.mrb[0].mxu0
      %4826 = vmatprep.mubr.bf16.mxu0 %v4527
      %4827 = vmatmul.mubr.bf16.gmra.mrb[0].mxu0 %v4526
      %v4828 = vpop.f32.mrb[0].mxu0
      %v4829 = vadd.f32 1e-05, %v4828
      %v4830 = vpop.f32.mrb[0].mxu0
      %v4831 = vpop.f32.mrb[0].mxu0
      %v4832 = vadd.f32 1e-05, %v4831
      %v4833 = vpop.f32.mrb[0].mxu0
      %4834 = vdwg.mxu0
      %4835 = vmatprep.subr.bf16.mxu0 0
      %4836 = vmatpush1.bf16.msra.mxu0 %v4738
      %4837 = vmatprep.subr.bf16.mxu0 0
      %4838 = vmatpush1.bf16.msra.mxu0 %v4739
      %4839 = vmatprep.subr.bf16.mxu0 0
      %4840 = vmatpush1.bf16.msra.mxu0 %v4740
      %4841 = vmatprep.subr.bf16.mxu0 0
      %4842 = vmatpush1.bf16.msra.mxu0 %v4741
      %4843 = vmatprep.subr.bf16.mxu0 0
      %4844 = vmatpush1.bf16.msra.mxu0 %v4742
      %4845 = vmatprep.subr.bf16.mxu0 0
      %4846 = vmatpush1.bf16.msra.mxu0 %v4743
      %4847 = vmatprep.subr.bf16.mxu0 0
      %4848 = vmatpush1.bf16.msra.mxu0 %v4744
      %4849 = vmatprep.subr.bf16.mxu0 0
      %4850 = vmatpush1.bf16.msra.mxu0 %v4745
      %4851 = vmatprep.subr.bf16.mxu0 0
      %4852 = vmatpush1.bf16.msra.mxu0 %v4746
      %4853 = vmatprep.subr.bf16.mxu0 0
      %4854 = vmatpush1.bf16.msra.mxu0 %v4747
      %4855 = vmatprep.subr.bf16.mxu0 0
      %4856 = vmatpush1.bf16.msra.mxu0 %v4748
      %4857 = vmatprep.subr.bf16.mxu0 0
      %4858 = vmatpush1.bf16.msra.mxu0 %v4749
      %4859 = vmatprep.subr.bf16.mxu0 0
      %4860 = vmatpush1.bf16.msra.mxu0 %v4750
      %4861 = vmatprep.subr.bf16.mxu0 0
      %4862 = vmatpush1.bf16.msra.mxu0 %v4751
      %4863 = vmatprep.subr.bf16.mxu0 0
      %4864 = vmatpush1.bf16.msra.mxu0 %v4752
      %4865 = vmatprep.subr.bf16.mxu0 0
      %4866 = vmatpush1.bf16.msra.mxu0 %v4753
      %4867 = vmatprep.mubr.bf16.mxu0 %v4525
      %4868 = vmatmul.mubr.bf16.gmra.mrb[0].mxu0 %v4524
      %v4869 = vpop.f32.mrb[0].mxu0
      %v4870 = vadd.f32 %v4821, %v4869
      %v4871 = vpop.f32.mrb[0].mxu0
      %v4872 = vpop.f32.mrb[0].mxu0
      %v4873 = vadd.f32 %v4824, %v4872
      %v4874 = vpop.f32.mrb[0].mxu0
      %4875 = vmatprep.mubr.bf16.mxu0 %v4529
      %4876 = vmatmul.mubr.bf16.gmra.mrb[0].mxu0 %v4528
      %v4877 = vpop.f32.mrb[0].mxu0
      %v4878 = vadd.f32 %v4829, %v4877
      %v4879 = vpop.f32.mrb[0].mxu0
      %v4880 = vpop.f32.mrb[0].mxu0
      %v4881 = vadd.f32 %v4832, %v4880
      %v4882 = vpop.f32.mrb[0].mxu0
      %4883 = vdwg.mxu0
      %v4884 = vlog2.pop %v4870
      %v4885 = vmul.f32 %v4884, 0.6931472
      %v4886 = vlog2.pop %v4873
      %v4887 = vmul.f32 %v4886, 0.6931472
      %v4888 = vlog2.pop %v4878
      %v4889 = vmul.f32 %v4888, 0.6931472
      %v4890 = vlog2.pop %v4881
      %v4891 = vmul.f32 %v4890, 0.6931472
      %v4892 = vsub.f32 %v4885, %v4889
      %v4893 = vsub.f32 %v4887, %v4891
      %v4894 = vand.u32 2147483647, %v4892
      %v4895 = vand.u32 2147483647, %v4893
      %s4896 = smul.u32 %s22, 16
      %v4897 = vlaneseq
      %v4898 = vshrl.u32 %v4897, 7
      %v4899 = vadd.s32 %v4898, 8
      %v4900 = vstv %s4896
      %v4901 = vadd.s32 %v4900, %v4898
      %v4902 = vadd.s32 %v4900, %v4899
      %vm4903 = vcmp.lt.s32.totalorder %v4901, 9
      %vm4904 = vcmp.lt.s32.totalorder %v4902, 9
      %v4905 = vsel %vm4903, %v4894, 0.0
      %v4906 = vsel %vm4904, %v4895, 0.0
      %vm4907 = vcmask 523264
      %v4908 = vsel %vm4907, %v4905, 0.0
      %v4909 = vsel %vm4907, %v4906, 0.0
      %v4910 = vadd.f32 %v4908, %v4909
      %4911 = vadd.xlane.f32.xlu0 %v4910
      %v4912 = vpop.xlane.xlu0 %4911
      %v4913 = vrot.slane %v4912, 4
      %v4914 = vadd.f32 %v4912, %v4913
      %v4915 = vrot.slane %v4914, 2
      %v4916 = vadd.f32 %v4914, %v4915
      %v4917 = vrot.slane %v4916, 1
      %v4918 = vadd.f32 %v4916, %v4917
      %s4919 = vtos %v4918
      %v4920 = vstv %s4919
      %4921 = vst [vmem:[%s419] sm:$0xff] %v4920
      %p4922 = scmp.lt.s32.totalorder %s21, 1
      %s4923 = scalar_select %p4922, %s21, 1
      %p4924 = scmp.lt.s32.totalorder %s22, 0
      %s4925 = scalar_select %p4924, %s22, 0
      %s4926 = sadd.s32 %s4925, %s4923
      %s4927 = smul.addr %s4926, 8
      %s4928 = scalar_lea.vmem %s6, %s4927
      // Predicated region
      $region45: #{multi_scale_mel_loss.1} parent=43 // pred_check
        %p4929 = pneg %p207
      $region46: #{multi_scale_mel_loss.1} parent=43 // pred_check_branch
        %4931 = sbr.rel (%p4929) target = $region48
      $region47: #{multi_scale_mel_loss.1} parent=43 // pred_region
        _
      $region48: #{multi_scale_mel_loss.1} parent=43 // pred_fallthru
        _
    $region44: #{multi_scale_mel_loss.1} parent=5 // pred_fallthru
      _
    %p4932 = scmp.le.s32.totalorder 2, %s12
    // Predicated region
    $region49: #{multi_scale_mel_loss.1} parent=5 // pred_check
      %p4933 = pneg %p4932
    $region50: #{multi_scale_mel_loss.1} parent=5 // pred_check_branch
      %4935 = sbr.rel (%p4933) target = $region52
    $region51: #{multi_scale_mel_loss.1} parent=5 // pred_region
      %s4936 = ssub.s32 %s12, 2
      // Predicated region
      $region53: #{multi_scale_mel_loss.1} parent=51 // pred_check
        %p4937 = pneg %p213
      $region54: #{multi_scale_mel_loss.1} parent=51 // pred_check_branch
        %4939 = sbr.rel (%p4937) target = $region56
      $region55: #{multi_scale_mel_loss.1} parent=51 // pred_region
        %p4940 = scmp.lt.s32.totalorder %s23, 1
        %s4941 = scalar_select %p4940, %s23, 1
        %p4942 = scmp.lt.s32.totalorder %s24, 0
        %s4943 = scalar_select %p4942, %s24, 0
        %s4944 = sadd.s32 %s4943, %s4941
        %s4945 = smul.addr %s4944, 8
        %s4946 = scalar_lea.vmem %s6, %s4945
      $region56: #{multi_scale_mel_loss.1} parent=51 // pred_fallthru
        _
    $region52: #{multi_scale_mel_loss.1} parent=5 // pred_fallthru
      _
  $region6: #{multi_scale_mel_loss.1} parent=0 // loop_footer
    %s16 = sadd.s32 1, %s12
  $region7: #{multi_scale_mel_loss.1} parent=0 // loop_footer_branch
    %11 = sbr.rel target = $region3
  $region8: #{multi_scale_mel_loss.1} parent=0 // loop_exit
    _

</llo_original>
